<compile_context>
chip_gen: v7x
topology: tpu7x:2x2x1
jax: 0.10.0
libtpu: 0.0.40
codegen_flags: <defaults>
</compile_context>

<pallas_src>
import jax
import jax.numpy as jnp
from jax.experimental import pallas as pl
from jax.experimental.pallas import tpu as pltpu

INPUT_DIM = 784
HIDDEN_DIM = 400
LATENT_DIM = 50
NUM_FLOWS = 2

HIDDEN_PAD = 512          # 400 -> 4*128 (weights zero-padded once, host-side)
LATENT_PAD = 128          # mu head -> lanes [0,128), logvar head -> [128,256)
STATS_PAD = 2 * LATENT_PAD


def _round_up(x, m):
    return (x + m - 1) // m * m


# ----------------------------------------------------------------------------
# Kernel
# ----------------------------------------------------------------------------
def vae_flow_kernel(x_ref, eps_ref,
                    w1_ref, b1_ref, w2_ref, b2_ref,
                    fu_ref, fw_ref, fb_ref, fwu_ref, fcross_ref,
                    w3_ref, b3_ref, w4_ref, b4_ref,
                    recon_ref, mu_ref, logvar_ref, logdet_ref):
    # ---- encoder: Linear(784->400) + ReLU + Linear(400->100) (hidden padded) ----
    x = x_ref[...].astype(jnp.bfloat16)                       # (TB, 784)
    h = jnp.dot(x, w1_ref[...],
                preferred_element_type=jnp.float32) + b1_ref[...]
    h = jnp.maximum(h, 0.0).astype(jnp.bfloat16)              # (TB, 512)
    stats = jnp.dot(h, w2_ref[...],
                    preferred_element_type=jnp.float32) + b2_ref[...]  # (TB, 256)

    mu = stats[:, :LATENT_DIM]                                # (TB, 50)
    logvar = stats[:, LATENT_PAD:LATENT_PAD + LATENT_DIM]     # (TB, 50), vreg-aligned start
    mu_ref[...] = mu
    logvar_ref[...] = logvar

    # ---- reparameterize ----
    std = jnp.exp(0.5 * logvar)
    z0 = mu + eps_ref[...] * std                              # (TB, 50) f32
    z = z0

    # ---- planar flows (static unroll); reductions all taken against z0 ----
    # w_i . z_k = w_i . z0 + sum_{j<k} (w_i . u_j) * t_j   (planar identity)
    ts = []
    logdet = jnp.zeros((z.shape[0], 1), jnp.float32)
    for i in range(NUM_FLOWS):
        lin = jnp.sum(z0 * fw_ref[i:i + 1, :], axis=-1, keepdims=True) + fb_ref[i]
        for j in range(i):
            lin = lin + fcross_ref[i * NUM_FLOWS + j] * ts[j]  # scalar * (TB,1)
        t = jnp.tanh(lin)                                      # (TB, 1)
        ts.append(t)
        z = z + fu_ref[i:i + 1, :] * t                         # (TB, 50)
        det = jnp.abs(1.0 + (1.0 - t * t) * fwu_ref[i])        # (TB, 1)
        logdet = logdet + jnp.log(det + 1e-6)
    logdet_ref[...] = logdet

    # ---- decoder: Linear(50->400) + ReLU + Linear(400->784) + Sigmoid ----
    h2 = jnp.dot(z.astype(jnp.bfloat16), w3_ref[...],
                 preferred_element_type=jnp.float32) + b3_ref[...]
    h2 = jnp.maximum(h2, 0.0).astype(jnp.bfloat16)             # (TB, 512)
    logits = jnp.dot(h2, w4_ref[...],
                     preferred_element_type=jnp.float32) + b4_ref[...]
    recon_ref[...] = jax.nn.sigmoid(logits).astype(jnp.bfloat16)


# ----------------------------------------------------------------------------
# One-time parameter preparation (hoisted out of the forward pass; cache this)
# ----------------------------------------------------------------------------
def prepare_params(p):
    f32, bf16 = jnp.float32, jnp.bfloat16

    w1p = jnp.pad(p["w1"].astype(bf16),
                  ((0, 0), (0, HIDDEN_PAD - HIDDEN_DIM)))               # (784, 512)
    b1p = jnp.pad(p["b1"].astype(f32).reshape(1, HIDDEN_DIM),
                  ((0, 0), (0, HIDDEN_PAD - HIDDEN_DIM)))                # (1, 512)

    # mu head -> lanes [0, 50), logvar head -> lanes [128, 178)
    w2p = jnp.zeros((HIDDEN_PAD, STATS_PAD), bf16)
    w2p = w2p.at[:HIDDEN_DIM, :LATENT_DIM].set(p["w2"][:, :LATENT_DIM].astype(bf16))
    w2p = w2p.at[:HIDDEN_DIM, LATENT_PAD:LATENT_PAD + LATENT_DIM].set(
        p["w2"][:, LATENT_DIM:].astype(bf16))
    b2 = p["b2"].reshape(1, 2 * LATENT_DIM).astype(f32)
    b2p = jnp.zeros((1, STATS_PAD), f32)
    b2p = b2p.at[:, :LATENT_DIM].set(b2[:, :LATENT_DIM])
    b2p = b2p.at[:, LATENT_PAD:LATENT_PAD + LATENT_DIM].set(b2[:, LATENT_DIM:])

    fu = p["fu"].astype(f32)                                   # (NUM_FLOWS, 50)
    fw = p["fw"].astype(f32)                                   # (NUM_FLOWS, 50)
    fb = p["fb"].reshape(NUM_FLOWS).astype(f32)                # SMEM scalars
    fwu = jnp.sum(fu * fw, axis=-1).astype(f32)                # w_i . u_i
    fcross = (fw @ fu.T).reshape(-1).astype(f32)               # [i*N+j] = w_i . u_j

    w3p = jnp.pad(p["w3"].astype(bf16),
                  ((0, 0), (0, HIDDEN_PAD - HIDDEN_DIM)))                # (50, 512)
    b3p = jnp.pad(p["b3"].astype(f32).reshape(1, HIDDEN_DIM),
                  ((0, 0), (0, HIDDEN_PAD - HIDDEN_DIM)))                # (1, 512)
    w4p = jnp.pad(p["w4"].astype(bf16),
                  ((0, HIDDEN_PAD - HIDDEN_DIM), (0, 0)))                # (512, 784)
    b4p = p["b4"].astype(f32).reshape(1, INPUT_DIM)                      # (1, 784)

    return dict(w1=w1p, b1=b1p, w2=w2p, b2=b2p,
                fu=fu, fw=fw, fb=fb, fwu=fwu, fcross=fcross,
                w3=w3p, b3=b3p, w4=w4p, b4=b4p)


# ----------------------------------------------------------------------------
# Tile selection (generation-aware, >=2 grid steps when batch allows)
# ----------------------------------------------------------------------------
def _default_tile_cap():
    cap = 1024                       # safe on v7x (64 MiB VMEM)
    try:
        info = pltpu.get_tpu_info()
        vmem = getattr(info, "vmem_capacity_bytes", 0) or 0
        if vmem >= 100 * 1024 * 1024:   # v5e / v6e (128 MiB VMEM)
            cap = 2048
    except Exception:
        pass
    return cap


def _pick_batch_tile(B, requested=None):
    cap = _round_up(requested, 16) if requested else _default_tile_cap()
    # aim for at least 2 grid steps (v7x has 2 TCs; batch axis is "parallel")
    half = _round_up(max(1, pl.cdiv(B, 2)), 16)
    return max(16, min(cap, half))


# ----------------------------------------------------------------------------
# Wrapper
# ----------------------------------------------------------------------------
def vae_with_flow_forward(x, eps, padded_params, *, batch_tile=None):
    """x: anything reshapeable to (-1, 784); eps: (B, 50) f32.
    padded_params: output of prepare_params (call once and reuse)."""
    x = x.reshape(-1, INPUT_DIM).astype(jnp.float32)
    B = x.shape[0]
    assert eps.shape == (B, LATENT_DIM)
    eps = eps.astype(jnp.float32)

    TB = _pick_batch_tile(B, batch_tile)
    grid = (pl.cdiv(B, TB),)
    pp = padded_params

    def row_spec(d):
        return pl.BlockSpec((TB, d), lambda i: (i, 0))

    def const_spec(shape):
        return pl.BlockSpec(shape, lambda i: (0,) * len(shape))

    smem_spec = pl.BlockSpec(memory_space=pltpu.MemorySpace.SMEM)

    in_specs = [
        row_spec(INPUT_DIM),                          # x tile (f32, unpadded)
        row_spec(LATENT_DIM),                         # eps tile (f32, unpadded)
        const_spec((INPUT_DIM, HIDDEN_PAD)),          # w1 (resident)
        const_spec((1, HIDDEN_PAD)),                  # b1
        const_spec((HIDDEN_PAD, STATS_PAD)),          # w2
        const_spec((1, STATS_PAD)),                   # b2
        const_spec((NUM_FLOWS, LATENT_DIM)),          # fu
        const_spec((NUM_FLOWS, LATENT_DIM)),          # fw
        smem_spec,                                    # fb      (scalars)
        smem_spec,                                    # fwu     (scalars)
        smem_spec,                                    # fcross  (scalars)
        const_spec((LATENT_DIM, HIDDEN_PAD)),         # w3
        const_spec((1, HIDDEN_PAD)),                  # b3
        const_spec((HIDDEN_PAD, INPUT_DIM)),          # w4
        const_spec((1, INPUT_DIM)),                   # b4
    ]
    out_specs = (
        row_spec(INPUT_DIM),                          # recon (bf16)
        row_spec(LATENT_DIM),                         # mu
        row_spec(LATENT_DIM),                         # logvar
        row_spec(1),                                  # logdet
    )
    out_shape = (
        jax.ShapeDtypeStruct((B, INPUT_DIM), jnp.bfloat16),
        jax.ShapeDtypeStruct((B, LATENT_DIM), jnp.float32),
        jax.ShapeDtypeStruct((B, LATENT_DIM), jnp.float32),
        jax.ShapeDtypeStruct((B, 1), jnp.float32),
    )

    vmem_limit = 48 * 1024 * 1024 if TB <= 1024 else 96 * 1024 * 1024

    mm_flops = 2 * B * (INPUT_DIM * HIDDEN_PAD + HIDDEN_PAD * STATS_PAD
                        + LATENT_DIM * HIDDEN_PAD + HIDDEN_PAD * INPUT_DIM)
    transc = B * (LATENT_DIM + 3 * NUM_FLOWS + INPUT_DIM)
    w_bytes = 2 * (INPUT_DIM * HIDDEN_PAD + HIDDEN_PAD * STATS_PAD
                   + LATENT_DIM * HIDDEN_PAD + HIDDEN_PAD * INPUT_DIM) \
        + 4 * (2 * HIDDEN_PAD + STATS_PAD + INPUT_DIM)
    io_bytes = B * (4 * INPUT_DIM + 4 * LATENT_DIM) \
        + B * (2 * INPUT_DIM + 8 * LATENT_DIM + 4)

    recon_x, mu, logvar, log_det_jacobian = pl.pallas_call(
        vae_flow_kernel,
        out_shape=out_shape,
        grid=grid,
        in_specs=in_specs,
        out_specs=out_specs,
        compiler_params=pltpu.CompilerParams(
            dimension_semantics=("parallel",),
            vmem_limit_bytes=vmem_limit,
        ),
        cost_estimate=pl.CostEstimate(
            flops=mm_flops, transcendentals=transc,
            bytes_accessed=w_bytes + io_bytes),
    )(x, eps,
      pp["w1"], pp["b1"], pp["w2"], pp["b2"],
      pp["fu"], pp["fw"], pp["fb"], pp["fwu"], pp["fcross"],
      pp["w3"], pp["b3"], pp["w4"], pp["b4"])

    return recon_x, mu, logvar, log_det_jacobian


# ----------------------------------------------------------------------------
# Pure-JAX reference (for correctness check) and deterministic init
# ----------------------------------------------------------------------------
def reference_forward(x, eps, p):
    x = x.reshape(-1, INPUT_DIM).astype(jnp.float32)
    h = jax.nn.relu(x @ p["w1"] + p["b1"])
    stats = h @ p["w2"] + p["b2"]
    mu, logvar = stats[:, :LATENT_DIM], stats[:, LATENT_DIM:]
    z = mu + eps * jnp.exp(0.5 * logvar)
    logdet = jnp.zeros((x.shape[0], 1), jnp.float32)
    for i in range(NUM_FLOWS):
        w = p["fw"][i:i + 1]
        u = p["fu"][i:i + 1]
        b = p["fb"][i, 0]
        lin = jnp.sum(z * w, axis=-1, keepdims=True) + b
        t = jnp.tanh(lin)
        z = z + u * t
        det = jnp.abs(1.0 + (1.0 - t * t) * jnp.sum(w * u))
        logdet = logdet + jnp.log(det + 1e-6)
    h2 = jax.nn.relu(z @ p["w3"] + p["b3"])
    recon = jax.nn.sigmoid(h2 @ p["w4"] + p["b4"])
    return recon, mu, logvar, logdet


def init_params(key):
    ks = jax.random.split(key, 12)

    def linear(kw, kb, fan_in, fan_out):
        bound = 1.0 / jnp.sqrt(float(fan_in))
        w = jax.random.uniform(kw, (fan_in, fan_out), jnp.float32, -bound, bound)
        b = jax.random.uniform(kb, (1, fan_out), jnp.float32, -bound, bound)
        return w, b

    w1, b1 = linear(ks[0], ks[1], INPUT_DIM, HIDDEN_DIM)
    w2, b2 = linear(ks[2], ks[3], HIDDEN_DIM, 2 * LATENT_DIM)
    w3, b3 = linear(ks[4], ks[5], LATENT_DIM, HIDDEN_DIM)
    w4, b4 = linear(ks[6], ks[7], HIDDEN_DIM, INPUT_DIM)
    fu = 0.1 * jax.random.normal(ks[8], (NUM_FLOWS, LATENT_DIM), jnp.float32)
    fw = 0.1 * jax.random.normal(ks[9], (NUM_FLOWS, LATENT_DIM), jnp.float32)
    fb = 0.1 * jax.random.normal(ks[10], (NUM_FLOWS, 1), jnp.float32)
    return dict(w1=w1, b1=b1, w2=w2, b2=b2, w3=w3, b3=b3, w4=w4, b4=b4,
                fu=fu, fw=fw, fb=fb)


if __name__ == "__main__":
    key = jax.random.PRNGKey(0)
    k_param, k_x, k_eps = jax.random.split(key, 3)

    params = init_params(k_param)
    padded = jax.block_until_ready(prepare_params(params))   # once, then reuse

    B = 2
    # module does x.view(-1, 784); feed (B, 1, 28, 28) like MNIST.
    x_img = jax.random.uniform(k_x, (B, 1, 28, 28), jnp.float32)
    eps = jax.random.normal(k_eps, (B, LATENT_DIM), jnp.float32)

    recon_x, mu, logvar, log_det_jacobian = jax.block_until_ready(
        vae_with_flow_forward(x_img, eps, padded))

    assert recon_x.shape == (B, INPUT_DIM) and recon_x.dtype == jnp.bfloat16
    assert mu.shape == (B, LATENT_DIM)
    assert logvar.shape == (B, LATENT_DIM)
    assert log_det_jacobian.shape == (B, 1)
    assert bool(jnp.all(jnp.isfinite(recon_x.astype(jnp.float32))))
    assert bool(jnp.all(jnp.isfinite(mu)))
    assert bool(jnp.all(jnp.isfinite(logvar)))
    assert bool(jnp.all(jnp.isfinite(log_det_jacobian)))
    assert bool(jnp.all((recon_x >= 0.0) & (recon_x <= 1.0)))

    # loose numeric check vs pure-JAX f32 reference (bf16 matmuls/storage in kernel)
    r_ref, mu_ref, lv_ref, ld_ref = reference_forward(x_img, eps, params)
    assert bool(jnp.max(jnp.abs(recon_x.astype(jnp.float32) - r_ref)) < 0.05)
    assert bool(jnp.max(jnp.abs(mu - mu_ref)) < 0.05)
    assert bool(jnp.max(jnp.abs(logvar - lv_ref)) < 0.05)
    assert bool(jnp.max(jnp.abs(log_det_jacobian - ld_ref)) < 0.3)

    print("KERNEL_OK")
</pallas_src>

<mosaic_0001>
module attributes {stable_mosaic.version = 11 : i64} {
  func.func @vae_flow_kernel(%arg0: i32, %arg1: memref<16x784xf32, #tpu.memory_space<vmem>>, %arg2: memref<16x50xf32, #tpu.memory_space<vmem>>, %arg3: memref<784x512xbf16, #tpu.memory_space<vmem>>, %arg4: memref<1x512xf32, #tpu.memory_space<vmem>>, %arg5: memref<512x256xbf16, #tpu.memory_space<vmem>>, %arg6: memref<1x256xf32, #tpu.memory_space<vmem>>, %arg7: memref<2x50xf32, #tpu.memory_space<vmem>>, %arg8: memref<2x50xf32, #tpu.memory_space<vmem>>, %arg9: memref<2xf32, #tpu.memory_space<smem>>, %arg10: memref<2xf32, #tpu.memory_space<smem>>, %arg11: memref<4xf32, #tpu.memory_space<smem>>, %arg12: memref<50x512xbf16, #tpu.memory_space<vmem>>, %arg13: memref<1x512xf32, #tpu.memory_space<vmem>>, %arg14: memref<512x784xbf16, #tpu.memory_space<vmem>>, %arg15: memref<1x784xf32, #tpu.memory_space<vmem>>, %arg16: memref<16x784xbf16, #tpu.memory_space<vmem>>, %arg17: memref<16x50xf32, #tpu.memory_space<vmem>>, %arg18: memref<16x50xf32, #tpu.memory_space<vmem>>, %arg19: memref<16x1xf32, #tpu.memory_space<vmem>>) attributes {dimension_semantics = [#tpu.dimension_semantics<parallel>], iteration_bounds = array<i64: 1>, scalar_prefetch = 0 : i64, scratch_operands = 0 : i64, tpu.core_type = #tpu.core_type<tc>, window_params = [{transform_indices = @transform_0, window_bounds = array<i64: 16, 784>}, {transform_indices = @transform_1, window_bounds = array<i64: 16, 50>}, {pipeline_mode = #tpu.pipeline_mode<synchronous>, transform_indices = @transform_2, window_bounds = array<i64: 784, 512>}, {pipeline_mode = #tpu.pipeline_mode<synchronous>, transform_indices = @transform_3, window_bounds = array<i64: 1, 512>}, {pipeline_mode = #tpu.pipeline_mode<synchronous>, transform_indices = @transform_4, window_bounds = array<i64: 512, 256>}, {pipeline_mode = #tpu.pipeline_mode<synchronous>, transform_indices = @transform_5, window_bounds = array<i64: 1, 256>}, {pipeline_mode = #tpu.pipeline_mode<synchronous>, transform_indices = @transform_6, window_bounds = array<i64: 2, 50>}, {pipeline_mode = #tpu.pipeline_mode<synchronous>, transform_indices = @transform_7, window_bounds = array<i64: 2, 50>}, {transform_indices = @transform_8, window_bounds = array<i64: 2>}, {transform_indices = @transform_9, window_bounds = array<i64: 2>}, {transform_indices = @transform_10, window_bounds = array<i64: 4>}, {pipeline_mode = #tpu.pipeline_mode<synchronous>, transform_indices = @transform_11, window_bounds = array<i64: 50, 512>}, {pipeline_mode = #tpu.pipeline_mode<synchronous>, transform_indices = @transform_12, window_bounds = array<i64: 1, 512>}, {pipeline_mode = #tpu.pipeline_mode<synchronous>, transform_indices = @transform_13, window_bounds = array<i64: 512, 784>}, {pipeline_mode = #tpu.pipeline_mode<synchronous>, transform_indices = @transform_14, window_bounds = array<i64: 1, 784>}, {transform_indices = @transform_15, window_bounds = array<i64: 16, 784>}, {transform_indices = @transform_16, window_bounds = array<i64: 16, 50>}, {transform_indices = @transform_17, window_bounds = array<i64: 16, 50>}, {transform_indices = @transform_18, window_bounds = array<i64: 16, 1>}]} {
    %c0 = arith.constant 0 : index
    %c0_0 = arith.constant 0 : index
    %0 = vector.load %arg1[%c0, %c0_0] : memref<16x784xf32, #tpu.memory_space<vmem>>, vector<16x784xf32>
    %1 = arith.truncf %0 : vector<16x784xf32> to vector<16x784xbf16>
    %c0_1 = arith.constant 0 : index
    %c0_2 = arith.constant 0 : index
    %2 = vector.load %arg3[%c0_1, %c0_2] : memref<784x512xbf16, #tpu.memory_space<vmem>>, vector<784x512xbf16>
    %cst = arith.constant dense<0.000000e+00> : vector<16x512xf32>
    %3 = tpu.matmul %1, %2, %cst {dimension_numbers = #tpu.dot_dimension_numbers<[1], [0], [0], [1], [0, 0, 1, 1], [], []>} : vector<16x784xbf16>, vector<784x512xbf16>, vector<16x512xf32> -> vector<16x512xf32>
    %c0_3 = arith.constant 0 : index
    %c0_4 = arith.constant 0 : index
    %4 = vector.load %arg4[%c0_3, %c0_4] : memref<1x512xf32, #tpu.memory_space<vmem>>, vector<1x512xf32>
    %5 = vector.broadcast %4 : vector<1x512xf32> to vector<16x512xf32>
    %6 = arith.addf %3, %5 : vector<16x512xf32>
    %cst_5 = arith.constant 0.000000e+00 : f32
    %7 = vector.broadcast %cst_5 : f32 to vector<16x512xf32>
    %8 = arith.maximumf %6, %7 : vector<16x512xf32>
    %9 = arith.truncf %8 : vector<16x512xf32> to vector<16x512xbf16>
    %c0_6 = arith.constant 0 : index
    %c0_7 = arith.constant 0 : index
    %10 = vector.load %arg5[%c0_6, %c0_7] : memref<512x256xbf16, #tpu.memory_space<vmem>>, vector<512x256xbf16>
    %cst_8 = arith.constant dense<0.000000e+00> : vector<16x256xf32>
    %11 = tpu.matmul %9, %10, %cst_8 {dimension_numbers = #tpu.dot_dimension_numbers<[1], [0], [0], [1], [0, 0, 1, 1], [], []>} : vector<16x512xbf16>, vector<512x256xbf16>, vector<16x256xf32> -> vector<16x256xf32>
    %c0_9 = arith.constant 0 : index
    %c0_10 = arith.constant 0 : index
    %12 = vector.load %arg6[%c0_9, %c0_10] : memref<1x256xf32, #tpu.memory_space<vmem>>, vector<1x256xf32>
    %13 = vector.broadcast %12 : vector<1x256xf32> to vector<16x256xf32>
    %14 = arith.addf %11, %13 : vector<16x256xf32>
    %15 = vector.extract_strided_slice %14 {offsets = [0, 0], sizes = [16, 50], strides = [1, 1]} : vector<16x256xf32> to vector<16x50xf32>
    %16 = vector.extract_strided_slice %14 {offsets = [0, 128], sizes = [16, 50], strides = [1, 1]} : vector<16x256xf32> to vector<16x50xf32>
    %c0_11 = arith.constant 0 : index
    %c0_12 = arith.constant 0 : index
    %17 = vector.load %arg17[%c0_11, %c0_12] : memref<16x50xf32, #tpu.memory_space<vmem>>, vector<16x50xf32>
    tpu.vector_store %arg17[%c0_11, %c0_12], %15 {strides = array<i32>} : memref<16x50xf32, #tpu.memory_space<vmem>>, vector<16x50xf32>,
    %c0_13 = arith.constant 0 : index
    %c0_14 = arith.constant 0 : index
    %18 = vector.load %arg18[%c0_13, %c0_14] : memref<16x50xf32, #tpu.memory_space<vmem>>, vector<16x50xf32>
    tpu.vector_store %arg18[%c0_13, %c0_14], %16 {strides = array<i32>} : memref<16x50xf32, #tpu.memory_space<vmem>>, vector<16x50xf32>,
    %cst_15 = arith.constant 5.000000e-01 : f32
    %19 = vector.broadcast %cst_15 : f32 to vector<16x50xf32>
    %20 = arith.mulf %19, %16 : vector<16x50xf32>
    %21 = math.exp %20 : vector<16x50xf32>
    %c0_16 = arith.constant 0 : index
    %c0_17 = arith.constant 0 : index
    %22 = vector.load %arg2[%c0_16, %c0_17] : memref<16x50xf32, #tpu.memory_space<vmem>>, vector<16x50xf32>
    %23 = arith.mulf %22, %21 : vector<16x50xf32>
    %24 = arith.addf %15, %23 : vector<16x50xf32>
    %cst_18 = arith.constant 0.000000e+00 : f32
    %25 = vector.broadcast %cst_18 : f32 to vector<16x1xf32>
    %c0_19 = arith.constant 0 : index
    %c0_20 = arith.constant 0 : index
    %26 = vector.load %arg8[%c0_19, %c0_20] : memref<2x50xf32, #tpu.memory_space<vmem>>, vector<1x50xf32>
    %27 = vector.broadcast %26 : vector<1x50xf32> to vector<16x50xf32>
    %28 = arith.mulf %24, %27 : vector<16x50xf32>
    %cst_21 = arith.constant dense<0.000000e+00> : vector<16xf32>
    %29 = vector.multi_reduction <add>, %28, %cst_21 [1] : vector<16x50xf32> to vector<16xf32>
    %30 = vector.shape_cast %29 : vector<16xf32> to vector<16x1xf32>
    %c0_22 = arith.constant 0 : index
    %31 = memref.load %arg9[%c0_22] : memref<2xf32, #tpu.memory_space<smem>>
    %32 = vector.broadcast %31 : f32 to vector<16x1xf32>
    %33 = arith.addf %30, %32 : vector<16x1xf32>
    %34 = math.tanh %33 : vector<16x1xf32>
    %c0_23 = arith.constant 0 : index
    %c0_24 = arith.constant 0 : index
    %35 = vector.load %arg7[%c0_23, %c0_24] : memref<2x50xf32, #tpu.memory_space<vmem>>, vector<1x50xf32>
    %36 = vector.broadcast %35 : vector<1x50xf32> to vector<16x50xf32>
    %37 = vector.broadcast %34 : vector<16x1xf32> to vector<16x50xf32>
    %38 = arith.mulf %36, %37 : vector<16x50xf32>
    %39 = arith.addf %24, %38 : vector<16x50xf32>
    %40 = arith.mulf %34, %34 : vector<16x1xf32>
    %cst_25 = arith.constant 1.000000e+00 : f32
    %41 = vector.broadcast %cst_25 : f32 to vector<16x1xf32>
    %42 = arith.subf %41, %40 : vector<16x1xf32>
    %c0_26 = arith.constant 0 : index
    %43 = memref.load %arg10[%c0_26] : memref<2xf32, #tpu.memory_space<smem>>
    %44 = vector.broadcast %43 : f32 to vector<16x1xf32>
    %45 = arith.mulf %42, %44 : vector<16x1xf32>
    %cst_27 = arith.constant 1.000000e+00 : f32
    %46 = vector.broadcast %cst_27 : f32 to vector<16x1xf32>
    %47 = arith.addf %46, %45 : vector<16x1xf32>
    %48 = math.absf %47 : vector<16x1xf32>
    %cst_28 = arith.constant 9.99999997E-7 : f32
    %49 = vector.broadcast %cst_28 : f32 to vector<16x1xf32>
    %50 = arith.addf %48, %49 : vector<16x1xf32>
    %51 = math.log %50 : vector<16x1xf32>
    %52 = arith.addf %25, %51 : vector<16x1xf32>
    %c1 = arith.constant 1 : index
    %c0_29 = arith.constant 0 : index
    %53 = vector.load %arg8[%c1, %c0_29] : memref<2x50xf32, #tpu.memory_space<vmem>>, vector<1x50xf32>
    %54 = vector.broadcast %53 : vector<1x50xf32> to vector<16x50xf32>
    %55 = arith.mulf %24, %54 : vector<16x50xf32>
    %cst_30 = arith.constant dense<0.000000e+00> : vector<16xf32>
    %56 = vector.multi_reduction <add>, %55, %cst_30 [1] : vector<16x50xf32> to vector<16xf32>
    %57 = vector.shape_cast %56 : vector<16xf32> to vector<16x1xf32>
    %c1_31 = arith.constant 1 : index
    %58 = memref.load %arg9[%c1_31] : memref<2xf32, #tpu.memory_space<smem>>
    %59 = vector.broadcast %58 : f32 to vector<16x1xf32>
    %60 = arith.addf %57, %59 : vector<16x1xf32>
    %c2 = arith.constant 2 : index
    %61 = memref.load %arg11[%c2] : memref<4xf32, #tpu.memory_space<smem>>
    %62 = vector.broadcast %61 : f32 to vector<16x1xf32>
    %63 = arith.mulf %62, %34 : vector<16x1xf32>
    %64 = arith.addf %60, %63 : vector<16x1xf32>
    %65 = math.tanh %64 : vector<16x1xf32>
    %c1_32 = arith.constant 1 : index
    %c0_33 = arith.constant 0 : index
    %66 = vector.load %arg7[%c1_32, %c0_33] : memref<2x50xf32, #tpu.memory_space<vmem>>, vector<1x50xf32>
    %67 = vector.broadcast %66 : vector<1x50xf32> to vector<16x50xf32>
    %68 = vector.broadcast %65 : vector<16x1xf32> to vector<16x50xf32>
    %69 = arith.mulf %67, %68 : vector<16x50xf32>
    %70 = arith.addf %39, %69 : vector<16x50xf32>
    %71 = arith.mulf %65, %65 : vector<16x1xf32>
    %cst_34 = arith.constant 1.000000e+00 : f32
    %72 = vector.broadcast %cst_34 : f32 to vector<16x1xf32>
    %73 = arith.subf %72, %71 : vector<16x1xf32>
    %c1_35 = arith.constant 1 : index
    %74 = memref.load %arg10[%c1_35] : memref<2xf32, #tpu.memory_space<smem>>
    %75 = vector.broadcast %74 : f32 to vector<16x1xf32>
    %76 = arith.mulf %73, %75 : vector<16x1xf32>
    %cst_36 = arith.constant 1.000000e+00 : f32
    %77 = vector.broadcast %cst_36 : f32 to vector<16x1xf32>
    %78 = arith.addf %77, %76 : vector<16x1xf32>
    %79 = math.absf %78 : vector<16x1xf32>
    %cst_37 = arith.constant 9.99999997E-7 : f32
    %80 = vector.broadcast %cst_37 : f32 to vector<16x1xf32>
    %81 = arith.addf %79, %80 : vector<16x1xf32>
    %82 = math.log %81 : vector<16x1xf32>
    %83 = arith.addf %52, %82 : vector<16x1xf32>
    %c0_38 = arith.constant 0 : index
    %c0_39 = arith.constant 0 : index
    %84 = vector.load %arg19[%c0_38, %c0_39] : memref<16x1xf32, #tpu.memory_space<vmem>>, vector<16x1xf32>
    tpu.vector_store %arg19[%c0_38, %c0_39], %83 {strides = array<i32>} : memref<16x1xf32, #tpu.memory_space<vmem>>, vector<16x1xf32>,
    %85 = arith.truncf %70 : vector<16x50xf32> to vector<16x50xbf16>
    %c0_40 = arith.constant 0 : index
    %c0_41 = arith.constant 0 : index
    %86 = vector.load %arg12[%c0_40, %c0_41] : memref<50x512xbf16, #tpu.memory_space<vmem>>, vector<50x512xbf16>
    %cst_42 = arith.constant dense<0.000000e+00> : vector<16x512xf32>
    %87 = tpu.matmul %85, %86, %cst_42 {dimension_numbers = #tpu.dot_dimension_numbers<[1], [0], [0], [1], [0, 0, 1, 1], [], []>} : vector<16x50xbf16>, vector<50x512xbf16>, vector<16x512xf32> -> vector<16x512xf32>
    %c0_43 = arith.constant 0 : index
    %c0_44 = arith.constant 0 : index
    %88 = vector.load %arg13[%c0_43, %c0_44] : memref<1x512xf32, #tpu.memory_space<vmem>>, vector<1x512xf32>
    %89 = vector.broadcast %88 : vector<1x512xf32> to vector<16x512xf32>
    %90 = arith.addf %87, %89 : vector<16x512xf32>
    %cst_45 = arith.constant 0.000000e+00 : f32
    %91 = vector.broadcast %cst_45 : f32 to vector<16x512xf32>
    %92 = arith.maximumf %90, %91 : vector<16x512xf32>
    %93 = arith.truncf %92 : vector<16x512xf32> to vector<16x512xbf16>
    %c0_46 = arith.constant 0 : index
    %c0_47 = arith.constant 0 : index
    %94 = vector.load %arg14[%c0_46, %c0_47] : memref<512x784xbf16, #tpu.memory_space<vmem>>, vector<512x784xbf16>
    %cst_48 = arith.constant dense<0.000000e+00> : vector<16x784xf32>
    %95 = tpu.matmul %93, %94, %cst_48 {dimension_numbers = #tpu.dot_dimension_numbers<[1], [0], [0], [1], [0, 0, 1, 1], [], []>} : vector<16x512xbf16>, vector<512x784xbf16>, vector<16x784xf32> -> vector<16x784xf32>
    %c0_49 = arith.constant 0 : index
    %c0_50 = arith.constant 0 : index
    %96 = vector.load %arg15[%c0_49, %c0_50] : memref<1x784xf32, #tpu.memory_space<vmem>>, vector<1x784xf32>
    %97 = vector.broadcast %96 : vector<1x784xf32> to vector<16x784xf32>
    %98 = arith.addf %95, %97 : vector<16x784xf32>
    %99 = arith.negf %98 : vector<16x784xf32>
    %100 = math.exp %99 : vector<16x784xf32>
    %cst_51 = arith.constant 1.000000e+00 : f32
    %101 = vector.broadcast %cst_51 : f32 to vector<16x784xf32>
    %102 = arith.addf %101, %100 : vector<16x784xf32>
    %103 = arith.divf %101, %102 : vector<16x784xf32>
    %104 = arith.truncf %103 : vector<16x784xf32> to vector<16x784xbf16>
    %c0_52 = arith.constant 0 : index
    %c0_53 = arith.constant 0 : index
    %105 = vector.load %arg16[%c0_52, %c0_53] : memref<16x784xbf16, #tpu.memory_space<vmem>>, vector<16x784xbf16>
    tpu.vector_store %arg16[%c0_52, %c0_53], %104 {strides = array<i32>} : memref<16x784xbf16, #tpu.memory_space<vmem>>, vector<16x784xbf16>,
    return
  }
  func.func @transform_0(%arg0: i32) -> (i32, i32) {
    %c0_i32 = arith.constant 0 : i32
    %c0_i32_0 = arith.constant 0 : i32
    return %arg0, %c0_i32 : i32, i32
  }
  func.func @transform_1(%arg0: i32) -> (i32, i32) {
    %c0_i32 = arith.constant 0 : i32
    %c0_i32_0 = arith.constant 0 : i32
    return %arg0, %c0_i32 : i32, i32
  }
  func.func @transform_2(%arg0: i32) -> (i32, i32) {
    %c0_i32 = arith.constant 0 : i32
    %c0_i32_0 = arith.constant 0 : i32
    %c0_i32_1 = arith.constant 0 : i32
    return %c0_i32, %c0_i32_0 : i32, i32
  }
  func.func @transform_3(%arg0: i32) -> (i32, i32) {
    %c0_i32 = arith.constant 0 : i32
    %c0_i32_0 = arith.constant 0 : i32
    %c0_i32_1 = arith.constant 0 : i32
    return %c0_i32, %c0_i32_0 : i32, i32
  }
  func.func @transform_4(%arg0: i32) -> (i32, i32) {
    %c0_i32 = arith.constant 0 : i32
    %c0_i32_0 = arith.constant 0 : i32
    %c0_i32_1 = arith.constant 0 : i32
    return %c0_i32, %c0_i32_0 : i32, i32
  }
  func.func @transform_5(%arg0: i32) -> (i32, i32) {
    %c0_i32 = arith.constant 0 : i32
    %c0_i32_0 = arith.constant 0 : i32
    %c0_i32_1 = arith.constant 0 : i32
    return %c0_i32, %c0_i32_0 : i32, i32
  }
  func.func @transform_6(%arg0: i32) -> (i32, i32) {
    %c0_i32 = arith.constant 0 : i32
    %c0_i32_0 = arith.constant 0 : i32
    %c0_i32_1 = arith.constant 0 : i32
    return %c0_i32, %c0_i32_0 : i32, i32
  }
  func.func @transform_7(%arg0: i32) -> (i32, i32) {
    %c0_i32 = arith.constant 0 : i32
    %c0_i32_0 = arith.constant 0 : i32
    %c0_i32_1 = arith.constant 0 : i32
    return %c0_i32, %c0_i32_0 : i32, i32
  }
  func.func @transform_8(%arg0: i32) -> i32 {
    %c0_i32 = arith.constant 0 : i32
    %c0_i32_0 = arith.constant 0 : i32
    return %c0_i32 : i32
  }
  func.func @transform_9(%arg0: i32) -> i32 {
    %c0_i32 = arith.constant 0 : i32
    %c0_i32_0 = arith.constant 0 : i32
    return %c0_i32 : i32
  }
  func.func @transform_10(%arg0: i32) -> i32 {
    %c0_i32 = arith.constant 0 : i32
    %c0_i32_0 = arith.constant 0 : i32
    return %c0_i32 : i32
  }
  func.func @transform_11(%arg0: i32) -> (i32, i32) {
    %c0_i32 = arith.constant 0 : i32
    %c0_i32_0 = arith.constant 0 : i32
    %c0_i32_1 = arith.constant 0 : i32
    return %c0_i32, %c0_i32_0 : i32, i32
  }
  func.func @transform_12(%arg0: i32) -> (i32, i32) {
    %c0_i32 = arith.constant 0 : i32
    %c0_i32_0 = arith.constant 0 : i32
    %c0_i32_1 = arith.constant 0 : i32
    return %c0_i32, %c0_i32_0 : i32, i32
  }
  func.func @transform_13(%arg0: i32) -> (i32, i32) {
    %c0_i32 = arith.constant 0 : i32
    %c0_i32_0 = arith.constant 0 : i32
    %c0_i32_1 = arith.constant 0 : i32
    return %c0_i32, %c0_i32_0 : i32, i32
  }
  func.func @transform_14(%arg0: i32) -> (i32, i32) {
    %c0_i32 = arith.constant 0 : i32
    %c0_i32_0 = arith.constant 0 : i32
    %c0_i32_1 = arith.constant 0 : i32
    return %c0_i32, %c0_i32_0 : i32, i32
  }
  func.func @transform_15(%arg0: i32) -> (i32, i32) {
    %c0_i32 = arith.constant 0 : i32
    %c0_i32_0 = arith.constant 0 : i32
    return %arg0, %c0_i32 : i32, i32
  }
  func.func @transform_16(%arg0: i32) -> (i32, i32) {
    %c0_i32 = arith.constant 0 : i32
    %c0_i32_0 = arith.constant 0 : i32
    return %arg0, %c0_i32 : i32, i32
  }
  func.func @transform_17(%arg0: i32) -> (i32, i32) {
    %c0_i32 = arith.constant 0 : i32
    %c0_i32_0 = arith.constant 0 : i32
    return %arg0, %c0_i32 : i32, i32
  }
  func.func @transform_18(%arg0: i32) -> (i32, i32) {
    %c0_i32 = arith.constant 0 : i32
    %c0_i32_0 = arith.constant 0 : i32
    return %arg0, %c0_i32 : i32, i32
  }
}

</mosaic_0001>

<llo_original>
// kernel: tpu_custom_call.1
$region0: #{tpu_custom_call.1}
  #allocation0 [shape = 'u32[]', space=smem, size = 0x4, offset = 0x4, fixed_abs, tag = 'smem constant byte address 0x4 - core index']
  #allocation1 [shape = 'u32[144,128]{1,0:T(1,128)}', space=vmem, size = 0x12000, scoped, tag = 'internal scratch']
  %s0 = inlined_call_operand.vmem [shape: f32[2,784], index: 0, kind: input, shape index: {}]
  %s1 = inlined_call_operand.vmem [shape: f32[2,50], index: 1, kind: input, shape index: {}]
  %s2 = inlined_call_operand.vmem [shape: bf16[784,512], index: 2, kind: input, shape index: {}]
  %s3 = inlined_call_operand.vmem [shape: f32[1,512], index: 3, kind: input, shape index: {}]
  %s4 = inlined_call_operand.vmem [shape: bf16[512,256], index: 4, kind: input, shape index: {}]
  %s5 = inlined_call_operand.vmem [shape: f32[1,256], index: 5, kind: input, shape index: {}]
  %s6 = inlined_call_operand.vmem [shape: f32[2,50], index: 6, kind: input, shape index: {}]
  %s7 = inlined_call_operand.vmem [shape: f32[2,50], index: 7, kind: input, shape index: {}]
  %s8 = inlined_call_operand.vmem [shape: f32[2], index: 8, kind: input, shape index: {}]
  %s9 = inlined_call_operand.vmem [shape: f32[2], index: 9, kind: input, shape index: {}]
  %s10 = inlined_call_operand.vmem [shape: f32[4], index: 10, kind: input, shape index: {}]
  %s11 = inlined_call_operand.vmem [shape: bf16[50,512], index: 11, kind: input, shape index: {}]
  %s12 = inlined_call_operand.vmem [shape: f32[1,512], index: 12, kind: input, shape index: {}]
  %s13 = inlined_call_operand.vmem [shape: bf16[512,784], index: 13, kind: input, shape index: {}]
  %s14 = inlined_call_operand.vmem [shape: f32[1,784], index: 14, kind: input, shape index: {}]
  %s15 = inlined_call_operand.hbm [shape: bf16[2,784], index: 15, kind: output, shape index: {0}]
  %s16 = inlined_call_operand.hbm [shape: f32[2,50], index: 16, kind: output, shape index: {1}]
  %s17 = inlined_call_operand.hbm [shape: f32[2,50], index: 17, kind: output, shape index: {2}]
  %s18 = inlined_call_operand.vmem [shape: f32[2,1], index: 18, kind: output, shape index: {3}]
  %19 = xla_tuple %s15, %s16, %s17, %s18
  %s20 = sld [smem:[#allocation0]]
  $region136: #{tpu_custom_call.1} parent=0
    _
  %s22 = ssub.s32 1, %s20
  %s23 = scalar_select 0, %s22, %s20
  $region1: #{tpu_custom_call.1} parent=0
    #allocation2 [shape = 'u8[512]{0}', space=smem, size = 0x200, scoped, tag = 'input window, operand 8, single buffered']
    #allocation3 [shape = 's32[1]{0}', space=sflag, size = 0x4, scoped, tag = 'scoped memory for tpu_custom_call.1']
    #allocation4 [shape = 's32[1]{0}', space=sflag, size = 0x4, scoped, tag = 'scoped memory for tpu_custom_call.1']
    #allocation5 [shape = 'u8[512]{0}', space=smem, size = 0x200, scoped, tag = 'input window, operand 9, single buffered']
    #allocation6 [shape = 's32[1]{0}', space=sflag, size = 0x4, scoped, tag = 'scoped memory for tpu_custom_call.1']
    #allocation7 [shape = 'u8[512]{0}', space=smem, size = 0x200, scoped, tag = 'input window, operand 10, single buffered']
    #allocation8 [shape = 'u8[28672]{0}', space=vmem, size = 0x7000, scoped, tag = 'output window, operand 0, single buffered']
    #allocation9 [shape = 'u8[8192]{0}', space=vmem, size = 0x2000, scoped, tag = 'output window, operand 1, single buffered']
    #allocation10 [shape = 's32[1]{0}', space=sflag, size = 0x4, scoped, tag = 'scoped memory for tpu_custom_call.1']
    #allocation11 [shape = 'u8[8192]{0}', space=vmem, size = 0x2000, scoped, tag = 'output window, operand 2, single buffered']
    #allocation12 [shape = 'u8[8192]{0}', space=vmem, size = 0x2000, scoped, tag = 'output window, operand 3, single buffered']
    %24 = vsyncpa [#allocation4], 0
    %25 = vsyncpa [#allocation6], 0
    %26 = vsyncpa [#allocation3], 0
    %27 = vsyncpa [#allocation10], 0
    // Predicated region
    $region2: #{tpu_custom_call.1} parent=1 // pred_check
      _
    $region3: #{tpu_custom_call.1} parent=1 // pred_check_branch
      %29 = sbr.rel (0) target = $region5
    $region4: #{tpu_custom_call.1} parent=1 // pred_region
      _
    $region5: #{tpu_custom_call.1} parent=1 // pred_fallthru
      _
    // Predicated region
    $region6: #{tpu_custom_call.1} parent=1 // pred_check
      _
    $region7: #{tpu_custom_call.1} parent=1 // pred_check_branch
      %31 = sbr.rel (0) target = $region9
    $region8: #{tpu_custom_call.1} parent=1 // pred_region
      _
    $region9: #{tpu_custom_call.1} parent=1 // pred_fallthru
      _
    // Predicated region
    $region10: #{tpu_custom_call.1} parent=1 // pred_check
      _
    $region11: #{tpu_custom_call.1} parent=1 // pred_check_branch
      %33 = sbr.rel (0) target = $region13
    $region12: #{tpu_custom_call.1} parent=1 // pred_region
      _
    $region13: #{tpu_custom_call.1} parent=1 // pred_fallthru
      _
    // Predicated region
    $region14: #{tpu_custom_call.1} parent=1 // pred_check
      _
    $region15: #{tpu_custom_call.1} parent=1 // pred_check_branch
      %35 = sbr.rel (0) target = $region17
    $region16: #{tpu_custom_call.1} parent=1 // pred_region
      _
    $region17: #{tpu_custom_call.1} parent=1 // pred_fallthru
      _
    // Predicated region
    $region18: #{tpu_custom_call.1} parent=1 // pred_check
      _
    $region19: #{tpu_custom_call.1} parent=1 // pred_check_branch
      %37 = sbr.rel (0) target = $region21
    $region20: #{tpu_custom_call.1} parent=1 // pred_region
      _
    $region21: #{tpu_custom_call.1} parent=1 // pred_fallthru
      _
    // Predicated region
    $region22: #{tpu_custom_call.1} parent=1 // pred_check
      _
    $region23: #{tpu_custom_call.1} parent=1 // pred_check_branch
      %39 = sbr.rel (0) target = $region25
    $region24: #{tpu_custom_call.1} parent=1 // pred_region
      _
    $region25: #{tpu_custom_call.1} parent=1 // pred_fallthru
      _
    // Predicated region
    $region26: #{tpu_custom_call.1} parent=1 // pred_check
      _
    $region27: #{tpu_custom_call.1} parent=1 // pred_check_branch
      %41 = sbr.rel (0) target = $region29
    $region28: #{tpu_custom_call.1} parent=1 // pred_region
      _
    $region29: #{tpu_custom_call.1} parent=1 // pred_fallthru
      _
    // Predicated region
    $region30: #{tpu_custom_call.1} parent=1 // pred_check
      _
    $region31: #{tpu_custom_call.1} parent=1 // pred_check_branch
      %43 = sbr.rel (0) target = $region33
    $region32: #{tpu_custom_call.1} parent=1 // pred_region
      _
    $region33: #{tpu_custom_call.1} parent=1 // pred_fallthru
      _
    // Predicated region
    $region34: #{tpu_custom_call.1} parent=1 // pred_check
      _
    $region35: #{tpu_custom_call.1} parent=1 // pred_check_branch
      %45 = sbr.rel (0) target = $region37
    $region36: #{tpu_custom_call.1} parent=1 // pred_region
      %s47 = ssub.s32 16, 16
      %48 = vsyncadd [#allocation4], %s47
      %s50 = sshll.u32 %s8, 4
      %s51 = int_to_ptr.vmem [resolvable:$true] %s50
      %53 = dma.vmem_to_smem %s51, 16, [#allocation2], [#allocation4]
    $region37: #{tpu_custom_call.1} parent=1 // pred_fallthru
      _
    // Predicated region
    $region38: #{tpu_custom_call.1} parent=1 // pred_check
      _
    $region39: #{tpu_custom_call.1} parent=1 // pred_check_branch
      %55 = sbr.rel (0) target = $region41
    $region40: #{tpu_custom_call.1} parent=1 // pred_region
      %s57 = ssub.s32 16, 16
      %58 = vsyncadd [#allocation6], %s57
      %s60 = sshll.u32 %s9, 4
      %s61 = int_to_ptr.vmem [resolvable:$true] %s60
      %63 = dma.vmem_to_smem %s61, 16, [#allocation5], [#allocation6]
    $region41: #{tpu_custom_call.1} parent=1 // pred_fallthru
      _
    // Predicated region
    $region42: #{tpu_custom_call.1} parent=1 // pred_check
      _
    $region43: #{tpu_custom_call.1} parent=1 // pred_check_branch
      %65 = sbr.rel (0) target = $region45
    $region44: #{tpu_custom_call.1} parent=1 // pred_region
      %s67 = ssub.s32 16, 16
      %68 = vsyncadd [#allocation6], %s67
      %s70 = sshll.u32 %s10, 4
      %s71 = int_to_ptr.vmem [resolvable:$true] %s70
      %73 = dma.vmem_to_smem %s71, 16, [#allocation7], [#allocation6]
    $region45: #{tpu_custom_call.1} parent=1 // pred_fallthru
      _
    // Predicated region
    $region46: #{tpu_custom_call.1} parent=1 // pred_check
      _
    $region47: #{tpu_custom_call.1} parent=1 // pred_check_branch
      %75 = sbr.rel (0) target = $region49
    $region48: #{tpu_custom_call.1} parent=1 // pred_region
      _
    $region49: #{tpu_custom_call.1} parent=1 // pred_fallthru
      _
    // Predicated region
    $region50: #{tpu_custom_call.1} parent=1 // pred_check
      _
    $region51: #{tpu_custom_call.1} parent=1 // pred_check_branch
      %77 = sbr.rel (0) target = $region53
    $region52: #{tpu_custom_call.1} parent=1 // pred_region
      _
    $region53: #{tpu_custom_call.1} parent=1 // pred_fallthru
      _
    // Predicated region
    $region54: #{tpu_custom_call.1} parent=1 // pred_check
      _
    $region55: #{tpu_custom_call.1} parent=1 // pred_check_branch
      %79 = sbr.rel (0) target = $region57
    $region56: #{tpu_custom_call.1} parent=1 // pred_region
      _
    $region57: #{tpu_custom_call.1} parent=1 // pred_fallthru
      _
    // Predicated region
    $region58: #{tpu_custom_call.1} parent=1 // pred_check
      _
    $region59: #{tpu_custom_call.1} parent=1 // pred_check_branch
      %81 = sbr.rel (0) target = $region61
    $region60: #{tpu_custom_call.1} parent=1 // pred_region
      _
    $region61: #{tpu_custom_call.1} parent=1 // pred_fallthru
      _
    // Predicated region
    $region62: #{tpu_custom_call.1} parent=1 // pred_check
      _
    $region63: #{tpu_custom_call.1} parent=1 // pred_check_branch
      %83 = sbr.rel (0) target = $region65
    $region64: #{tpu_custom_call.1} parent=1 // pred_region
      %84 = dma.done [#allocation4], 16
    $region65: #{tpu_custom_call.1} parent=1 // pred_fallthru
      _
    // Predicated region
    $region66: #{tpu_custom_call.1} parent=1 // pred_check
      _
    $region67: #{tpu_custom_call.1} parent=1 // pred_check_branch
      %86 = sbr.rel (0) target = $region69
    $region68: #{tpu_custom_call.1} parent=1 // pred_region
      %87 = dma.done [#allocation6], 16
    $region69: #{tpu_custom_call.1} parent=1 // pred_fallthru
      _
    // Predicated region
    $region70: #{tpu_custom_call.1} parent=1 // pred_check
      _
    $region71: #{tpu_custom_call.1} parent=1 // pred_check_branch
      %89 = sbr.rel (0) target = $region73
    $region72: #{tpu_custom_call.1} parent=1 // pred_region
      %90 = dma.done [#allocation6], 16
    $region73: #{tpu_custom_call.1} parent=1 // pred_fallthru
      _
    %91 = sfence
    %v93 = vld [vmem:[%s0] sm:$0xff]
    %v94 = vld [vmem:[%s0 + $0x8] sm:$0x3f]
    %v95 = vld [vmem:[%s0 + $0xe] sm:$0xff]
    %v96 = vld [vmem:[%s0 + $0x16] sm:$0x3f]
    %v97 = vld [vmem:[%s0 + $0x1c] sm:$0xff]
    %v98 = vld [vmem:[%s0 + $0x24] sm:$0x3f]
    %v99 = vld [vmem:[%s0 + $0x2a] sm:$0xff]
    %v100 = vld [vmem:[%s0 + $0x32] sm:$0x3f]
    %v101 = vld [vmem:[%s0 + $0x38] sm:$0xff]
    %v102 = vld [vmem:[%s0 + $0x40] sm:$0x3f]
    %v103 = vld [vmem:[%s0 + $0x46] sm:$0xff]
    %v104 = vld [vmem:[%s0 + $0x4e] sm:$0x3f]
    %v105 = vld [vmem:[%s0 + $0x54] sm:$0xff]
    %v106 = vld [vmem:[%s0 + $0x5c] sm:$0x3f]
    %v107 = vld [vmem:[%s0 + $0x62] sm:$0xff]
    %v108 = vld [vmem:[%s0 + $0x6a] sm:$0x3f]
    %v125 = vcombine.low %v93, %v95
    %v126 = vcombine.high %v93, %v95
    %v127 = vcombine.low %v97, %v99
    %v128 = vcombine.high %v97, %v99
    %v130 = vunpack.c.l.s4 1983009808
    %v131 = vunpack.c.0.s8 %v130
    %v132 = vlaneseq
    %v133 = vshrl.u32 %v132, 7
    %v134 = vsub.s32 %v131, %v133
    %v135 = vrot.slane %v125, %v134
    %v137 = vunpack.c.l.s4 1983009808
    %v138 = vunpack.c.0.s8 %v137
    %v139 = vlaneseq
    %v140 = vshrl.u32 %v139, 7
    %v141 = vsub.s32 %v138, %v140
    %v142 = vrot.slane %v126, %v141
    %v144 = vunpack.c.l.s4 1983009808
    %v145 = vunpack.c.0.s8 %v144
    %v146 = vlaneseq
    %v147 = vshrl.u32 %v146, 7
    %v148 = vsub.s32 %v145, %v147
    %v149 = vrot.slane %v127, %v148
    %v151 = vunpack.c.l.s4 1983009808
    %v152 = vunpack.c.0.s8 %v151
    %v153 = vlaneseq
    %v154 = vshrl.u32 %v153, 7
    %v155 = vsub.s32 %v152, %v154
    %v156 = vrot.slane %v128, %v155
    %v157 = vcombine.low %v135, %v149
    %v158 = vcombine.high %v135, %v149
    %v159 = vcombine.low %v142, %v156
    %v160 = vcombine.high %v142, %v156
    %v161 = vcombine.low %v94, %v96
    %v162 = vcombine.high %v94, %v96
    %v163 = vcombine.low %v98, %v100
    %v164 = vcombine.high %v98, %v100
    %v166 = vunpack.c.l.s4 1983009808
    %v167 = vunpack.c.0.s8 %v166
    %v168 = vlaneseq
    %v169 = vshrl.u32 %v168, 7
    %v170 = vsub.s32 %v167, %v169
    %v171 = vrot.slane %v161, %v170
    %v173 = vunpack.c.l.s4 1983009808
    %v174 = vunpack.c.0.s8 %v173
    %v175 = vlaneseq
    %v176 = vshrl.u32 %v175, 7
    %v177 = vsub.s32 %v174, %v176
    %v178 = vrot.slane %v162, %v177
    %v180 = vunpack.c.l.s4 1983009808
    %v181 = vunpack.c.0.s8 %v180
    %v182 = vlaneseq
    %v183 = vshrl.u32 %v182, 7
    %v184 = vsub.s32 %v181, %v183
    %v185 = vrot.slane %v163, %v184
    %v187 = vunpack.c.l.s4 1983009808
    %v188 = vunpack.c.0.s8 %v187
    %v189 = vlaneseq
    %v190 = vshrl.u32 %v189, 7
    %v191 = vsub.s32 %v188, %v190
    %v192 = vrot.slane %v164, %v191
    %v193 = vcombine.low %v171, %v185
    %v194 = vcombine.high %v171, %v185
    %v195 = vcombine.low %v178, %v192
    %v196 = vcombine.low %v101, %v103
    %v197 = vcombine.high %v101, %v103
    %v198 = vcombine.low %v105, %v107
    %v199 = vcombine.high %v105, %v107
    %v201 = vunpack.c.l.s4 1983009808
    %v202 = vunpack.c.0.s8 %v201
    %v203 = vlaneseq
    %v204 = vshrl.u32 %v203, 7
    %v205 = vsub.s32 %v202, %v204
    %v206 = vrot.slane %v196, %v205
    %v208 = vunpack.c.l.s4 1983009808
    %v209 = vunpack.c.0.s8 %v208
    %v210 = vlaneseq
    %v211 = vshrl.u32 %v210, 7
    %v212 = vsub.s32 %v209, %v211
    %v213 = vrot.slane %v197, %v212
    %v215 = vunpack.c.l.s4 1983009808
    %v216 = vunpack.c.0.s8 %v215
    %v217 = vlaneseq
    %v218 = vshrl.u32 %v217, 7
    %v219 = vsub.s32 %v216, %v218
    %v220 = vrot.slane %v198, %v219
    %v222 = vunpack.c.l.s4 1983009808
    %v223 = vunpack.c.0.s8 %v222
    %v224 = vlaneseq
    %v225 = vshrl.u32 %v224, 7
    %v226 = vsub.s32 %v223, %v225
    %v227 = vrot.slane %v199, %v226
    %v228 = vcombine.low %v206, %v220
    %v229 = vcombine.high %v206, %v220
    %v230 = vcombine.low %v213, %v227
    %v231 = vcombine.high %v213, %v227
    %v232 = vcombine.low %v102, %v104
    %v233 = vcombine.high %v102, %v104
    %v234 = vcombine.low %v106, %v108
    %v235 = vcombine.high %v106, %v108
    %v237 = vunpack.c.l.s4 1983009808
    %v238 = vunpack.c.0.s8 %v237
    %v239 = vlaneseq
    %v240 = vshrl.u32 %v239, 7
    %v241 = vsub.s32 %v238, %v240
    %v242 = vrot.slane %v232, %v241
    %v244 = vunpack.c.l.s4 1983009808
    %v245 = vunpack.c.0.s8 %v244
    %v246 = vlaneseq
    %v247 = vshrl.u32 %v246, 7
    %v248 = vsub.s32 %v245, %v247
    %v249 = vrot.slane %v233, %v248
    %v251 = vunpack.c.l.s4 1983009808
    %v252 = vunpack.c.0.s8 %v251
    %v253 = vlaneseq
    %v254 = vshrl.u32 %v253, 7
    %v255 = vsub.s32 %v252, %v254
    %v256 = vrot.slane %v234, %v255
    %v258 = vunpack.c.l.s4 1983009808
    %v259 = vunpack.c.0.s8 %v258
    %v260 = vlaneseq
    %v261 = vshrl.u32 %v260, 7
    %v262 = vsub.s32 %v259, %v261
    %v263 = vrot.slane %v235, %v262
    %v264 = vcombine.low %v242, %v256
    %v265 = vcombine.high %v242, %v256
    %v266 = vcombine.low %v249, %v263
    %v281 = vpack.c.bf16 %v228, %v157
    %v282 = vpack.c.bf16 %v229, %v158
    %v283 = vpack.c.bf16 %v230, %v159
    %v284 = vpack.c.bf16 %v231, %v160
    %v285 = vpack.c.bf16 %v264, %v193
    %v286 = vpack.c.bf16 %v265, %v194
    %v287 = vpack.c.bf16 %v266, %v195
    %v288 = vld [vmem:[%s2] sm:$0xff]
    %v289 = vld [vmem:[%s2 + $0x8] sm:$0xff]
    %v290 = vld [vmem:[%s2 + $0x10] sm:$0xff]
    %v291 = vld [vmem:[%s2 + $0x18] sm:$0xff]
    %v292 = vld [vmem:[%s2 + $0x20] sm:$0xff]
    %v293 = vld [vmem:[%s2 + $0x28] sm:$0xff]
    %v294 = vld [vmem:[%s2 + $0x30] sm:$0xff]
    %v295 = vld [vmem:[%s2 + $0x38] sm:$0xff]
    %v296 = vld [vmem:[%s2 + $0x40] sm:$0xff]
    %v297 = vld [vmem:[%s2 + $0x48] sm:$0xff]
    %v298 = vld [vmem:[%s2 + $0x50] sm:$0xff]
    %v299 = vld [vmem:[%s2 + $0x58] sm:$0xff]
    %v300 = vld [vmem:[%s2 + $0x60] sm:$0xff]
    %v301 = vld [vmem:[%s2 + $0x68] sm:$0xff]
    %v302 = vld [vmem:[%s2 + $0x70] sm:$0xff]
    %v303 = vld [vmem:[%s2 + $0x78] sm:$0xff]
    %v304 = vld [vmem:[%s2 + $0x80] sm:$0xff]
    %v305 = vld [vmem:[%s2 + $0x88] sm:$0xff]
    %v306 = vld [vmem:[%s2 + $0x90] sm:$0xff]
    %v307 = vld [vmem:[%s2 + $0x98] sm:$0xff]
    %v308 = vld [vmem:[%s2 + $0xa0] sm:$0xff]
    %v309 = vld [vmem:[%s2 + $0xa8] sm:$0xff]
    %v310 = vld [vmem:[%s2 + $0xb0] sm:$0xff]
    %v311 = vld [vmem:[%s2 + $0xb8] sm:$0xff]
    %v312 = vld [vmem:[%s2 + $0xc0] sm:$0xff]
    %v313 = vld [vmem:[%s2 + $0xc8] sm:$0xff]
    %v314 = vld [vmem:[%s2 + $0xd0] sm:$0xff]
    %v315 = vld [vmem:[%s2 + $0xd8] sm:$0xff]
    %v316 = vld [vmem:[%s2 + $0xe0] sm:$0xff]
    %v317 = vld [vmem:[%s2 + $0xe8] sm:$0xff]
    %v318 = vld [vmem:[%s2 + $0xf0] sm:$0xff]
    %v319 = vld [vmem:[%s2 + $0xf8] sm:$0xff]
    %v320 = vld [vmem:[%s2 + $0x100] sm:$0xff]
    %v321 = vld [vmem:[%s2 + $0x108] sm:$0xff]
    %v322 = vld [vmem:[%s2 + $0x110] sm:$0xff]
    %v323 = vld [vmem:[%s2 + $0x118] sm:$0xff]
    %v324 = vld [vmem:[%s2 + $0x120] sm:$0xff]
    %v325 = vld [vmem:[%s2 + $0x128] sm:$0xff]
    %v326 = vld [vmem:[%s2 + $0x130] sm:$0xff]
    %v327 = vld [vmem:[%s2 + $0x138] sm:$0xff]
    %v328 = vld [vmem:[%s2 + $0x140] sm:$0xff]
    %v329 = vld [vmem:[%s2 + $0x148] sm:$0xff]
    %v330 = vld [vmem:[%s2 + $0x150] sm:$0xff]
    %v331 = vld [vmem:[%s2 + $0x158] sm:$0xff]
    %v332 = vld [vmem:[%s2 + $0x160] sm:$0xff]
    %v333 = vld [vmem:[%s2 + $0x168] sm:$0xff]
    %v334 = vld [vmem:[%s2 + $0x170] sm:$0xff]
    %v335 = vld [vmem:[%s2 + $0x178] sm:$0xff]
    %v336 = vld [vmem:[%s2 + $0x180] sm:$0xff]
    %v337 = vld [vmem:[%s2 + $0x188] sm:$0xff]
    %v338 = vld [vmem:[%s2 + $0x190] sm:$0xff]
    %v339 = vld [vmem:[%s2 + $0x198] sm:$0xff]
    %v340 = vld [vmem:[%s2 + $0x1a0] sm:$0xff]
    %v341 = vld [vmem:[%s2 + $0x1a8] sm:$0xff]
    %v342 = vld [vmem:[%s2 + $0x1b0] sm:$0xff]
    %v343 = vld [vmem:[%s2 + $0x1b8] sm:$0xff]
    %v344 = vld [vmem:[%s2 + $0x1c0] sm:$0xff]
    %v345 = vld [vmem:[%s2 + $0x1c8] sm:$0xff]
    %v346 = vld [vmem:[%s2 + $0x1d0] sm:$0xff]
    %v347 = vld [vmem:[%s2 + $0x1d8] sm:$0xff]
    %v348 = vld [vmem:[%s2 + $0x1e0] sm:$0xff]
    %v349 = vld [vmem:[%s2 + $0x1e8] sm:$0xff]
    %v350 = vld [vmem:[%s2 + $0x1f0] sm:$0xff]
    %v351 = vld [vmem:[%s2 + $0x1f8] sm:$0xff]
    %v352 = vld [vmem:[%s2 + $0x200] sm:$0xff]
    %v353 = vld [vmem:[%s2 + $0x208] sm:$0xff]
    %v354 = vld [vmem:[%s2 + $0x210] sm:$0xff]
    %v355 = vld [vmem:[%s2 + $0x218] sm:$0xff]
    %v356 = vld [vmem:[%s2 + $0x220] sm:$0xff]
    %v357 = vld [vmem:[%s2 + $0x228] sm:$0xff]
    %v358 = vld [vmem:[%s2 + $0x230] sm:$0xff]
    %v359 = vld [vmem:[%s2 + $0x238] sm:$0xff]
    %v360 = vld [vmem:[%s2 + $0x240] sm:$0xff]
    %v361 = vld [vmem:[%s2 + $0x248] sm:$0xff]
    %v362 = vld [vmem:[%s2 + $0x250] sm:$0xff]
    %v363 = vld [vmem:[%s2 + $0x258] sm:$0xff]
    %v364 = vld [vmem:[%s2 + $0x260] sm:$0xff]
    %v365 = vld [vmem:[%s2 + $0x268] sm:$0xff]
    %v366 = vld [vmem:[%s2 + $0x270] sm:$0xff]
    %v367 = vld [vmem:[%s2 + $0x278] sm:$0xff]
    %v368 = vld [vmem:[%s2 + $0x280] sm:$0xff]
    %v369 = vld [vmem:[%s2 + $0x288] sm:$0xff]
    %v370 = vld [vmem:[%s2 + $0x290] sm:$0xff]
    %v371 = vld [vmem:[%s2 + $0x298] sm:$0xff]
    %v372 = vld [vmem:[%s2 + $0x2a0] sm:$0xff]
    %v373 = vld [vmem:[%s2 + $0x2a8] sm:$0xff]
    %v374 = vld [vmem:[%s2 + $0x2b0] sm:$0xff]
    %v375 = vld [vmem:[%s2 + $0x2b8] sm:$0xff]
    %v376 = vld [vmem:[%s2 + $0x2c0] sm:$0xff]
    %v377 = vld [vmem:[%s2 + $0x2c8] sm:$0xff]
    %v378 = vld [vmem:[%s2 + $0x2d0] sm:$0xff]
    %v379 = vld [vmem:[%s2 + $0x2d8] sm:$0xff]
    %v380 = vld [vmem:[%s2 + $0x2e0] sm:$0xff]
    %v381 = vld [vmem:[%s2 + $0x2e8] sm:$0xff]
    %v382 = vld [vmem:[%s2 + $0x2f0] sm:$0xff]
    %v383 = vld [vmem:[%s2 + $0x2f8] sm:$0xff]
    %v384 = vld [vmem:[%s2 + $0x300] sm:$0xff]
    %v385 = vld [vmem:[%s2 + $0x308] sm:$0xff]
    %v386 = vld [vmem:[%s2 + $0x310] sm:$0xff]
    %v387 = vld [vmem:[%s2 + $0x318] sm:$0xff]
    %v388 = vld [vmem:[%s2 + $0x320] sm:$0xff]
    %v389 = vld [vmem:[%s2 + $0x328] sm:$0xff]
    %v390 = vld [vmem:[%s2 + $0x330] sm:$0xff]
    %v391 = vld [vmem:[%s2 + $0x338] sm:$0xff]
    %v392 = vld [vmem:[%s2 + $0x340] sm:$0xff]
    %v393 = vld [vmem:[%s2 + $0x348] sm:$0xff]
    %v394 = vld [vmem:[%s2 + $0x350] sm:$0xff]
    %v395 = vld [vmem:[%s2 + $0x358] sm:$0xff]
    %v396 = vld [vmem:[%s2 + $0x360] sm:$0xff]
    %v397 = vld [vmem:[%s2 + $0x368] sm:$0xff]
    %v398 = vld [vmem:[%s2 + $0x370] sm:$0xff]
    %v399 = vld [vmem:[%s2 + $0x378] sm:$0xff]
    %v400 = vld [vmem:[%s2 + $0x380] sm:$0xff]
    %v401 = vld [vmem:[%s2 + $0x388] sm:$0xff]
    %v402 = vld [vmem:[%s2 + $0x390] sm:$0xff]
    %v403 = vld [vmem:[%s2 + $0x398] sm:$0xff]
    %v404 = vld [vmem:[%s2 + $0x3a0] sm:$0xff]
    %v405 = vld [vmem:[%s2 + $0x3a8] sm:$0xff]
    %v406 = vld [vmem:[%s2 + $0x3b0] sm:$0xff]
    %v407 = vld [vmem:[%s2 + $0x3b8] sm:$0xff]
    %v408 = vld [vmem:[%s2 + $0x3c0] sm:$0xff]
    %v409 = vld [vmem:[%s2 + $0x3c8] sm:$0xff]
    %v410 = vld [vmem:[%s2 + $0x3d0] sm:$0xff]
    %v411 = vld [vmem:[%s2 + $0x3d8] sm:$0xff]
    %v412 = vld [vmem:[%s2 + $0x3e0] sm:$0xff]
    %v413 = vld [vmem:[%s2 + $0x3e8] sm:$0xff]
    %v414 = vld [vmem:[%s2 + $0x3f0] sm:$0xff]
    %v415 = vld [vmem:[%s2 + $0x3f8] sm:$0xff]
    %v416 = vld [vmem:[%s2 + $0x400] sm:$0xff]
    %v417 = vld [vmem:[%s2 + $0x408] sm:$0xff]
    %v418 = vld [vmem:[%s2 + $0x410] sm:$0xff]
    %v419 = vld [vmem:[%s2 + $0x418] sm:$0xff]
    %v420 = vld [vmem:[%s2 + $0x420] sm:$0xff]
    %v421 = vld [vmem:[%s2 + $0x428] sm:$0xff]
    %v422 = vld [vmem:[%s2 + $0x430] sm:$0xff]
    %v423 = vld [vmem:[%s2 + $0x438] sm:$0xff]
    %v424 = vld [vmem:[%s2 + $0x440] sm:$0xff]
    %v425 = vld [vmem:[%s2 + $0x448] sm:$0xff]
    %v426 = vld [vmem:[%s2 + $0x450] sm:$0xff]
    %v427 = vld [vmem:[%s2 + $0x458] sm:$0xff]
    %v428 = vld [vmem:[%s2 + $0x460] sm:$0xff]
    %v429 = vld [vmem:[%s2 + $0x468] sm:$0xff]
    %v430 = vld [vmem:[%s2 + $0x470] sm:$0xff]
    %v431 = vld [vmem:[%s2 + $0x478] sm:$0xff]
    %v432 = vld [vmem:[%s2 + $0x480] sm:$0xff]
    %v433 = vld [vmem:[%s2 + $0x488] sm:$0xff]
    %v434 = vld [vmem:[%s2 + $0x490] sm:$0xff]
    %v435 = vld [vmem:[%s2 + $0x498] sm:$0xff]
    %v436 = vld [vmem:[%s2 + $0x4a0] sm:$0xff]
    %v437 = vld [vmem:[%s2 + $0x4a8] sm:$0xff]
    %v438 = vld [vmem:[%s2 + $0x4b0] sm:$0xff]
    %v439 = vld [vmem:[%s2 + $0x4b8] sm:$0xff]
    %v440 = vld [vmem:[%s2 + $0x4c0] sm:$0xff]
    %v441 = vld [vmem:[%s2 + $0x4c8] sm:$0xff]
    %v442 = vld [vmem:[%s2 + $0x4d0] sm:$0xff]
    %v443 = vld [vmem:[%s2 + $0x4d8] sm:$0xff]
    %v444 = vld [vmem:[%s2 + $0x4e0] sm:$0xff]
    %v445 = vld [vmem:[%s2 + $0x4e8] sm:$0xff]
    %v446 = vld [vmem:[%s2 + $0x4f0] sm:$0xff]
    %v447 = vld [vmem:[%s2 + $0x4f8] sm:$0xff]
    %v448 = vld [vmem:[%s2 + $0x500] sm:$0xff]
    %v449 = vld [vmem:[%s2 + $0x508] sm:$0xff]
    %v450 = vld [vmem:[%s2 + $0x510] sm:$0xff]
    %v451 = vld [vmem:[%s2 + $0x518] sm:$0xff]
    %v452 = vld [vmem:[%s2 + $0x520] sm:$0xff]
    %v453 = vld [vmem:[%s2 + $0x528] sm:$0xff]
    %v454 = vld [vmem:[%s2 + $0x530] sm:$0xff]
    %v455 = vld [vmem:[%s2 + $0x538] sm:$0xff]
    %v456 = vld [vmem:[%s2 + $0x540] sm:$0xff]
    %v457 = vld [vmem:[%s2 + $0x548] sm:$0xff]
    %v458 = vld [vmem:[%s2 + $0x550] sm:$0xff]
    %v459 = vld [vmem:[%s2 + $0x558] sm:$0xff]
    %v460 = vld [vmem:[%s2 + $0x560] sm:$0xff]
    %v461 = vld [vmem:[%s2 + $0x568] sm:$0xff]
    %v462 = vld [vmem:[%s2 + $0x570] sm:$0xff]
    %v463 = vld [vmem:[%s2 + $0x578] sm:$0xff]
    %v464 = vld [vmem:[%s2 + $0x580] sm:$0xff]
    %v465 = vld [vmem:[%s2 + $0x588] sm:$0xff]
    %v466 = vld [vmem:[%s2 + $0x590] sm:$0xff]
    %v467 = vld [vmem:[%s2 + $0x598] sm:$0xff]
    %v468 = vld [vmem:[%s2 + $0x5a0] sm:$0xff]
    %v469 = vld [vmem:[%s2 + $0x5a8] sm:$0xff]
    %v470 = vld [vmem:[%s2 + $0x5b0] sm:$0xff]
    %v471 = vld [vmem:[%s2 + $0x5b8] sm:$0xff]
    %v472 = vld [vmem:[%s2 + $0x5c0] sm:$0xff]
    %v473 = vld [vmem:[%s2 + $0x5c8] sm:$0xff]
    %v474 = vld [vmem:[%s2 + $0x5d0] sm:$0xff]
    %v475 = vld [vmem:[%s2 + $0x5d8] sm:$0xff]
    %v476 = vld [vmem:[%s2 + $0x5e0] sm:$0xff]
    %v477 = vld [vmem:[%s2 + $0x5e8] sm:$0xff]
    %v478 = vld [vmem:[%s2 + $0x5f0] sm:$0xff]
    %v479 = vld [vmem:[%s2 + $0x5f8] sm:$0xff]
    %v480 = vld [vmem:[%s2 + $0x600] sm:$0xff]
    %v481 = vld [vmem:[%s2 + $0x608] sm:$0xff]
    %v482 = vld [vmem:[%s2 + $0x610] sm:$0xff]
    %v483 = vld [vmem:[%s2 + $0x618] sm:$0xff]
    %v484 = vld [vmem:[%s3] sm:$0xf]
    %v486 = vlaneseq
    %v487 = vshrl.u32 %v486, 7
    %v488 = vsub.s32 0, %v487
    %v489 = vrot.slane %v484, %v488
    %v490 = vlaneseq
    %v491 = vshrl.u32 %v490, 7
    %v492 = vsub.s32 1, %v491
    %v493 = vrot.slane %v484, %v492
    %v494 = vlaneseq
    %v495 = vshrl.u32 %v494, 7
    %v496 = vsub.s32 2, %v495
    %v497 = vrot.slane %v484, %v496
    %v498 = vlaneseq
    %v499 = vshrl.u32 %v498, 7
    %v500 = vsub.s32 3, %v499
    %v501 = vrot.slane %v484, %v500
    %v702 = vunpack.c.l.b16 %v288
    %v703 = vunpack.c.h.b16 %v288
    %v704 = vunpack.c.l.b16 %v289
    %v705 = vunpack.c.h.b16 %v289
    %v706 = vunpack.c.l.b16 %v290
    %v707 = vunpack.c.h.b16 %v290
    %v708 = vunpack.c.l.b16 %v291
    %v709 = vunpack.c.h.b16 %v291
    %v710 = vunpack.c.l.b16 %v292
    %v711 = vunpack.c.h.b16 %v292
    %v712 = vunpack.c.l.b16 %v293
    %v713 = vunpack.c.h.b16 %v293
    %v714 = vunpack.c.l.b16 %v294
    %v715 = vunpack.c.h.b16 %v294
    %v716 = vunpack.c.l.b16 %v295
    %v717 = vunpack.c.h.b16 %v295
    %v718 = vunpack.c.l.b16 %v296
    %v719 = vunpack.c.h.b16 %v296
    %v720 = vunpack.c.l.b16 %v297
    %v721 = vunpack.c.h.b16 %v297
    %v722 = vunpack.c.l.b16 %v298
    %v723 = vunpack.c.h.b16 %v298
    %v724 = vunpack.c.l.b16 %v299
    %v725 = vunpack.c.h.b16 %v299
    %v726 = vunpack.c.l.b16 %v300
    %v727 = vunpack.c.h.b16 %v300
    %v728 = vunpack.c.l.b16 %v301
    %v729 = vunpack.c.h.b16 %v301
    %v730 = vunpack.c.l.b16 %v302
    %v731 = vunpack.c.h.b16 %v302
    %v732 = vunpack.c.l.b16 %v303
    %v733 = vunpack.c.h.b16 %v303
    %v734 = vunpack.c.l.b16 %v304
    %v735 = vunpack.c.h.b16 %v304
    %v736 = vunpack.c.l.b16 %v305
    %v737 = vunpack.c.h.b16 %v305
    %v738 = vunpack.c.l.b16 %v306
    %v739 = vunpack.c.h.b16 %v306
    %v740 = vunpack.c.l.b16 %v307
    %v741 = vunpack.c.h.b16 %v307
    %v742 = vunpack.c.l.b16 %v308
    %v743 = vunpack.c.h.b16 %v308
    %v744 = vunpack.c.l.b16 %v309
    %v745 = vunpack.c.h.b16 %v309
    %v746 = vunpack.c.l.b16 %v310
    %v747 = vunpack.c.h.b16 %v310
    %v748 = vunpack.c.l.b16 %v311
    %v749 = vunpack.c.h.b16 %v311
    %v750 = vunpack.c.l.b16 %v312
    %v751 = vunpack.c.h.b16 %v312
    %v752 = vunpack.c.l.b16 %v313
    %v753 = vunpack.c.h.b16 %v313
    %v754 = vunpack.c.l.b16 %v314
    %v755 = vunpack.c.h.b16 %v314
    %v756 = vunpack.c.l.b16 %v315
    %v757 = vunpack.c.h.b16 %v315
    %v758 = vunpack.c.l.b16 %v316
    %v759 = vunpack.c.h.b16 %v316
    %v760 = vunpack.c.l.b16 %v317
    %v761 = vunpack.c.h.b16 %v317
    %v762 = vunpack.c.l.b16 %v318
    %v763 = vunpack.c.h.b16 %v318
    %v764 = vunpack.c.l.b16 %v319
    %v765 = vunpack.c.h.b16 %v319
    %v766 = vunpack.c.l.b16 %v320
    %v767 = vunpack.c.h.b16 %v320
    %v768 = vunpack.c.l.b16 %v321
    %v769 = vunpack.c.h.b16 %v321
    %v770 = vunpack.c.l.b16 %v322
    %v771 = vunpack.c.h.b16 %v322
    %v772 = vunpack.c.l.b16 %v323
    %v773 = vunpack.c.h.b16 %v323
    %v774 = vunpack.c.l.b16 %v324
    %v775 = vunpack.c.h.b16 %v324
    %v776 = vunpack.c.l.b16 %v325
    %v777 = vunpack.c.h.b16 %v325
    %v778 = vunpack.c.l.b16 %v326
    %v779 = vunpack.c.h.b16 %v326
    %v780 = vunpack.c.l.b16 %v327
    %v781 = vunpack.c.h.b16 %v327
    %v782 = vunpack.c.l.b16 %v328
    %v783 = vunpack.c.h.b16 %v328
    %v784 = vunpack.c.l.b16 %v329
    %v785 = vunpack.c.h.b16 %v329
    %v786 = vunpack.c.l.b16 %v330
    %v787 = vunpack.c.h.b16 %v330
    %v788 = vunpack.c.l.b16 %v331
    %v789 = vunpack.c.h.b16 %v331
    %v790 = vunpack.c.l.b16 %v332
    %v791 = vunpack.c.h.b16 %v332
    %v792 = vunpack.c.l.b16 %v333
    %v793 = vunpack.c.h.b16 %v333
    %v794 = vunpack.c.l.b16 %v334
    %v795 = vunpack.c.h.b16 %v334
    %v796 = vunpack.c.l.b16 %v335
    %v797 = vunpack.c.h.b16 %v335
    %v798 = vunpack.c.l.b16 %v336
    %v799 = vunpack.c.h.b16 %v336
    %v800 = vunpack.c.l.b16 %v337
    %v801 = vunpack.c.h.b16 %v337
    %v802 = vunpack.c.l.b16 %v338
    %v803 = vunpack.c.h.b16 %v338
    %v804 = vunpack.c.l.b16 %v339
    %v805 = vunpack.c.h.b16 %v339
    %v806 = vunpack.c.l.b16 %v340
    %v807 = vunpack.c.h.b16 %v340
    %v808 = vunpack.c.l.b16 %v341
    %v809 = vunpack.c.h.b16 %v341
    %v810 = vunpack.c.l.b16 %v342
    %v811 = vunpack.c.h.b16 %v342
    %v812 = vunpack.c.l.b16 %v343
    %v813 = vunpack.c.h.b16 %v343
    %v814 = vunpack.c.l.b16 %v344
    %v815 = vunpack.c.h.b16 %v344
    %v816 = vunpack.c.l.b16 %v345
    %v817 = vunpack.c.h.b16 %v345
    %v818 = vunpack.c.l.b16 %v346
    %v819 = vunpack.c.h.b16 %v346
    %v820 = vunpack.c.l.b16 %v347
    %v821 = vunpack.c.h.b16 %v347
    %v822 = vunpack.c.l.b16 %v348
    %v823 = vunpack.c.h.b16 %v348
    %v824 = vunpack.c.l.b16 %v349
    %v825 = vunpack.c.h.b16 %v349
    %v826 = vunpack.c.l.b16 %v350
    %v827 = vunpack.c.h.b16 %v350
    %v828 = vunpack.c.l.b16 %v351
    %v829 = vunpack.c.h.b16 %v351
    %v830 = vunpack.c.l.b16 %v352
    %v831 = vunpack.c.h.b16 %v352
    %v832 = vunpack.c.l.b16 %v353
    %v833 = vunpack.c.h.b16 %v353
    %v834 = vunpack.c.l.b16 %v354
    %v835 = vunpack.c.h.b16 %v354
    %v836 = vunpack.c.l.b16 %v355
    %v837 = vunpack.c.h.b16 %v355
    %v838 = vunpack.c.l.b16 %v356
    %v839 = vunpack.c.h.b16 %v356
    %v840 = vunpack.c.l.b16 %v357
    %v841 = vunpack.c.h.b16 %v357
    %v842 = vunpack.c.l.b16 %v358
    %v843 = vunpack.c.h.b16 %v358
    %v844 = vunpack.c.l.b16 %v359
    %v845 = vunpack.c.h.b16 %v359
    %v846 = vunpack.c.l.b16 %v360
    %v847 = vunpack.c.h.b16 %v360
    %v848 = vunpack.c.l.b16 %v361
    %v849 = vunpack.c.h.b16 %v361
    %v850 = vunpack.c.l.b16 %v362
    %v851 = vunpack.c.h.b16 %v362
    %v852 = vunpack.c.l.b16 %v363
    %v853 = vunpack.c.h.b16 %v363
    %v854 = vunpack.c.l.b16 %v364
    %v855 = vunpack.c.h.b16 %v364
    %v856 = vunpack.c.l.b16 %v365
    %v857 = vunpack.c.h.b16 %v365
    %v858 = vunpack.c.l.b16 %v366
    %v859 = vunpack.c.h.b16 %v366
    %v860 = vunpack.c.l.b16 %v367
    %v861 = vunpack.c.h.b16 %v367
    %v862 = vunpack.c.l.b16 %v368
    %v863 = vunpack.c.h.b16 %v368
    %v864 = vunpack.c.l.b16 %v369
    %v865 = vunpack.c.h.b16 %v369
    %v866 = vunpack.c.l.b16 %v370
    %v867 = vunpack.c.h.b16 %v370
    %v868 = vunpack.c.l.b16 %v371
    %v869 = vunpack.c.h.b16 %v371
    %v870 = vunpack.c.l.b16 %v372
    %v871 = vunpack.c.h.b16 %v372
    %v872 = vunpack.c.l.b16 %v373
    %v873 = vunpack.c.h.b16 %v373
    %v874 = vunpack.c.l.b16 %v374
    %v875 = vunpack.c.h.b16 %v374
    %v876 = vunpack.c.l.b16 %v375
    %v877 = vunpack.c.h.b16 %v375
    %v878 = vunpack.c.l.b16 %v376
    %v879 = vunpack.c.h.b16 %v376
    %v880 = vunpack.c.l.b16 %v377
    %v881 = vunpack.c.h.b16 %v377
    %v882 = vunpack.c.l.b16 %v378
    %v883 = vunpack.c.h.b16 %v378
    %v884 = vunpack.c.l.b16 %v379
    %v885 = vunpack.c.h.b16 %v379
    %v886 = vunpack.c.l.b16 %v380
    %v887 = vunpack.c.h.b16 %v380
    %v888 = vunpack.c.l.b16 %v381
    %v889 = vunpack.c.h.b16 %v381
    %v890 = vunpack.c.l.b16 %v382
    %v891 = vunpack.c.h.b16 %v382
    %v892 = vunpack.c.l.b16 %v383
    %v893 = vunpack.c.h.b16 %v383
    %v894 = vunpack.c.l.b16 %v384
    %v895 = vunpack.c.h.b16 %v384
    %v896 = vunpack.c.l.b16 %v385
    %v897 = vunpack.c.h.b16 %v385
    %v898 = vunpack.c.l.b16 %v386
    %v899 = vunpack.c.h.b16 %v386
    %v900 = vunpack.c.l.b16 %v387
    %v901 = vunpack.c.h.b16 %v387
    %v902 = vunpack.c.l.b16 %v388
    %v903 = vunpack.c.h.b16 %v388
    %v904 = vunpack.c.l.b16 %v389
    %v905 = vunpack.c.h.b16 %v389
    %v906 = vunpack.c.l.b16 %v390
    %v907 = vunpack.c.h.b16 %v390
    %v908 = vunpack.c.l.b16 %v391
    %v909 = vunpack.c.h.b16 %v391
    %v910 = vunpack.c.l.b16 %v392
    %v911 = vunpack.c.h.b16 %v392
    %v912 = vunpack.c.l.b16 %v393
    %v913 = vunpack.c.h.b16 %v393
    %v914 = vunpack.c.l.b16 %v394
    %v915 = vunpack.c.h.b16 %v394
    %v916 = vunpack.c.l.b16 %v395
    %v917 = vunpack.c.h.b16 %v395
    %v918 = vunpack.c.l.b16 %v396
    %v919 = vunpack.c.h.b16 %v396
    %v920 = vunpack.c.l.b16 %v397
    %v921 = vunpack.c.h.b16 %v397
    %v922 = vunpack.c.l.b16 %v398
    %v923 = vunpack.c.h.b16 %v398
    %v924 = vunpack.c.l.b16 %v399
    %v925 = vunpack.c.h.b16 %v399
    %v926 = vunpack.c.l.b16 %v400
    %v927 = vunpack.c.h.b16 %v400
    %v928 = vunpack.c.l.b16 %v401
    %v929 = vunpack.c.h.b16 %v401
    %v930 = vunpack.c.l.b16 %v402
    %v931 = vunpack.c.h.b16 %v402
    %v932 = vunpack.c.l.b16 %v403
    %v933 = vunpack.c.h.b16 %v403
    %v934 = vunpack.c.l.b16 %v404
    %v935 = vunpack.c.h.b16 %v404
    %v936 = vunpack.c.l.b16 %v405
    %v937 = vunpack.c.h.b16 %v405
    %v938 = vunpack.c.l.b16 %v406
    %v939 = vunpack.c.h.b16 %v406
    %v940 = vunpack.c.l.b16 %v407
    %v941 = vunpack.c.h.b16 %v407
    %v942 = vunpack.c.l.b16 %v408
    %v943 = vunpack.c.h.b16 %v408
    %v944 = vunpack.c.l.b16 %v409
    %v945 = vunpack.c.h.b16 %v409
    %v946 = vunpack.c.l.b16 %v410
    %v947 = vunpack.c.h.b16 %v410
    %v948 = vunpack.c.l.b16 %v411
    %v949 = vunpack.c.h.b16 %v411
    %v950 = vunpack.c.l.b16 %v412
    %v951 = vunpack.c.h.b16 %v412
    %v952 = vunpack.c.l.b16 %v413
    %v953 = vunpack.c.h.b16 %v413
    %v954 = vunpack.c.l.b16 %v414
    %v955 = vunpack.c.h.b16 %v414
    %v956 = vunpack.c.l.b16 %v415
    %v957 = vunpack.c.h.b16 %v415
    %v958 = vunpack.c.l.b16 %v416
    %v959 = vunpack.c.h.b16 %v416
    %v960 = vunpack.c.l.b16 %v417
    %v961 = vunpack.c.h.b16 %v417
    %v962 = vunpack.c.l.b16 %v418
    %v963 = vunpack.c.h.b16 %v418
    %v964 = vunpack.c.l.b16 %v419
    %v965 = vunpack.c.h.b16 %v419
    %v966 = vunpack.c.l.b16 %v420
    %v967 = vunpack.c.h.b16 %v420
    %v968 = vunpack.c.l.b16 %v421
    %v969 = vunpack.c.h.b16 %v421
    %v970 = vunpack.c.l.b16 %v422
    %v971 = vunpack.c.h.b16 %v422
    %v972 = vunpack.c.l.b16 %v423
    %v973 = vunpack.c.h.b16 %v423
    %v974 = vunpack.c.l.b16 %v424
    %v975 = vunpack.c.h.b16 %v424
    %v976 = vunpack.c.l.b16 %v425
    %v977 = vunpack.c.h.b16 %v425
    %v978 = vunpack.c.l.b16 %v426
    %v979 = vunpack.c.h.b16 %v426
    %v980 = vunpack.c.l.b16 %v427
    %v981 = vunpack.c.h.b16 %v427
    %v982 = vunpack.c.l.b16 %v428
    %v983 = vunpack.c.h.b16 %v428
    %v984 = vunpack.c.l.b16 %v429
    %v985 = vunpack.c.h.b16 %v429
    %v986 = vunpack.c.l.b16 %v430
    %v987 = vunpack.c.h.b16 %v430
    %v988 = vunpack.c.l.b16 %v431
    %v989 = vunpack.c.h.b16 %v431
    %v990 = vunpack.c.l.b16 %v432
    %v991 = vunpack.c.h.b16 %v432
    %v992 = vunpack.c.l.b16 %v433
    %v993 = vunpack.c.h.b16 %v433
    %v994 = vunpack.c.l.b16 %v434
    %v995 = vunpack.c.h.b16 %v434
    %v996 = vunpack.c.l.b16 %v435
    %v997 = vunpack.c.h.b16 %v435
    %v998 = vunpack.c.l.b16 %v436
    %v999 = vunpack.c.h.b16 %v436
    %v1000 = vunpack.c.l.b16 %v437
    %v1001 = vunpack.c.h.b16 %v437
    %v1002 = vunpack.c.l.b16 %v438
    %v1003 = vunpack.c.h.b16 %v438
    %v1004 = vunpack.c.l.b16 %v439
    %v1005 = vunpack.c.h.b16 %v439
    %v1006 = vunpack.c.l.b16 %v440
    %v1007 = vunpack.c.h.b16 %v440
    %v1008 = vunpack.c.l.b16 %v441
    %v1009 = vunpack.c.h.b16 %v441
    %v1010 = vunpack.c.l.b16 %v442
    %v1011 = vunpack.c.h.b16 %v442
    %v1012 = vunpack.c.l.b16 %v443
    %v1013 = vunpack.c.h.b16 %v443
    %v1014 = vunpack.c.l.b16 %v444
    %v1015 = vunpack.c.h.b16 %v444
    %v1016 = vunpack.c.l.b16 %v445
    %v1017 = vunpack.c.h.b16 %v445
    %v1018 = vunpack.c.l.b16 %v446
    %v1019 = vunpack.c.h.b16 %v446
    %v1020 = vunpack.c.l.b16 %v447
    %v1021 = vunpack.c.h.b16 %v447
    %v1022 = vunpack.c.l.b16 %v448
    %v1023 = vunpack.c.h.b16 %v448
    %v1024 = vunpack.c.l.b16 %v449
    %v1025 = vunpack.c.h.b16 %v449
    %v1026 = vunpack.c.l.b16 %v450
    %v1027 = vunpack.c.h.b16 %v450
    %v1028 = vunpack.c.l.b16 %v451
    %v1029 = vunpack.c.h.b16 %v451
    %v1030 = vunpack.c.l.b16 %v452
    %v1031 = vunpack.c.h.b16 %v452
    %v1032 = vunpack.c.l.b16 %v453
    %v1033 = vunpack.c.h.b16 %v453
    %v1034 = vunpack.c.l.b16 %v454
    %v1035 = vunpack.c.h.b16 %v454
    %v1036 = vunpack.c.l.b16 %v455
    %v1037 = vunpack.c.h.b16 %v455
    %v1038 = vunpack.c.l.b16 %v456
    %v1039 = vunpack.c.h.b16 %v456
    %v1040 = vunpack.c.l.b16 %v457
    %v1041 = vunpack.c.h.b16 %v457
    %v1042 = vunpack.c.l.b16 %v458
    %v1043 = vunpack.c.h.b16 %v458
    %v1044 = vunpack.c.l.b16 %v459
    %v1045 = vunpack.c.h.b16 %v459
    %v1046 = vunpack.c.l.b16 %v460
    %v1047 = vunpack.c.h.b16 %v460
    %v1048 = vunpack.c.l.b16 %v461
    %v1049 = vunpack.c.h.b16 %v461
    %v1050 = vunpack.c.l.b16 %v462
    %v1051 = vunpack.c.h.b16 %v462
    %v1052 = vunpack.c.l.b16 %v463
    %v1053 = vunpack.c.h.b16 %v463
    %v1054 = vunpack.c.l.b16 %v464
    %v1055 = vunpack.c.h.b16 %v464
    %v1056 = vunpack.c.l.b16 %v465
    %v1057 = vunpack.c.h.b16 %v465
    %v1058 = vunpack.c.l.b16 %v466
    %v1059 = vunpack.c.h.b16 %v466
    %v1060 = vunpack.c.l.b16 %v467
    %v1061 = vunpack.c.h.b16 %v467
    %v1062 = vunpack.c.l.b16 %v468
    %v1063 = vunpack.c.h.b16 %v468
    %v1064 = vunpack.c.l.b16 %v469
    %v1065 = vunpack.c.h.b16 %v469
    %v1066 = vunpack.c.l.b16 %v470
    %v1067 = vunpack.c.h.b16 %v470
    %v1068 = vunpack.c.l.b16 %v471
    %v1069 = vunpack.c.h.b16 %v471
    %v1070 = vunpack.c.l.b16 %v472
    %v1071 = vunpack.c.h.b16 %v472
    %v1072 = vunpack.c.l.b16 %v473
    %v1073 = vunpack.c.h.b16 %v473
    %v1074 = vunpack.c.l.b16 %v474
    %v1075 = vunpack.c.h.b16 %v474
    %v1076 = vunpack.c.l.b16 %v475
    %v1077 = vunpack.c.h.b16 %v475
    %v1078 = vunpack.c.l.b16 %v476
    %v1079 = vunpack.c.h.b16 %v476
    %v1080 = vunpack.c.l.b16 %v477
    %v1081 = vunpack.c.h.b16 %v477
    %v1082 = vunpack.c.l.b16 %v478
    %v1083 = vunpack.c.h.b16 %v478
    %v1084 = vunpack.c.l.b16 %v479
    %v1085 = vunpack.c.h.b16 %v479
    %v1086 = vunpack.c.l.b16 %v480
    %v1087 = vunpack.c.h.b16 %v480
    %v1088 = vunpack.c.l.b16 %v481
    %v1089 = vunpack.c.h.b16 %v481
    %v1090 = vunpack.c.l.b16 %v482
    %v1091 = vunpack.c.h.b16 %v482
    %v1092 = vunpack.c.l.b16 %v483
    %v1093 = vunpack.c.h.b16 %v483
    %v1094 = vpack.c.b16 %v706, %v702
    %v1095 = vpack.c.b16 %v707, %v703
    %v1096 = vpack.c.b16 %v708, %v704
    %v1097 = vpack.c.b16 %v709, %v705
    %v1098 = vpack.c.b16 %v714, %v710
    %v1099 = vpack.c.b16 %v715, %v711
    %v1100 = vpack.c.b16 %v716, %v712
    %v1101 = vpack.c.b16 %v717, %v713
    %v1102 = vpack.c.b16 %v722, %v718
    %v1103 = vpack.c.b16 %v723, %v719
    %v1104 = vpack.c.b16 %v724, %v720
    %v1105 = vpack.c.b16 %v725, %v721
    %v1106 = vpack.c.b16 %v730, %v726
    %v1107 = vpack.c.b16 %v731, %v727
    %v1108 = vpack.c.b16 %v732, %v728
    %v1109 = vpack.c.b16 %v733, %v729
    %v1110 = vpack.c.b16 %v738, %v734
    %v1111 = vpack.c.b16 %v739, %v735
    %v1112 = vpack.c.b16 %v740, %v736
    %v1113 = vpack.c.b16 %v741, %v737
    %v1114 = vpack.c.b16 %v746, %v742
    %v1115 = vpack.c.b16 %v747, %v743
    %v1116 = vpack.c.b16 %v748, %v744
    %v1117 = vpack.c.b16 %v749, %v745
    %v1118 = vpack.c.b16 %v754, %v750
    %v1119 = vpack.c.b16 %v755, %v751
    %v1120 = vpack.c.b16 %v756, %v752
    %v1121 = vpack.c.b16 %v757, %v753
    %v1122 = vpack.c.b16 %v762, %v758
    %v1123 = vpack.c.b16 %v763, %v759
    %v1124 = vpack.c.b16 %v764, %v760
    %v1125 = vpack.c.b16 %v765, %v761
    %v1126 = vpack.c.b16 %v770, %v766
    %v1127 = vpack.c.b16 %v771, %v767
    %v1128 = vpack.c.b16 %v772, %v768
    %v1129 = vpack.c.b16 %v773, %v769
    %v1130 = vpack.c.b16 %v778, %v774
    %v1131 = vpack.c.b16 %v779, %v775
    %v1132 = vpack.c.b16 %v780, %v776
    %v1133 = vpack.c.b16 %v781, %v777
    %v1134 = vpack.c.b16 %v786, %v782
    %v1135 = vpack.c.b16 %v787, %v783
    %v1136 = vpack.c.b16 %v788, %v784
    %v1137 = vpack.c.b16 %v789, %v785
    %v1138 = vpack.c.b16 %v794, %v790
    %v1139 = vpack.c.b16 %v795, %v791
    %v1140 = vpack.c.b16 %v796, %v792
    %v1141 = vpack.c.b16 %v797, %v793
    %v1142 = vpack.c.b16 %v802, %v798
    %v1143 = vpack.c.b16 %v803, %v799
    %v1144 = vpack.c.b16 %v804, %v800
    %v1145 = vpack.c.b16 %v805, %v801
    %v1146 = vpack.c.b16 %v810, %v806
    %v1147 = vpack.c.b16 %v811, %v807
    %v1148 = vpack.c.b16 %v812, %v808
    %v1149 = vpack.c.b16 %v813, %v809
    %v1150 = vpack.c.b16 %v818, %v814
    %v1151 = vpack.c.b16 %v819, %v815
    %v1152 = vpack.c.b16 %v820, %v816
    %v1153 = vpack.c.b16 %v821, %v817
    %v1154 = vpack.c.b16 %v826, %v822
    %v1155 = vpack.c.b16 %v827, %v823
    %v1156 = vpack.c.b16 %v828, %v824
    %v1157 = vpack.c.b16 %v829, %v825
    %v1158 = vpack.c.b16 %v834, %v830
    %v1159 = vpack.c.b16 %v835, %v831
    %v1160 = vpack.c.b16 %v836, %v832
    %v1161 = vpack.c.b16 %v837, %v833
    %v1162 = vpack.c.b16 %v842, %v838
    %v1163 = vpack.c.b16 %v843, %v839
    %v1164 = vpack.c.b16 %v844, %v840
    %v1165 = vpack.c.b16 %v845, %v841
    %v1166 = vpack.c.b16 %v850, %v846
    %v1167 = vpack.c.b16 %v851, %v847
    %v1168 = vpack.c.b16 %v852, %v848
    %v1169 = vpack.c.b16 %v853, %v849
    %v1170 = vpack.c.b16 %v858, %v854
    %v1171 = vpack.c.b16 %v859, %v855
    %v1172 = vpack.c.b16 %v860, %v856
    %v1173 = vpack.c.b16 %v861, %v857
    %v1174 = vpack.c.b16 %v866, %v862
    %v1175 = vpack.c.b16 %v867, %v863
    %v1176 = vpack.c.b16 %v868, %v864
    %v1177 = vpack.c.b16 %v869, %v865
    %v1178 = vpack.c.b16 %v874, %v870
    %v1179 = vpack.c.b16 %v875, %v871
    %v1180 = vpack.c.b16 %v876, %v872
    %v1181 = vpack.c.b16 %v877, %v873
    %v1182 = vpack.c.b16 %v882, %v878
    %v1183 = vpack.c.b16 %v883, %v879
    %v1184 = vpack.c.b16 %v884, %v880
    %v1185 = vpack.c.b16 %v885, %v881
    %v1186 = vpack.c.b16 %v890, %v886
    %v1187 = vpack.c.b16 %v891, %v887
    %v1188 = vpack.c.b16 %v892, %v888
    %v1189 = vpack.c.b16 %v893, %v889
    %v1190 = vpack.c.b16 %v898, %v894
    %v1191 = vpack.c.b16 %v899, %v895
    %v1192 = vpack.c.b16 %v900, %v896
    %v1193 = vpack.c.b16 %v901, %v897
    %v1194 = vpack.c.b16 %v906, %v902
    %v1195 = vpack.c.b16 %v907, %v903
    %v1196 = vpack.c.b16 %v908, %v904
    %v1197 = vpack.c.b16 %v909, %v905
    %v1198 = vpack.c.b16 %v914, %v910
    %v1199 = vpack.c.b16 %v915, %v911
    %v1200 = vpack.c.b16 %v916, %v912
    %v1201 = vpack.c.b16 %v917, %v913
    %v1202 = vpack.c.b16 %v922, %v918
    %v1203 = vpack.c.b16 %v923, %v919
    %v1204 = vpack.c.b16 %v924, %v920
    %v1205 = vpack.c.b16 %v925, %v921
    %v1206 = vpack.c.b16 %v930, %v926
    %v1207 = vpack.c.b16 %v931, %v927
    %v1208 = vpack.c.b16 %v932, %v928
    %v1209 = vpack.c.b16 %v933, %v929
    %v1210 = vpack.c.b16 %v938, %v934
    %v1211 = vpack.c.b16 %v939, %v935
    %v1212 = vpack.c.b16 %v940, %v936
    %v1213 = vpack.c.b16 %v941, %v937
    %v1214 = vpack.c.b16 %v946, %v942
    %v1215 = vpack.c.b16 %v947, %v943
    %v1216 = vpack.c.b16 %v948, %v944
    %v1217 = vpack.c.b16 %v949, %v945
    %v1218 = vpack.c.b16 %v954, %v950
    %v1219 = vpack.c.b16 %v955, %v951
    %v1220 = vpack.c.b16 %v956, %v952
    %v1221 = vpack.c.b16 %v957, %v953
    %v1222 = vpack.c.b16 %v962, %v958
    %v1223 = vpack.c.b16 %v963, %v959
    %v1224 = vpack.c.b16 %v964, %v960
    %v1225 = vpack.c.b16 %v965, %v961
    %v1226 = vpack.c.b16 %v970, %v966
    %v1227 = vpack.c.b16 %v971, %v967
    %v1228 = vpack.c.b16 %v972, %v968
    %v1229 = vpack.c.b16 %v973, %v969
    %v1230 = vpack.c.b16 %v978, %v974
    %v1231 = vpack.c.b16 %v979, %v975
    %v1232 = vpack.c.b16 %v980, %v976
    %v1233 = vpack.c.b16 %v981, %v977
    %v1234 = vpack.c.b16 %v986, %v982
    %v1235 = vpack.c.b16 %v987, %v983
    %v1236 = vpack.c.b16 %v988, %v984
    %v1237 = vpack.c.b16 %v989, %v985
    %v1238 = vpack.c.b16 %v994, %v990
    %v1239 = vpack.c.b16 %v995, %v991
    %v1240 = vpack.c.b16 %v996, %v992
    %v1241 = vpack.c.b16 %v997, %v993
    %v1242 = vpack.c.b16 %v1002, %v998
    %v1243 = vpack.c.b16 %v1003, %v999
    %v1244 = vpack.c.b16 %v1004, %v1000
    %v1245 = vpack.c.b16 %v1005, %v1001
    %v1246 = vpack.c.b16 %v1010, %v1006
    %v1247 = vpack.c.b16 %v1011, %v1007
    %v1248 = vpack.c.b16 %v1012, %v1008
    %v1249 = vpack.c.b16 %v1013, %v1009
    %v1250 = vpack.c.b16 %v1018, %v1014
    %v1251 = vpack.c.b16 %v1019, %v1015
    %v1252 = vpack.c.b16 %v1020, %v1016
    %v1253 = vpack.c.b16 %v1021, %v1017
    %v1254 = vpack.c.b16 %v1026, %v1022
    %v1255 = vpack.c.b16 %v1027, %v1023
    %v1256 = vpack.c.b16 %v1028, %v1024
    %v1257 = vpack.c.b16 %v1029, %v1025
    %v1258 = vpack.c.b16 %v1034, %v1030
    %v1259 = vpack.c.b16 %v1035, %v1031
    %v1260 = vpack.c.b16 %v1036, %v1032
    %v1261 = vpack.c.b16 %v1037, %v1033
    %v1262 = vpack.c.b16 %v1042, %v1038
    %v1263 = vpack.c.b16 %v1043, %v1039
    %v1264 = vpack.c.b16 %v1044, %v1040
    %v1265 = vpack.c.b16 %v1045, %v1041
    %v1266 = vpack.c.b16 %v1050, %v1046
    %v1267 = vpack.c.b16 %v1051, %v1047
    %v1268 = vpack.c.b16 %v1052, %v1048
    %v1269 = vpack.c.b16 %v1053, %v1049
    %v1270 = vpack.c.b16 %v1058, %v1054
    %v1271 = vpack.c.b16 %v1059, %v1055
    %v1272 = vpack.c.b16 %v1060, %v1056
    %v1273 = vpack.c.b16 %v1061, %v1057
    %v1274 = vpack.c.b16 %v1066, %v1062
    %v1275 = vpack.c.b16 %v1067, %v1063
    %v1276 = vpack.c.b16 %v1068, %v1064
    %v1277 = vpack.c.b16 %v1069, %v1065
    %v1278 = vpack.c.b16 %v1074, %v1070
    %v1279 = vpack.c.b16 %v1075, %v1071
    %v1280 = vpack.c.b16 %v1076, %v1072
    %v1281 = vpack.c.b16 %v1077, %v1073
    %v1282 = vpack.c.b16 %v1082, %v1078
    %v1283 = vpack.c.b16 %v1083, %v1079
    %v1284 = vpack.c.b16 %v1084, %v1080
    %v1285 = vpack.c.b16 %v1085, %v1081
    %v1286 = vpack.c.b16 %v1090, %v1086
    %v1287 = vpack.c.b16 %v1091, %v1087
    %v1288 = vpack.c.b16 %v1092, %v1088
    %v1289 = vpack.c.b16 %v1093, %v1089
    %vm1486 = vcmask 130048
    %v1488 = vsel %vm1486, %v287, 0
    %1490 = vmatprep.subr.bf16.mxu0 %v1095
    %1491 = vmatpush1.bf16.msra.mxu0 %v1094
    %1492 = vmatprep.subr.bf16.mxu0 %v1099
    %1493 = vmatpush1.bf16.msra.mxu0 %v1098
    %1494 = vmatprep.subr.bf16.mxu0 %v1103
    %1495 = vmatpush1.bf16.msra.mxu0 %v1102
    %1496 = vmatprep.subr.bf16.mxu0 %v1107
    %1497 = vmatpush1.bf16.msra.mxu0 %v1106
    %1498 = vmatprep.subr.bf16.mxu0 %v1111
    %1499 = vmatpush1.bf16.msra.mxu0 %v1110
    %1500 = vmatprep.subr.bf16.mxu0 %v1115
    %1501 = vmatpush1.bf16.msra.mxu0 %v1114
    %1502 = vmatprep.subr.bf16.mxu0 %v1119
    %1503 = vmatpush1.bf16.msra.mxu0 %v1118
    %1504 = vmatprep.subr.bf16.mxu0 %v1123
    %1505 = vmatpush1.bf16.msra.mxu0 %v1122
    %1506 = vmatprep.subr.bf16.mxu0 %v1127
    %1507 = vmatpush1.bf16.msra.mxu0 %v1126
    %1508 = vmatprep.subr.bf16.mxu0 %v1131
    %1509 = vmatpush1.bf16.msra.mxu0 %v1130
    %1510 = vmatprep.subr.bf16.mxu0 %v1135
    %1511 = vmatpush1.bf16.msra.mxu0 %v1134
    %1512 = vmatprep.subr.bf16.mxu0 %v1139
    %1513 = vmatpush1.bf16.msra.mxu0 %v1138
    %1514 = vmatprep.subr.bf16.mxu0 %v1143
    %1515 = vmatpush1.bf16.msra.mxu0 %v1142
    %1516 = vmatprep.subr.bf16.mxu0 %v1147
    %1517 = vmatpush1.bf16.msra.mxu0 %v1146
    %1518 = vmatprep.subr.bf16.mxu0 %v1151
    %1519 = vmatpush1.bf16.msra.mxu0 %v1150
    %1520 = vmatprep.subr.bf16.mxu0 %v1155
    %1521 = vmatpush1.bf16.msra.mxu0 %v1154
    %1522 = vmatprep.mubr.bf16.mxu0 %v282
    %1523 = vmatmul.mubr.bf16.gmra.mrb[0].mxu0 %v281
    %v1524 = vpop.f32.mrb[0].mxu0
    %v1525 = vadd.f32 %v489, %v1524
    %v1526 = vpop.f32.mrb[0].mxu0
    %v1527 = vadd.f32 %v493, %v1526
    %v1528 = vpop.f32.mrb[0].mxu0
    %v1529 = vadd.f32 %v489, %v1528
    %v1530 = vpop.f32.mrb[0].mxu0
    %v1531 = vadd.f32 %v493, %v1530
    %1532 = vdwg.mxu0
    %1533 = vmatprep.subr.bf16.mxu0 %v1159
    %1534 = vmatpush1.bf16.msra.mxu0 %v1158
    %1535 = vmatprep.subr.bf16.mxu0 %v1163
    %1536 = vmatpush1.bf16.msra.mxu0 %v1162
    %1537 = vmatprep.subr.bf16.mxu0 %v1167
    %1538 = vmatpush1.bf16.msra.mxu0 %v1166
    %1539 = vmatprep.subr.bf16.mxu0 %v1171
    %1540 = vmatpush1.bf16.msra.mxu0 %v1170
    %1541 = vmatprep.subr.bf16.mxu0 %v1175
    %1542 = vmatpush1.bf16.msra.mxu0 %v1174
    %1543 = vmatprep.subr.bf16.mxu0 %v1179
    %1544 = vmatpush1.bf16.msra.mxu0 %v1178
    %1545 = vmatprep.subr.bf16.mxu0 %v1183
    %1546 = vmatpush1.bf16.msra.mxu0 %v1182
    %1547 = vmatprep.subr.bf16.mxu0 %v1187
    %1548 = vmatpush1.bf16.msra.mxu0 %v1186
    %1549 = vmatprep.subr.bf16.mxu0 %v1191
    %1550 = vmatpush1.bf16.msra.mxu0 %v1190
    %1551 = vmatprep.subr.bf16.mxu0 %v1195
    %1552 = vmatpush1.bf16.msra.mxu0 %v1194
    %1553 = vmatprep.subr.bf16.mxu0 %v1199
    %1554 = vmatpush1.bf16.msra.mxu0 %v1198
    %1555 = vmatprep.subr.bf16.mxu0 %v1203
    %1556 = vmatpush1.bf16.msra.mxu0 %v1202
    %1557 = vmatprep.subr.bf16.mxu0 %v1207
    %1558 = vmatpush1.bf16.msra.mxu0 %v1206
    %1559 = vmatprep.subr.bf16.mxu0 %v1211
    %1560 = vmatpush1.bf16.msra.mxu0 %v1210
    %1561 = vmatprep.subr.bf16.mxu0 %v1215
    %1562 = vmatpush1.bf16.msra.mxu0 %v1214
    %1563 = vmatprep.subr.bf16.mxu0 %v1219
    %1564 = vmatpush1.bf16.msra.mxu0 %v1218
    %1565 = vmatprep.mubr.bf16.mxu0 %v284
    %1566 = vmatmul.mubr.bf16.gmra.mrb[0].mxu0 %v283
    %v1567 = vpop.f32.mrb[0].mxu0
    %v1568 = vadd.f32 %v1525, %v1567
    %v1569 = vpop.f32.mrb[0].mxu0
    %v1570 = vadd.f32 %v1527, %v1569
    %v1571 = vpop.f32.mrb[0].mxu0
    %v1572 = vadd.f32 %v1529, %v1571
    %v1573 = vpop.f32.mrb[0].mxu0
    %v1574 = vadd.f32 %v1531, %v1573
    %1575 = vdwg.mxu0
    %1576 = vmatprep.subr.bf16.mxu0 %v1223
    %1577 = vmatpush1.bf16.msra.mxu0 %v1222
    %1578 = vmatprep.subr.bf16.mxu0 %v1227
    %1579 = vmatpush1.bf16.msra.mxu0 %v1226
    %1580 = vmatprep.subr.bf16.mxu0 %v1231
    %1581 = vmatpush1.bf16.msra.mxu0 %v1230
    %1582 = vmatprep.subr.bf16.mxu0 %v1235
    %1583 = vmatpush1.bf16.msra.mxu0 %v1234
    %1584 = vmatprep.subr.bf16.mxu0 %v1239
    %1585 = vmatpush1.bf16.msra.mxu0 %v1238
    %1586 = vmatprep.subr.bf16.mxu0 %v1243
    %1587 = vmatpush1.bf16.msra.mxu0 %v1242
    %1588 = vmatprep.subr.bf16.mxu0 %v1247
    %1589 = vmatpush1.bf16.msra.mxu0 %v1246
    %1590 = vmatprep.subr.bf16.mxu0 %v1251
    %1591 = vmatpush1.bf16.msra.mxu0 %v1250
    %1592 = vmatprep.subr.bf16.mxu0 %v1255
    %1593 = vmatpush1.bf16.msra.mxu0 %v1254
    %1594 = vmatprep.subr.bf16.mxu0 %v1259
    %1595 = vmatpush1.bf16.msra.mxu0 %v1258
    %1596 = vmatprep.subr.bf16.mxu0 %v1263
    %1597 = vmatpush1.bf16.msra.mxu0 %v1262
    %1598 = vmatprep.subr.bf16.mxu0 %v1267
    %1599 = vmatpush1.bf16.msra.mxu0 %v1266
    %1600 = vmatprep.subr.bf16.mxu0 %v1271
    %1601 = vmatpush1.bf16.msra.mxu0 %v1270
    %1602 = vmatprep.subr.bf16.mxu0 %v1275
    %1603 = vmatpush1.bf16.msra.mxu0 %v1274
    %1604 = vmatprep.subr.bf16.mxu0 %v1279
    %1605 = vmatpush1.bf16.msra.mxu0 %v1278
    %1606 = vmatprep.subr.bf16.mxu0 %v1283
    %1607 = vmatpush1.bf16.msra.mxu0 %v1282
    %1608 = vmatprep.mubr.bf16.mxu0 %v286
    %1609 = vmatmul.mubr.bf16.gmra.mrb[0].mxu0 %v285
    %v1610 = vpop.f32.mrb[0].mxu0
    %v1611 = vadd.f32 %v1568, %v1610
    %v1612 = vpop.f32.mrb[0].mxu0
    %v1613 = vadd.f32 %v1570, %v1612
    %v1614 = vpop.f32.mrb[0].mxu0
    %v1615 = vadd.f32 %v1572, %v1614
    %v1616 = vpop.f32.mrb[0].mxu0
    %v1617 = vadd.f32 %v1574, %v1616
    %1618 = vdwg.mxu0
    %1619 = vmatprep.subr.bf16.mxu0 %v1287
    %1620 = vmatpush1.bf16.msra.mxu0 %v1286
    %1621 = vmatprep.subr.bf16.mxu0 0
    %1622 = vmatpush1.bf16.msra.mxu0 0
    %1623 = vmatprep.subr.bf16.mxu0 0
    %1624 = vmatpush1.bf16.msra.mxu0 0
    %1625 = vmatprep.subr.bf16.mxu0 0
    %1626 = vmatpush1.bf16.msra.mxu0 0
    %1627 = vmatprep.subr.bf16.mxu0 0
    %1628 = vmatpush1.bf16.msra.mxu0 0
    %1629 = vmatprep.subr.bf16.mxu0 0
    %1630 = vmatpush1.bf16.msra.mxu0 0
    %1631 = vmatprep.subr.bf16.mxu0 0
    %1632 = vmatpush1.bf16.msra.mxu0 0
    %1633 = vmatprep.subr.bf16.mxu0 0
    %1634 = vmatpush1.bf16.msra.mxu0 0
    %1635 = vmatprep.subr.bf16.mxu0 0
    %1636 = vmatpush1.bf16.msra.mxu0 0
    %1637 = vmatprep.subr.bf16.mxu0 0
    %1638 = vmatpush1.bf16.msra.mxu0 0
    %1639 = vmatprep.subr.bf16.mxu0 0
    %1640 = vmatpush1.bf16.msra.mxu0 0
    %1641 = vmatprep.subr.bf16.mxu0 0
    %1642 = vmatpush1.bf16.msra.mxu0 0
    %1643 = vmatprep.subr.bf16.mxu0 0
    %1644 = vmatpush1.bf16.msra.mxu0 0
    %1645 = vmatprep.subr.bf16.mxu0 0
    %1646 = vmatpush1.bf16.msra.mxu0 0
    %1647 = vmatprep.subr.bf16.mxu0 0
    %1648 = vmatpush1.bf16.msra.mxu0 0
    %1649 = vmatprep.subr.bf16.mxu0 0
    %1650 = vmatpush1.bf16.msra.mxu0 0
    %1651 = vmatprep.mubr.bf16.mxu0 0
    %1652 = vmatmul.mubr.bf16.gmra.mrb[0].mxu0 %v1488
    %v1653 = vpop.f32.mrb[0].mxu0
    %v1654 = vadd.f32 %v1611, %v1653
    %v1655 = vpop.f32.mrb[0].mxu0
    %v1656 = vadd.f32 %v1613, %v1655
    %v1657 = vpop.f32.mrb[0].mxu0
    %v1658 = vadd.f32 %v1615, %v1657
    %v1659 = vpop.f32.mrb[0].mxu0
    %v1660 = vadd.f32 %v1617, %v1659
    %1661 = vdwg.mxu0
    %1662 = vmatprep.subr.bf16.mxu0 %v1097
    %1663 = vmatpush1.bf16.msra.mxu0 %v1096
    %1664 = vmatprep.subr.bf16.mxu0 %v1101
    %1665 = vmatpush1.bf16.msra.mxu0 %v1100
    %1666 = vmatprep.subr.bf16.mxu0 %v1105
    %1667 = vmatpush1.bf16.msra.mxu0 %v1104
    %1668 = vmatprep.subr.bf16.mxu0 %v1109
    %1669 = vmatpush1.bf16.msra.mxu0 %v1108
    %1670 = vmatprep.subr.bf16.mxu0 %v1113
    %1671 = vmatpush1.bf16.msra.mxu0 %v1112
    %1672 = vmatprep.subr.bf16.mxu0 %v1117
    %1673 = vmatpush1.bf16.msra.mxu0 %v1116
    %1674 = vmatprep.subr.bf16.mxu0 %v1121
    %1675 = vmatpush1.bf16.msra.mxu0 %v1120
    %1676 = vmatprep.subr.bf16.mxu0 %v1125
    %1677 = vmatpush1.bf16.msra.mxu0 %v1124
    %1678 = vmatprep.subr.bf16.mxu0 %v1129
    %1679 = vmatpush1.bf16.msra.mxu0 %v1128
    %1680 = vmatprep.subr.bf16.mxu0 %v1133
    %1681 = vmatpush1.bf16.msra.mxu0 %v1132
    %1682 = vmatprep.subr.bf16.mxu0 %v1137
    %1683 = vmatpush1.bf16.msra.mxu0 %v1136
    %1684 = vmatprep.subr.bf16.mxu0 %v1141
    %1685 = vmatpush1.bf16.msra.mxu0 %v1140
    %1686 = vmatprep.subr.bf16.mxu0 %v1145
    %1687 = vmatpush1.bf16.msra.mxu0 %v1144
    %1688 = vmatprep.subr.bf16.mxu0 %v1149
    %1689 = vmatpush1.bf16.msra.mxu0 %v1148
    %1690 = vmatprep.subr.bf16.mxu0 %v1153
    %1691 = vmatpush1.bf16.msra.mxu0 %v1152
    %1692 = vmatprep.subr.bf16.mxu0 %v1157
    %1693 = vmatpush1.bf16.msra.mxu0 %v1156
    %1694 = vmatprep.mubr.bf16.mxu0 %v282
    %1695 = vmatmul.mubr.bf16.gmra.mrb[0].mxu0 %v281
    %v1696 = vpop.f32.mrb[0].mxu0
    %v1697 = vadd.f32 %v497, %v1696
    %v1698 = vpop.f32.mrb[0].mxu0
    %v1699 = vadd.f32 %v501, %v1698
    %v1700 = vpop.f32.mrb[0].mxu0
    %v1701 = vadd.f32 %v497, %v1700
    %v1702 = vpop.f32.mrb[0].mxu0
    %v1703 = vadd.f32 %v501, %v1702
    %1704 = vdwg.mxu0
    %1705 = vmatprep.subr.bf16.mxu0 %v1161
    %1706 = vmatpush1.bf16.msra.mxu0 %v1160
    %1707 = vmatprep.subr.bf16.mxu0 %v1165
    %1708 = vmatpush1.bf16.msra.mxu0 %v1164
    %1709 = vmatprep.subr.bf16.mxu0 %v1169
    %1710 = vmatpush1.bf16.msra.mxu0 %v1168
    %1711 = vmatprep.subr.bf16.mxu0 %v1173
    %1712 = vmatpush1.bf16.msra.mxu0 %v1172
    %1713 = vmatprep.subr.bf16.mxu0 %v1177
    %1714 = vmatpush1.bf16.msra.mxu0 %v1176
    %1715 = vmatprep.subr.bf16.mxu0 %v1181
    %1716 = vmatpush1.bf16.msra.mxu0 %v1180
    %1717 = vmatprep.subr.bf16.mxu0 %v1185
    %1718 = vmatpush1.bf16.msra.mxu0 %v1184
    %1719 = vmatprep.subr.bf16.mxu0 %v1189
    %1720 = vmatpush1.bf16.msra.mxu0 %v1188
    %1721 = vmatprep.subr.bf16.mxu0 %v1193
    %1722 = vmatpush1.bf16.msra.mxu0 %v1192
    %1723 = vmatprep.subr.bf16.mxu0 %v1197
    %1724 = vmatpush1.bf16.msra.mxu0 %v1196
    %1725 = vmatprep.subr.bf16.mxu0 %v1201
    %1726 = vmatpush1.bf16.msra.mxu0 %v1200
    %1727 = vmatprep.subr.bf16.mxu0 %v1205
    %1728 = vmatpush1.bf16.msra.mxu0 %v1204
    %1729 = vmatprep.subr.bf16.mxu0 %v1209
    %1730 = vmatpush1.bf16.msra.mxu0 %v1208
    %1731 = vmatprep.subr.bf16.mxu0 %v1213
    %1732 = vmatpush1.bf16.msra.mxu0 %v1212
    %1733 = vmatprep.subr.bf16.mxu0 %v1217
    %1734 = vmatpush1.bf16.msra.mxu0 %v1216
    %1735 = vmatprep.subr.bf16.mxu0 %v1221
    %1736 = vmatpush1.bf16.msra.mxu0 %v1220
    %1737 = vmatprep.mubr.bf16.mxu0 %v284
    %1738 = vmatmul.mubr.bf16.gmra.mrb[0].mxu0 %v283
    %v1739 = vpop.f32.mrb[0].mxu0
    %v1740 = vadd.f32 %v1697, %v1739
    %v1741 = vpop.f32.mrb[0].mxu0
    %v1742 = vadd.f32 %v1699, %v1741
    %v1743 = vpop.f32.mrb[0].mxu0
    %v1744 = vadd.f32 %v1701, %v1743
    %v1745 = vpop.f32.mrb[0].mxu0
    %v1746 = vadd.f32 %v1703, %v1745
    %1747 = vdwg.mxu0
    %1748 = vmatprep.subr.bf16.mxu0 %v1225
    %1749 = vmatpush1.bf16.msra.mxu0 %v1224
    %1750 = vmatprep.subr.bf16.mxu0 %v1229
    %1751 = vmatpush1.bf16.msra.mxu0 %v1228
    %1752 = vmatprep.subr.bf16.mxu0 %v1233
    %1753 = vmatpush1.bf16.msra.mxu0 %v1232
    %1754 = vmatprep.subr.bf16.mxu0 %v1237
    %1755 = vmatpush1.bf16.msra.mxu0 %v1236
    %1756 = vmatprep.subr.bf16.mxu0 %v1241
    %1757 = vmatpush1.bf16.msra.mxu0 %v1240
    %1758 = vmatprep.subr.bf16.mxu0 %v1245
    %1759 = vmatpush1.bf16.msra.mxu0 %v1244
    %1760 = vmatprep.subr.bf16.mxu0 %v1249
    %1761 = vmatpush1.bf16.msra.mxu0 %v1248
    %1762 = vmatprep.subr.bf16.mxu0 %v1253
    %1763 = vmatpush1.bf16.msra.mxu0 %v1252
    %1764 = vmatprep.subr.bf16.mxu0 %v1257
    %1765 = vmatpush1.bf16.msra.mxu0 %v1256
    %1766 = vmatprep.subr.bf16.mxu0 %v1261
    %1767 = vmatpush1.bf16.msra.mxu0 %v1260
    %1768 = vmatprep.subr.bf16.mxu0 %v1265
    %1769 = vmatpush1.bf16.msra.mxu0 %v1264
    %1770 = vmatprep.subr.bf16.mxu0 %v1269
    %1771 = vmatpush1.bf16.msra.mxu0 %v1268
    %1772 = vmatprep.subr.bf16.mxu0 %v1273
    %1773 = vmatpush1.bf16.msra.mxu0 %v1272
    %1774 = vmatprep.subr.bf16.mxu0 %v1277
    %1775 = vmatpush1.bf16.msra.mxu0 %v1276
    %1776 = vmatprep.subr.bf16.mxu0 %v1281
    %1777 = vmatpush1.bf16.msra.mxu0 %v1280
    %1778 = vmatprep.subr.bf16.mxu0 %v1285
    %1779 = vmatpush1.bf16.msra.mxu0 %v1284
    %1780 = vmatprep.mubr.bf16.mxu0 %v286
    %1781 = vmatmul.mubr.bf16.gmra.mrb[0].mxu0 %v285
    %v1782 = vpop.f32.mrb[0].mxu0
    %v1783 = vadd.f32 %v1740, %v1782
    %v1784 = vpop.f32.mrb[0].mxu0
    %v1785 = vadd.f32 %v1742, %v1784
    %v1786 = vpop.f32.mrb[0].mxu0
    %v1787 = vadd.f32 %v1744, %v1786
    %v1788 = vpop.f32.mrb[0].mxu0
    %v1789 = vadd.f32 %v1746, %v1788
    %1790 = vdwg.mxu0
    %1791 = vmatprep.subr.bf16.mxu0 %v1289
    %1792 = vmatpush1.bf16.msra.mxu0 %v1288
    %1793 = vmatprep.subr.bf16.mxu0 0
    %1794 = vmatpush1.bf16.msra.mxu0 0
    %1795 = vmatprep.subr.bf16.mxu0 0
    %1796 = vmatpush1.bf16.msra.mxu0 0
    %1797 = vmatprep.subr.bf16.mxu0 0
    %1798 = vmatpush1.bf16.msra.mxu0 0
    %1799 = vmatprep.subr.bf16.mxu0 0
    %1800 = vmatpush1.bf16.msra.mxu0 0
    %1801 = vmatprep.subr.bf16.mxu0 0
    %1802 = vmatpush1.bf16.msra.mxu0 0
    %1803 = vmatprep.subr.bf16.mxu0 0
    %1804 = vmatpush1.bf16.msra.mxu0 0
    %1805 = vmatprep.subr.bf16.mxu0 0
    %1806 = vmatpush1.bf16.msra.mxu0 0
    %1807 = vmatprep.subr.bf16.mxu0 0
    %1808 = vmatpush1.bf16.msra.mxu0 0
    %1809 = vmatprep.subr.bf16.mxu0 0
    %1810 = vmatpush1.bf16.msra.mxu0 0
    %1811 = vmatprep.subr.bf16.mxu0 0
    %1812 = vmatpush1.bf16.msra.mxu0 0
    %1813 = vmatprep.subr.bf16.mxu0 0
    %1814 = vmatpush1.bf16.msra.mxu0 0
    %1815 = vmatprep.subr.bf16.mxu0 0
    %1816 = vmatpush1.bf16.msra.mxu0 0
    %1817 = vmatprep.subr.bf16.mxu0 0
    %1818 = vmatpush1.bf16.msra.mxu0 0
    %1819 = vmatprep.subr.bf16.mxu0 0
    %1820 = vmatpush1.bf16.msra.mxu0 0
    %1821 = vmatprep.subr.bf16.mxu0 0
    %1822 = vmatpush1.bf16.msra.mxu0 0
    %1823 = vmatprep.mubr.bf16.mxu0 0
    %1824 = vmatmul.mubr.bf16.gmra.mrb[0].mxu0 %v1488
    %v1825 = vpop.f32.mrb[0].mxu0
    %v1826 = vadd.f32 %v1783, %v1825
    %v1827 = vpop.f32.mrb[0].mxu0
    %v1828 = vadd.f32 %v1785, %v1827
    %v1829 = vpop.f32.mrb[0].mxu0
    %v1830 = vadd.f32 %v1787, %v1829
    %v1831 = vpop.f32.mrb[0].mxu0
    %v1832 = vadd.f32 %v1789, %v1831
    %1833 = vdwg.mxu0
    %v1834 = vmax.f32 %v1654, 0.0
    %v1835 = vmax.f32 %v1656, 0.0
    %v1836 = vmax.f32 %v1826, 0.0
    %v1837 = vmax.f32 %v1828, 0.0
    %v1838 = vmax.f32 %v1658, 0.0
    %v1839 = vmax.f32 %v1660, 0.0
    %v1840 = vmax.f32 %v1830, 0.0
    %v1841 = vmax.f32 %v1832, 0.0
    %v1842 = vpack.c.bf16 %v1838, %v1834
    %v1843 = vpack.c.bf16 %v1839, %v1835
    %v1844 = vpack.c.bf16 %v1840, %v1836
    %v1845 = vpack.c.bf16 %v1841, %v1837
    %v1846 = vld [vmem:[%s4] sm:$0xff]
    %v1847 = vld [vmem:[%s4 + $0x8] sm:$0xff]
    %v1848 = vld [vmem:[%s4 + $0x10] sm:$0xff]
    %v1849 = vld [vmem:[%s4 + $0x18] sm:$0xff]
    %v1850 = vld [vmem:[%s4 + $0x20] sm:$0xff]
    %v1851 = vld [vmem:[%s4 + $0x28] sm:$0xff]
    %v1852 = vld [vmem:[%s4 + $0x30] sm:$0xff]
    %v1853 = vld [vmem:[%s4 + $0x38] sm:$0xff]
    %v1854 = vld [vmem:[%s4 + $0x40] sm:$0xff]
    %v1855 = vld [vmem:[%s4 + $0x48] sm:$0xff]
    %v1856 = vld [vmem:[%s4 + $0x50] sm:$0xff]
    %v1857 = vld [vmem:[%s4 + $0x58] sm:$0xff]
    %v1858 = vld [vmem:[%s4 + $0x60] sm:$0xff]
    %v1859 = vld [vmem:[%s4 + $0x68] sm:$0xff]
    %v1860 = vld [vmem:[%s4 + $0x70] sm:$0xff]
    %v1861 = vld [vmem:[%s4 + $0x78] sm:$0xff]
    %v1862 = vld [vmem:[%s4 + $0x80] sm:$0xff]
    %v1863 = vld [vmem:[%s4 + $0x88] sm:$0xff]
    %v1864 = vld [vmem:[%s4 + $0x90] sm:$0xff]
    %v1865 = vld [vmem:[%s4 + $0x98] sm:$0xff]
    %v1866 = vld [vmem:[%s4 + $0xa0] sm:$0xff]
    %v1867 = vld [vmem:[%s4 + $0xa8] sm:$0xff]
    %v1868 = vld [vmem:[%s4 + $0xb0] sm:$0xff]
    %v1869 = vld [vmem:[%s4 + $0xb8] sm:$0xff]
    %v1870 = vld [vmem:[%s4 + $0xc0] sm:$0xff]
    %v1871 = vld [vmem:[%s4 + $0xc8] sm:$0xff]
    %v1872 = vld [vmem:[%s4 + $0xd0] sm:$0xff]
    %v1873 = vld [vmem:[%s4 + $0xd8] sm:$0xff]
    %v1874 = vld [vmem:[%s4 + $0xe0] sm:$0xff]
    %v1875 = vld [vmem:[%s4 + $0xe8] sm:$0xff]
    %v1876 = vld [vmem:[%s4 + $0xf0] sm:$0xff]
    %v1877 = vld [vmem:[%s4 + $0xf8] sm:$0xff]
    %v1878 = vld [vmem:[%s4 + $0x100] sm:$0xff]
    %v1879 = vld [vmem:[%s4 + $0x108] sm:$0xff]
    %v1880 = vld [vmem:[%s4 + $0x110] sm:$0xff]
    %v1881 = vld [vmem:[%s4 + $0x118] sm:$0xff]
    %v1882 = vld [vmem:[%s4 + $0x120] sm:$0xff]
    %v1883 = vld [vmem:[%s4 + $0x128] sm:$0xff]
    %v1884 = vld [vmem:[%s4 + $0x130] sm:$0xff]
    %v1885 = vld [vmem:[%s4 + $0x138] sm:$0xff]
    %v1886 = vld [vmem:[%s4 + $0x140] sm:$0xff]
    %v1887 = vld [vmem:[%s4 + $0x148] sm:$0xff]
    %v1888 = vld [vmem:[%s4 + $0x150] sm:$0xff]
    %v1889 = vld [vmem:[%s4 + $0x158] sm:$0xff]
    %v1890 = vld [vmem:[%s4 + $0x160] sm:$0xff]
    %v1891 = vld [vmem:[%s4 + $0x168] sm:$0xff]
    %v1892 = vld [vmem:[%s4 + $0x170] sm:$0xff]
    %v1893 = vld [vmem:[%s4 + $0x178] sm:$0xff]
    %v1894 = vld [vmem:[%s4 + $0x180] sm:$0xff]
    %v1895 = vld [vmem:[%s4 + $0x188] sm:$0xff]
    %v1896 = vld [vmem:[%s4 + $0x190] sm:$0xff]
    %v1897 = vld [vmem:[%s4 + $0x198] sm:$0xff]
    %v1898 = vld [vmem:[%s4 + $0x1a0] sm:$0xff]
    %v1899 = vld [vmem:[%s4 + $0x1a8] sm:$0xff]
    %v1900 = vld [vmem:[%s4 + $0x1b0] sm:$0xff]
    %v1901 = vld [vmem:[%s4 + $0x1b8] sm:$0xff]
    %v1902 = vld [vmem:[%s4 + $0x1c0] sm:$0xff]
    %v1903 = vld [vmem:[%s4 + $0x1c8] sm:$0xff]
    %v1904 = vld [vmem:[%s4 + $0x1d0] sm:$0xff]
    %v1905 = vld [vmem:[%s4 + $0x1d8] sm:$0xff]
    %v1906 = vld [vmem:[%s4 + $0x1e0] sm:$0xff]
    %v1907 = vld [vmem:[%s4 + $0x1e8] sm:$0xff]
    %v1908 = vld [vmem:[%s4 + $0x1f0] sm:$0xff]
    %v1909 = vld [vmem:[%s4 + $0x1f8] sm:$0xff]
    %v1910 = vld [vmem:[%s5] sm:$0x3]
    %v1912 = vlaneseq
    %v1913 = vshrl.u32 %v1912, 7
    %v1914 = vsub.s32 0, %v1913
    %v1915 = vrot.slane %v1910, %v1914
    %v1916 = vlaneseq
    %v1917 = vshrl.u32 %v1916, 7
    %v1918 = vsub.s32 1, %v1917
    %v1919 = vrot.slane %v1910, %v1918
    %v1986 = vunpack.c.l.b16 %v1846
    %v1987 = vunpack.c.h.b16 %v1846
    %v1988 = vunpack.c.l.b16 %v1847
    %v1989 = vunpack.c.h.b16 %v1847
    %v1990 = vunpack.c.l.b16 %v1848
    %v1991 = vunpack.c.h.b16 %v1848
    %v1992 = vunpack.c.l.b16 %v1849
    %v1993 = vunpack.c.h.b16 %v1849
    %v1994 = vunpack.c.l.b16 %v1850
    %v1995 = vunpack.c.h.b16 %v1850
    %v1996 = vunpack.c.l.b16 %v1851
    %v1997 = vunpack.c.h.b16 %v1851
    %v1998 = vunpack.c.l.b16 %v1852
    %v1999 = vunpack.c.h.b16 %v1852
    %v2000 = vunpack.c.l.b16 %v1853
    %v2001 = vunpack.c.h.b16 %v1853
    %v2002 = vunpack.c.l.b16 %v1854
    %v2003 = vunpack.c.h.b16 %v1854
    %v2004 = vunpack.c.l.b16 %v1855
    %v2005 = vunpack.c.h.b16 %v1855
    %v2006 = vunpack.c.l.b16 %v1856
    %v2007 = vunpack.c.h.b16 %v1856
    %v2008 = vunpack.c.l.b16 %v1857
    %v2009 = vunpack.c.h.b16 %v1857
    %v2010 = vunpack.c.l.b16 %v1858
    %v2011 = vunpack.c.h.b16 %v1858
    %v2012 = vunpack.c.l.b16 %v1859
    %v2013 = vunpack.c.h.b16 %v1859
    %v2014 = vunpack.c.l.b16 %v1860
    %v2015 = vunpack.c.h.b16 %v1860
    %v2016 = vunpack.c.l.b16 %v1861
    %v2017 = vunpack.c.h.b16 %v1861
    %v2018 = vunpack.c.l.b16 %v1862
    %v2019 = vunpack.c.h.b16 %v1862
    %v2020 = vunpack.c.l.b16 %v1863
    %v2021 = vunpack.c.h.b16 %v1863
    %v2022 = vunpack.c.l.b16 %v1864
    %v2023 = vunpack.c.h.b16 %v1864
    %v2024 = vunpack.c.l.b16 %v1865
    %v2025 = vunpack.c.h.b16 %v1865
    %v2026 = vunpack.c.l.b16 %v1866
    %v2027 = vunpack.c.h.b16 %v1866
    %v2028 = vunpack.c.l.b16 %v1867
    %v2029 = vunpack.c.h.b16 %v1867
    %v2030 = vunpack.c.l.b16 %v1868
    %v2031 = vunpack.c.h.b16 %v1868
    %v2032 = vunpack.c.l.b16 %v1869
    %v2033 = vunpack.c.h.b16 %v1869
    %v2034 = vunpack.c.l.b16 %v1870
    %v2035 = vunpack.c.h.b16 %v1870
    %v2036 = vunpack.c.l.b16 %v1871
    %v2037 = vunpack.c.h.b16 %v1871
    %v2038 = vunpack.c.l.b16 %v1872
    %v2039 = vunpack.c.h.b16 %v1872
    %v2040 = vunpack.c.l.b16 %v1873
    %v2041 = vunpack.c.h.b16 %v1873
    %v2042 = vunpack.c.l.b16 %v1874
    %v2043 = vunpack.c.h.b16 %v1874
    %v2044 = vunpack.c.l.b16 %v1875
    %v2045 = vunpack.c.h.b16 %v1875
    %v2046 = vunpack.c.l.b16 %v1876
    %v2047 = vunpack.c.h.b16 %v1876
    %v2048 = vunpack.c.l.b16 %v1877
    %v2049 = vunpack.c.h.b16 %v1877
    %v2050 = vunpack.c.l.b16 %v1878
    %v2051 = vunpack.c.h.b16 %v1878
    %v2052 = vunpack.c.l.b16 %v1879
    %v2053 = vunpack.c.h.b16 %v1879
    %v2054 = vunpack.c.l.b16 %v1880
    %v2055 = vunpack.c.h.b16 %v1880
    %v2056 = vunpack.c.l.b16 %v1881
    %v2057 = vunpack.c.h.b16 %v1881
    %v2058 = vunpack.c.l.b16 %v1882
    %v2059 = vunpack.c.h.b16 %v1882
    %v2060 = vunpack.c.l.b16 %v1883
    %v2061 = vunpack.c.h.b16 %v1883
    %v2062 = vunpack.c.l.b16 %v1884
    %v2063 = vunpack.c.h.b16 %v1884
    %v2064 = vunpack.c.l.b16 %v1885
    %v2065 = vunpack.c.h.b16 %v1885
    %v2066 = vunpack.c.l.b16 %v1886
    %v2067 = vunpack.c.h.b16 %v1886
    %v2068 = vunpack.c.l.b16 %v1887
    %v2069 = vunpack.c.h.b16 %v1887
    %v2070 = vunpack.c.l.b16 %v1888
    %v2071 = vunpack.c.h.b16 %v1888
    %v2072 = vunpack.c.l.b16 %v1889
    %v2073 = vunpack.c.h.b16 %v1889
    %v2074 = vunpack.c.l.b16 %v1890
    %v2075 = vunpack.c.h.b16 %v1890
    %v2076 = vunpack.c.l.b16 %v1891
    %v2077 = vunpack.c.h.b16 %v1891
    %v2078 = vunpack.c.l.b16 %v1892
    %v2079 = vunpack.c.h.b16 %v1892
    %v2080 = vunpack.c.l.b16 %v1893
    %v2081 = vunpack.c.h.b16 %v1893
    %v2082 = vunpack.c.l.b16 %v1894
    %v2083 = vunpack.c.h.b16 %v1894
    %v2084 = vunpack.c.l.b16 %v1895
    %v2085 = vunpack.c.h.b16 %v1895
    %v2086 = vunpack.c.l.b16 %v1896
    %v2087 = vunpack.c.h.b16 %v1896
    %v2088 = vunpack.c.l.b16 %v1897
    %v2089 = vunpack.c.h.b16 %v1897
    %v2090 = vunpack.c.l.b16 %v1898
    %v2091 = vunpack.c.h.b16 %v1898
    %v2092 = vunpack.c.l.b16 %v1899
    %v2093 = vunpack.c.h.b16 %v1899
    %v2094 = vunpack.c.l.b16 %v1900
    %v2095 = vunpack.c.h.b16 %v1900
    %v2096 = vunpack.c.l.b16 %v1901
    %v2097 = vunpack.c.h.b16 %v1901
    %v2098 = vunpack.c.l.b16 %v1902
    %v2099 = vunpack.c.h.b16 %v1902
    %v2100 = vunpack.c.l.b16 %v1903
    %v2101 = vunpack.c.h.b16 %v1903
    %v2102 = vunpack.c.l.b16 %v1904
    %v2103 = vunpack.c.h.b16 %v1904
    %v2104 = vunpack.c.l.b16 %v1905
    %v2105 = vunpack.c.h.b16 %v1905
    %v2106 = vunpack.c.l.b16 %v1906
    %v2107 = vunpack.c.h.b16 %v1906
    %v2108 = vunpack.c.l.b16 %v1907
    %v2109 = vunpack.c.h.b16 %v1907
    %v2110 = vunpack.c.l.b16 %v1908
    %v2111 = vunpack.c.h.b16 %v1908
    %v2112 = vunpack.c.l.b16 %v1909
    %v2113 = vunpack.c.h.b16 %v1909
    %v2114 = vpack.c.b16 %v1988, %v1986
    %v2115 = vpack.c.b16 %v1989, %v1987
    %v2116 = vpack.c.b16 %v1992, %v1990
    %v2117 = vpack.c.b16 %v1993, %v1991
    %v2118 = vpack.c.b16 %v1996, %v1994
    %v2119 = vpack.c.b16 %v1997, %v1995
    %v2120 = vpack.c.b16 %v2000, %v1998
    %v2121 = vpack.c.b16 %v2001, %v1999
    %v2122 = vpack.c.b16 %v2004, %v2002
    %v2123 = vpack.c.b16 %v2005, %v2003
    %v2124 = vpack.c.b16 %v2008, %v2006
    %v2125 = vpack.c.b16 %v2009, %v2007
    %v2126 = vpack.c.b16 %v2012, %v2010
    %v2127 = vpack.c.b16 %v2013, %v2011
    %v2128 = vpack.c.b16 %v2016, %v2014
    %v2129 = vpack.c.b16 %v2017, %v2015
    %v2130 = vpack.c.b16 %v2020, %v2018
    %v2131 = vpack.c.b16 %v2021, %v2019
    %v2132 = vpack.c.b16 %v2024, %v2022
    %v2133 = vpack.c.b16 %v2025, %v2023
    %v2134 = vpack.c.b16 %v2028, %v2026
    %v2135 = vpack.c.b16 %v2029, %v2027
    %v2136 = vpack.c.b16 %v2032, %v2030
    %v2137 = vpack.c.b16 %v2033, %v2031
    %v2138 = vpack.c.b16 %v2036, %v2034
    %v2139 = vpack.c.b16 %v2037, %v2035
    %v2140 = vpack.c.b16 %v2040, %v2038
    %v2141 = vpack.c.b16 %v2041, %v2039
    %v2142 = vpack.c.b16 %v2044, %v2042
    %v2143 = vpack.c.b16 %v2045, %v2043
    %v2144 = vpack.c.b16 %v2048, %v2046
    %v2145 = vpack.c.b16 %v2049, %v2047
    %v2146 = vpack.c.b16 %v2052, %v2050
    %v2147 = vpack.c.b16 %v2053, %v2051
    %v2148 = vpack.c.b16 %v2056, %v2054
    %v2149 = vpack.c.b16 %v2057, %v2055
    %v2150 = vpack.c.b16 %v2060, %v2058
    %v2151 = vpack.c.b16 %v2061, %v2059
    %v2152 = vpack.c.b16 %v2064, %v2062
    %v2153 = vpack.c.b16 %v2065, %v2063
    %v2154 = vpack.c.b16 %v2068, %v2066
    %v2155 = vpack.c.b16 %v2069, %v2067
    %v2156 = vpack.c.b16 %v2072, %v2070
    %v2157 = vpack.c.b16 %v2073, %v2071
    %v2158 = vpack.c.b16 %v2076, %v2074
    %v2159 = vpack.c.b16 %v2077, %v2075
    %v2160 = vpack.c.b16 %v2080, %v2078
    %v2161 = vpack.c.b16 %v2081, %v2079
    %v2162 = vpack.c.b16 %v2084, %v2082
    %v2163 = vpack.c.b16 %v2085, %v2083
    %v2164 = vpack.c.b16 %v2088, %v2086
    %v2165 = vpack.c.b16 %v2089, %v2087
    %v2166 = vpack.c.b16 %v2092, %v2090
    %v2167 = vpack.c.b16 %v2093, %v2091
    %v2168 = vpack.c.b16 %v2096, %v2094
    %v2169 = vpack.c.b16 %v2097, %v2095
    %v2170 = vpack.c.b16 %v2100, %v2098
    %v2171 = vpack.c.b16 %v2101, %v2099
    %v2172 = vpack.c.b16 %v2104, %v2102
    %v2173 = vpack.c.b16 %v2105, %v2103
    %v2174 = vpack.c.b16 %v2108, %v2106
    %v2175 = vpack.c.b16 %v2109, %v2107
    %v2176 = vpack.c.b16 %v2112, %v2110
    %v2177 = vpack.c.b16 %v2113, %v2111
    %2242 = vmatprep.subr.bf16.mxu0 %v2115
    %2243 = vmatpush1.bf16.msra.mxu0 %v2114
    %2244 = vmatprep.subr.bf16.mxu0 %v2117
    %2245 = vmatpush1.bf16.msra.mxu0 %v2116
    %2246 = vmatprep.subr.bf16.mxu0 %v2119
    %2247 = vmatpush1.bf16.msra.mxu0 %v2118
    %2248 = vmatprep.subr.bf16.mxu0 %v2121
    %2249 = vmatpush1.bf16.msra.mxu0 %v2120
    %2250 = vmatprep.subr.bf16.mxu0 %v2123
    %2251 = vmatpush1.bf16.msra.mxu0 %v2122
    %2252 = vmatprep.subr.bf16.mxu0 %v2125
    %2253 = vmatpush1.bf16.msra.mxu0 %v2124
    %2254 = vmatprep.subr.bf16.mxu0 %v2127
    %2255 = vmatpush1.bf16.msra.mxu0 %v2126
    %2256 = vmatprep.subr.bf16.mxu0 %v2129
    %2257 = vmatpush1.bf16.msra.mxu0 %v2128
    %2258 = vmatprep.subr.bf16.mxu0 %v2131
    %2259 = vmatpush1.bf16.msra.mxu0 %v2130
    %2260 = vmatprep.subr.bf16.mxu0 %v2133
    %2261 = vmatpush1.bf16.msra.mxu0 %v2132
    %2262 = vmatprep.subr.bf16.mxu0 %v2135
    %2263 = vmatpush1.bf16.msra.mxu0 %v2134
    %2264 = vmatprep.subr.bf16.mxu0 %v2137
    %2265 = vmatpush1.bf16.msra.mxu0 %v2136
    %2266 = vmatprep.subr.bf16.mxu0 %v2139
    %2267 = vmatpush1.bf16.msra.mxu0 %v2138
    %2268 = vmatprep.subr.bf16.mxu0 %v2141
    %2269 = vmatpush1.bf16.msra.mxu0 %v2140
    %2270 = vmatprep.subr.bf16.mxu0 %v2143
    %2271 = vmatpush1.bf16.msra.mxu0 %v2142
    %2272 = vmatprep.subr.bf16.mxu0 %v2145
    %2273 = vmatpush1.bf16.msra.mxu0 %v2144
    %2274 = vmatprep.mubr.bf16.mxu0 %v1843
    %2275 = vmatmul.mubr.bf16.gmra.mrb[0].mxu0 %v1842
    %v2276 = vpop.f32.mrb[0].mxu0
    %v2277 = vadd.f32 %v1915, %v2276
    %v2278 = vpop.f32.mrb[0].mxu0
    %v2279 = vadd.f32 %v1919, %v2278
    %v2280 = vpop.f32.mrb[0].mxu0
    %v2281 = vadd.f32 %v1915, %v2280
    %v2282 = vpop.f32.mrb[0].mxu0
    %v2283 = vadd.f32 %v1919, %v2282
    %2284 = vdwg.mxu0
    %2285 = vmatprep.subr.bf16.mxu0 %v2147
    %2286 = vmatpush1.bf16.msra.mxu0 %v2146
    %2287 = vmatprep.subr.bf16.mxu0 %v2149
    %2288 = vmatpush1.bf16.msra.mxu0 %v2148
    %2289 = vmatprep.subr.bf16.mxu0 %v2151
    %2290 = vmatpush1.bf16.msra.mxu0 %v2150
    %2291 = vmatprep.subr.bf16.mxu0 %v2153
    %2292 = vmatpush1.bf16.msra.mxu0 %v2152
    %2293 = vmatprep.subr.bf16.mxu0 %v2155
    %2294 = vmatpush1.bf16.msra.mxu0 %v2154
    %2295 = vmatprep.subr.bf16.mxu0 %v2157
    %2296 = vmatpush1.bf16.msra.mxu0 %v2156
    %2297 = vmatprep.subr.bf16.mxu0 %v2159
    %2298 = vmatpush1.bf16.msra.mxu0 %v2158
    %2299 = vmatprep.subr.bf16.mxu0 %v2161
    %2300 = vmatpush1.bf16.msra.mxu0 %v2160
    %2301 = vmatprep.subr.bf16.mxu0 %v2163
    %2302 = vmatpush1.bf16.msra.mxu0 %v2162
    %2303 = vmatprep.subr.bf16.mxu0 %v2165
    %2304 = vmatpush1.bf16.msra.mxu0 %v2164
    %2305 = vmatprep.subr.bf16.mxu0 %v2167
    %2306 = vmatpush1.bf16.msra.mxu0 %v2166
    %2307 = vmatprep.subr.bf16.mxu0 %v2169
    %2308 = vmatpush1.bf16.msra.mxu0 %v2168
    %2309 = vmatprep.subr.bf16.mxu0 %v2171
    %2310 = vmatpush1.bf16.msra.mxu0 %v2170
    %2311 = vmatprep.subr.bf16.mxu0 %v2173
    %2312 = vmatpush1.bf16.msra.mxu0 %v2172
    %2313 = vmatprep.subr.bf16.mxu0 %v2175
    %2314 = vmatpush1.bf16.msra.mxu0 %v2174
    %2315 = vmatprep.subr.bf16.mxu0 %v2177
    %2316 = vmatpush1.bf16.msra.mxu0 %v2176
    %2317 = vmatprep.mubr.bf16.mxu0 %v1845
    %2318 = vmatmul.mubr.bf16.gmra.mrb[0].mxu0 %v1844
    %v2319 = vpop.f32.mrb[0].mxu0
    %v2320 = vadd.f32 %v2277, %v2319
    %v2321 = vpop.f32.mrb[0].mxu0
    %v2322 = vadd.f32 %v2279, %v2321
    %v2323 = vpop.f32.mrb[0].mxu0
    %v2324 = vadd.f32 %v2281, %v2323
    %v2325 = vpop.f32.mrb[0].mxu0
    %v2326 = vadd.f32 %v2283, %v2325
    %2327 = vdwg.mxu0
    %vm2328 = vcmask 408576
    %2329 = vst.msk [vmem:[#allocation9] sm:$0xff] %vm2328, %v2320
    %2330 = vst.msk [vmem:[#allocation9 + $0x8] sm:$0xff] %vm2328, %v2324
    %2331 = vst.msk [vmem:[#allocation11] sm:$0xff] %vm2328, %v2322
    %2332 = vst.msk [vmem:[#allocation11 + $0x8] sm:$0xff] %vm2328, %v2326
    %v2333 = vmul.f32 %v2322, 0.5
    %v2334 = vmul.f32 %v2326, 0.5
    %v2335 = vmul.f32 %v2333, 1.442695
    %v2336 = vpow.pop %v2335
    %v2337 = vmul.f32 %v2334, 1.442695
    %v2338 = vpow.pop %v2337
    %v2339 = vld [vmem:[%s1] sm:$0xff]
    %v2340 = vld [vmem:[%s1 + $0x8] sm:$0xff]
    %v2341 = vmul.f32 %v2339, %v2336
    %v2342 = vmul.f32 %v2340, %v2338
    %v2343 = vadd.f32 %v2320, %v2341
    %v2344 = vadd.f32 %v2324, %v2342
    %v2345 = vld [vmem:[%s7] sm:$0x1]
    %v2346 = vlaneseq
    %v2347 = vshrl.u32 %v2346, 7
    %v2348 = vsub.s32 0, %v2347
    %v2349 = vrot.slane %v2345, %v2348
    %v2350 = vmul.f32 %v2343, %v2349
    %v2351 = vmul.f32 %v2344, %v2349
    %v2352 = vsel %vm2328, %v2350, 0.0
    %2353 = vadd.xlane.f32.xlu0 %v2352
    %v2354 = vpop.xlane.xlu0 %2353
    %v2355 = vsel %vm2328, %v2351, 0.0
    %2356 = vadd.xlane.f32.xlu0 %v2355
    %v2357 = vpop.xlane.xlu0 %2356
    %s2358 = sld [smem:[#allocation2]]
    %v2359 = vstv %s2358
    %v2360 = vadd.f32 %v2354, %v2359
    %v2361 = vadd.f32 %v2357, %v2359
    %v2362 = vtanh.pop %v2360
    %v2363 = vtanh.pop %v2361
    %v2364 = vld [vmem:[%s6] sm:$0x1]
    %v2365 = vlaneseq
    %v2366 = vshrl.u32 %v2365, 7
    %v2367 = vsub.s32 0, %v2366
    %v2368 = vrot.slane %v2364, %v2367
    %v2369 = vmul.f32 %v2368, %v2362
    %v2370 = vmul.f32 %v2368, %v2363
    %v2371 = vadd.f32 %v2343, %v2369
    %v2372 = vadd.f32 %v2344, %v2370
    %v2373 = vmul.f32 %v2362, %v2362
    %v2374 = vmul.f32 %v2363, %v2363
    %v2375 = vsub.f32 1.0, %v2373
    %v2376 = vsub.f32 1.0, %v2374
    %s2377 = sld [smem:[#allocation5]]
    %v2378 = vstv %s2377
    %v2379 = vmul.f32 %v2375, %v2378
    %v2380 = vmul.f32 %v2376, %v2378
    %v2381 = vadd.f32 %v2379, 1.0
    %v2382 = vadd.f32 %v2380, 1.0
    %v2383 = vand.u32 2147483647, %v2381
    %v2384 = vand.u32 2147483647, %v2382
    %v2385 = vadd.f32 %v2383, 1e-06
    %v2386 = vadd.f32 %v2384, 1e-06
    %v2387 = vlog2.pop %v2385
    %v2388 = vmul.f32 %v2387, 0.6931472
    %v2389 = vlog2.pop %v2386
    %v2390 = vmul.f32 %v2389, 0.6931472
    %v2391 = vadd.f32 %v2388, 0.0
    %v2392 = vadd.f32 %v2390, 0.0
    %v2393 = vld [vmem:[%s7 + $0x1] sm:$0x1]
    %v2394 = vlaneseq
    %v2395 = vshrl.u32 %v2394, 7
    %v2396 = vsub.s32 0, %v2395
    %v2397 = vrot.slane %v2393, %v2396
    %v2398 = vmul.f32 %v2343, %v2397
    %v2399 = vmul.f32 %v2344, %v2397
    %v2400 = vsel %vm2328, %v2398, 0.0
    %2401 = vadd.xlane.f32.xlu0 %v2400
    %v2402 = vpop.xlane.xlu0 %2401
    %v2403 = vsel %vm2328, %v2399, 0.0
    %2404 = vadd.xlane.f32.xlu0 %v2403
    %v2405 = vpop.xlane.xlu0 %2404
    %s2406 = sld [smem:[#allocation2 + $0x1]]
    %v2407 = vstv %s2406
    %v2408 = vadd.f32 %v2402, %v2407
    %v2409 = vadd.f32 %v2405, %v2407
    %s2410 = sld [smem:[#allocation7 + $0x2]]
    %v2411 = vstv %s2410
    %v2412 = vmul.f32 %v2411, %v2362
    %v2413 = vmul.f32 %v2411, %v2363
    %v2414 = vadd.f32 %v2408, %v2412
    %v2415 = vadd.f32 %v2409, %v2413
    %v2416 = vtanh.pop %v2414
    %v2417 = vtanh.pop %v2415
    %v2418 = vld [vmem:[%s6 + $0x1] sm:$0x1]
    %v2419 = vlaneseq
    %v2420 = vshrl.u32 %v2419, 7
    %v2421 = vsub.s32 0, %v2420
    %v2422 = vrot.slane %v2418, %v2421
    %v2423 = vmul.f32 %v2422, %v2416
    %v2424 = vmul.f32 %v2422, %v2417
    %v2425 = vadd.f32 %v2371, %v2423
    %v2426 = vadd.f32 %v2372, %v2424
    %v2427 = vmul.f32 %v2416, %v2416
    %v2428 = vmul.f32 %v2417, %v2417
    %v2429 = vsub.f32 1.0, %v2427
    %v2430 = vsub.f32 1.0, %v2428
    %s2431 = sld [smem:[#allocation5 + $0x1]]
    %v2432 = vstv %s2431
    %v2433 = vmul.f32 %v2429, %v2432
    %v2434 = vmul.f32 %v2430, %v2432
    %v2435 = vadd.f32 %v2433, 1.0
    %v2436 = vadd.f32 %v2434, 1.0
    %v2437 = vand.u32 2147483647, %v2435
    %v2438 = vand.u32 2147483647, %v2436
    %v2439 = vadd.f32 %v2437, 1e-06
    %v2440 = vadd.f32 %v2438, 1e-06
    %v2441 = vlog2.pop %v2439
    %v2442 = vmul.f32 %v2441, 0.6931472
    %v2443 = vlog2.pop %v2440
    %v2444 = vmul.f32 %v2443, 0.6931472
    %v2445 = vadd.f32 %v2391, %v2442
    %v2446 = vadd.f32 %v2392, %v2444
    %vm2447 = vcmask 7168
    %2448 = vst.msk [vmem:[#allocation12] sm:$0xff] %vm2447, %v2445
    %2449 = vst.msk [vmem:[#allocation12 + $0x8] sm:$0xff] %vm2447, %v2446
    %v2450 = vpack.c.bf16 %v2426, %v2425
    %v2451 = vld [vmem:[%s11] sm:$0xff]
    %v2452 = vld [vmem:[%s11 + $0x8] sm:$0xff]
    %v2453 = vld [vmem:[%s11 + $0x10] sm:$0xff]
    %v2454 = vld [vmem:[%s11 + $0x18] sm:$0xff]
    %v2455 = vld [vmem:[%s11 + $0x20] sm:$0xff]
    %v2456 = vld [vmem:[%s11 + $0x28] sm:$0xff]
    %v2457 = vld [vmem:[%s11 + $0x30] sm:$0xff]
    %v2458 = vld [vmem:[%s11 + $0x38] sm:$0xff]
    %v2459 = vld [vmem:[%s11 + $0x40] sm:$0xff]
    %v2460 = vld [vmem:[%s11 + $0x48] sm:$0xff]
    %v2461 = vld [vmem:[%s11 + $0x50] sm:$0xff]
    %v2462 = vld [vmem:[%s11 + $0x58] sm:$0xff]
    %v2463 = vld [vmem:[%s11 + $0x60] sm:$0x11]
    %v2464 = vld [vmem:[%s11 + $0x68] sm:$0x11]
    %v2465 = vld [vmem:[%s12] sm:$0xf]
    %v2467 = vlaneseq
    %v2468 = vshrl.u32 %v2467, 7
    %v2469 = vsub.s32 0, %v2468
    %v2470 = vrot.slane %v2465, %v2469
    %v2471 = vlaneseq
    %v2472 = vshrl.u32 %v2471, 7
    %v2473 = vsub.s32 1, %v2472
    %v2474 = vrot.slane %v2465, %v2473
    %v2475 = vlaneseq
    %v2476 = vshrl.u32 %v2475, 7
    %v2477 = vsub.s32 2, %v2476
    %v2478 = vrot.slane %v2465, %v2477
    %v2479 = vlaneseq
    %v2480 = vshrl.u32 %v2479, 7
    %v2481 = vsub.s32 3, %v2480
    %v2482 = vrot.slane %v2465, %v2481
    %v2501 = vunpack.c.l.b16 %v2451
    %v2502 = vunpack.c.h.b16 %v2451
    %v2503 = vunpack.c.l.b16 %v2452
    %v2504 = vunpack.c.h.b16 %v2452
    %v2505 = vunpack.c.l.b16 %v2453
    %v2506 = vunpack.c.h.b16 %v2453
    %v2507 = vunpack.c.l.b16 %v2454
    %v2508 = vunpack.c.h.b16 %v2454
    %v2509 = vunpack.c.l.b16 %v2455
    %v2510 = vunpack.c.h.b16 %v2455
    %v2511 = vunpack.c.l.b16 %v2456
    %v2512 = vunpack.c.h.b16 %v2456
    %v2513 = vunpack.c.l.b16 %v2457
    %v2514 = vunpack.c.h.b16 %v2457
    %v2515 = vunpack.c.l.b16 %v2458
    %v2516 = vunpack.c.h.b16 %v2458
    %v2517 = vunpack.c.l.b16 %v2459
    %v2518 = vunpack.c.h.b16 %v2459
    %v2519 = vunpack.c.l.b16 %v2460
    %v2520 = vunpack.c.h.b16 %v2460
    %v2521 = vunpack.c.l.b16 %v2461
    %v2522 = vunpack.c.h.b16 %v2461
    %v2523 = vunpack.c.l.b16 %v2462
    %v2524 = vunpack.c.h.b16 %v2462
    %v2525 = vunpack.c.l.b16 %v2463
    %v2526 = vunpack.c.h.b16 %v2463
    %v2527 = vunpack.c.l.b16 %v2464
    %v2528 = vunpack.c.h.b16 %v2464
    %v2529 = vpack.c.b16 %v2505, %v2501
    %v2530 = vpack.c.b16 %v2506, %v2502
    %v2531 = vpack.c.b16 %v2507, %v2503
    %v2532 = vpack.c.b16 %v2508, %v2504
    %v2533 = vpack.c.b16 %v2513, %v2509
    %v2534 = vpack.c.b16 %v2514, %v2510
    %v2535 = vpack.c.b16 %v2515, %v2511
    %v2536 = vpack.c.b16 %v2516, %v2512
    %v2537 = vpack.c.b16 %v2521, %v2517
    %v2538 = vpack.c.b16 %v2522, %v2518
    %v2539 = vpack.c.b16 %v2523, %v2519
    %v2540 = vpack.c.b16 %v2524, %v2520
    %v2541 = vpack.c.b16 %v2525, %v2525
    %v2542 = vpack.c.b16 %v2526, %v2526
    %v2543 = vpack.c.b16 %v2527, %v2527
    %v2544 = vpack.c.b16 %v2528, %v2528
    %v2558 = vsel %vm2328, %v2450, 0
    %vm2560 = vcmask 1040384
    %v2562 = vsel %vm2560, %v2541, 0
    %v2565 = vsel %vm2560, %v2542, 0
    %v2568 = vsel %vm2560, %v2543, 0
    %v2571 = vsel %vm2560, %v2544, 0
    %2573 = vmatprep.subr.bf16.mxu0 %v2530
    %2574 = vmatpush1.bf16.msra.mxu0 %v2529
    %2575 = vmatprep.subr.bf16.mxu0 %v2534
    %2576 = vmatpush1.bf16.msra.mxu0 %v2533
    %2577 = vmatprep.subr.bf16.mxu0 %v2538
    %2578 = vmatpush1.bf16.msra.mxu0 %v2537
    %2579 = vmatprep.subr.bf16.mxu0 %v2565
    %2580 = vmatpush1.bf16.msra.mxu0 %v2562
    %2581 = vmatprep.subr.bf16.mxu0 0
    %2582 = vmatpush1.bf16.msra.mxu0 0
    %2583 = vmatprep.subr.bf16.mxu0 0
    %2584 = vmatpush1.bf16.msra.mxu0 0
    %2585 = vmatprep.subr.bf16.mxu0 0
    %2586 = vmatpush1.bf16.msra.mxu0 0
    %2587 = vmatprep.subr.bf16.mxu0 0
    %2588 = vmatpush1.bf16.msra.mxu0 0
    %2589 = vmatprep.subr.bf16.mxu0 0
    %2590 = vmatpush1.bf16.msra.mxu0 0
    %2591 = vmatprep.subr.bf16.mxu0 0
    %2592 = vmatpush1.bf16.msra.mxu0 0
    %2593 = vmatprep.subr.bf16.mxu0 0
    %2594 = vmatpush1.bf16.msra.mxu0 0
    %2595 = vmatprep.subr.bf16.mxu0 0
    %2596 = vmatpush1.bf16.msra.mxu0 0
    %2597 = vmatprep.subr.bf16.mxu0 0
    %2598 = vmatpush1.bf16.msra.mxu0 0
    %2599 = vmatprep.subr.bf16.mxu0 0
    %2600 = vmatpush1.bf16.msra.mxu0 0
    %2601 = vmatprep.subr.bf16.mxu0 0
    %2602 = vmatpush1.bf16.msra.mxu0 0
    %2603 = vmatprep.subr.bf16.mxu0 0
    %2604 = vmatpush1.bf16.msra.mxu0 0
    %2605 = vmatprep.mubr.bf16.mxu0 0
    %2606 = vmatmul.mubr.bf16.gmra.mrb[0].mxu0 %v2558
    %v2607 = vpop.f32.mrb[0].mxu0
    %v2608 = vadd.f32 %v2470, %v2607
    %v2609 = vpop.f32.mrb[0].mxu0
    %v2610 = vadd.f32 %v2474, %v2609
    %v2611 = vpop.f32.mrb[0].mxu0
    %v2612 = vadd.f32 %v2470, %v2611
    %v2613 = vpop.f32.mrb[0].mxu0
    %v2614 = vadd.f32 %v2474, %v2613
    %2615 = vdwg.mxu0
    %2616 = vmatprep.subr.bf16.mxu0 %v2532
    %2617 = vmatpush1.bf16.msra.mxu0 %v2531
    %2618 = vmatprep.subr.bf16.mxu0 %v2536
    %2619 = vmatpush1.bf16.msra.mxu0 %v2535
    %2620 = vmatprep.subr.bf16.mxu0 %v2540
    %2621 = vmatpush1.bf16.msra.mxu0 %v2539
    %2622 = vmatprep.subr.bf16.mxu0 %v2571
    %2623 = vmatpush1.bf16.msra.mxu0 %v2568
    %2624 = vmatprep.subr.bf16.mxu0 0
    %2625 = vmatpush1.bf16.msra.mxu0 0
    %2626 = vmatprep.subr.bf16.mxu0 0
    %2627 = vmatpush1.bf16.msra.mxu0 0
    %2628 = vmatprep.subr.bf16.mxu0 0
    %2629 = vmatpush1.bf16.msra.mxu0 0
    %2630 = vmatprep.subr.bf16.mxu0 0
    %2631 = vmatpush1.bf16.msra.mxu0 0
    %2632 = vmatprep.subr.bf16.mxu0 0
    %2633 = vmatpush1.bf16.msra.mxu0 0
    %2634 = vmatprep.subr.bf16.mxu0 0
    %2635 = vmatpush1.bf16.msra.mxu0 0
    %2636 = vmatprep.subr.bf16.mxu0 0
    %2637 = vmatpush1.bf16.msra.mxu0 0
    %2638 = vmatprep.subr.bf16.mxu0 0
    %2639 = vmatpush1.bf16.msra.mxu0 0
    %2640 = vmatprep.subr.bf16.mxu0 0
    %2641 = vmatpush1.bf16.msra.mxu0 0
    %2642 = vmatprep.subr.bf16.mxu0 0
    %2643 = vmatpush1.bf16.msra.mxu0 0
    %2644 = vmatprep.subr.bf16.mxu0 0
    %2645 = vmatpush1.bf16.msra.mxu0 0
    %2646 = vmatprep.subr.bf16.mxu0 0
    %2647 = vmatpush1.bf16.msra.mxu0 0
    %2648 = vmatprep.mubr.bf16.mxu0 0
    %2649 = vmatmul.mubr.bf16.gmra.mrb[0].mxu0 %v2558
    %v2650 = vpop.f32.mrb[0].mxu0
    %v2651 = vadd.f32 %v2478, %v2650
    %v2652 = vpop.f32.mrb[0].mxu0
    %v2653 = vadd.f32 %v2482, %v2652
    %v2654 = vpop.f32.mrb[0].mxu0
    %v2655 = vadd.f32 %v2478, %v2654
    %v2656 = vpop.f32.mrb[0].mxu0
    %v2657 = vadd.f32 %v2482, %v2656
    %2658 = vdwg.mxu0
    %v2659 = vmax.f32 %v2608, 0.0
    %v2660 = vmax.f32 %v2610, 0.0
    %v2661 = vmax.f32 %v2651, 0.0
    %v2662 = vmax.f32 %v2653, 0.0
    %v2663 = vmax.f32 %v2612, 0.0
    %v2664 = vmax.f32 %v2614, 0.0
    %v2665 = vmax.f32 %v2655, 0.0
    %v2666 = vmax.f32 %v2657, 0.0
    %v2667 = vpack.c.bf16 %v2663, %v2659
    %v2668 = vpack.c.bf16 %v2664, %v2660
    %v2669 = vpack.c.bf16 %v2665, %v2661
    %v2670 = vpack.c.bf16 %v2666, %v2662
    %v2671 = vld [vmem:[%s13] sm:$0xff]
    %v2672 = vld [vmem:[%s13 + $0x8] sm:$0xff]
    %v2673 = vld [vmem:[%s13 + $0x10] sm:$0xff]
    %v2674 = vld [vmem:[%s13 + $0x18] sm:$0xf]
    %v2675 = vld [vmem:[%s13 + $0x1c] sm:$0xff]
    %v2676 = vld [vmem:[%s13 + $0x24] sm:$0xff]
    %v2677 = vld [vmem:[%s13 + $0x2c] sm:$0xff]
    %v2678 = vld [vmem:[%s13 + $0x34] sm:$0xf]
    %v2679 = vld [vmem:[%s13 + $0x38] sm:$0xff]
    %v2680 = vld [vmem:[%s13 + $0x40] sm:$0xff]
    %v2681 = vld [vmem:[%s13 + $0x48] sm:$0xff]
    %v2682 = vld [vmem:[%s13 + $0x50] sm:$0xf]
    %v2683 = vld [vmem:[%s13 + $0x54] sm:$0xff]
    %v2684 = vld [vmem:[%s13 + $0x5c] sm:$0xff]
    %v2685 = vld [vmem:[%s13 + $0x64] sm:$0xff]
    %v2686 = vld [vmem:[%s13 + $0x6c] sm:$0xf]
    %v2687 = vld [vmem:[%s13 + $0x70] sm:$0xff]
    %v2688 = vld [vmem:[%s13 + $0x78] sm:$0xff]
    %v2689 = vld [vmem:[%s13 + $0x80] sm:$0xff]
    %v2690 = vld [vmem:[%s13 + $0x88] sm:$0xf]
    %v2691 = vld [vmem:[%s13 + $0x8c] sm:$0xff]
    %v2692 = vld [vmem:[%s13 + $0x94] sm:$0xff]
    %v2693 = vld [vmem:[%s13 + $0x9c] sm:$0xff]
    %v2694 = vld [vmem:[%s13 + $0xa4] sm:$0xf]
    %v2695 = vld [vmem:[%s13 + $0xa8] sm:$0xff]
    %v2696 = vld [vmem:[%s13 + $0xb0] sm:$0xff]
    %v2697 = vld [vmem:[%s13 + $0xb8] sm:$0xff]
    %v2698 = vld [vmem:[%s13 + $0xc0] sm:$0xf]
    %v2699 = vld [vmem:[%s13 + $0xc4] sm:$0xff]
    %v2700 = vld [vmem:[%s13 + $0xcc] sm:$0xff]
    %v2701 = vld [vmem:[%s13 + $0xd4] sm:$0xff]
    %v2702 = vld [vmem:[%s13 + $0xdc] sm:$0xf]
    %v2703 = vld [vmem:[%s13 + $0xe0] sm:$0xff]
    %v2704 = vld [vmem:[%s13 + $0xe8] sm:$0xff]
    %v2705 = vld [vmem:[%s13 + $0xf0] sm:$0xff]
    %v2706 = vld [vmem:[%s13 + $0xf8] sm:$0xf]
    %v2707 = vld [vmem:[%s13 + $0xfc] sm:$0xff]
    %v2708 = vld [vmem:[%s13 + $0x104] sm:$0xff]
    %v2709 = vld [vmem:[%s13 + $0x10c] sm:$0xff]
    %v2710 = vld [vmem:[%s13 + $0x114] sm:$0xf]
    %v2711 = vld [vmem:[%s13 + $0x118] sm:$0xff]
    %v2712 = vld [vmem:[%s13 + $0x120] sm:$0xff]
    %v2713 = vld [vmem:[%s13 + $0x128] sm:$0xff]
    %v2714 = vld [vmem:[%s13 + $0x130] sm:$0xf]
    %v2715 = vld [vmem:[%s13 + $0x134] sm:$0xff]
    %v2716 = vld [vmem:[%s13 + $0x13c] sm:$0xff]
    %v2717 = vld [vmem:[%s13 + $0x144] sm:$0xff]
    %v2718 = vld [vmem:[%s13 + $0x14c] sm:$0xf]
    %v2719 = vld [vmem:[%s13 + $0x150] sm:$0xff]
    %v2720 = vld [vmem:[%s13 + $0x158] sm:$0xff]
    %v2721 = vld [vmem:[%s13 + $0x160] sm:$0xff]
    %v2722 = vld [vmem:[%s13 + $0x168] sm:$0xf]
    %v2723 = vld [vmem:[%s13 + $0x16c] sm:$0xff]
    %v2724 = vld [vmem:[%s13 + $0x174] sm:$0xff]
    %v2725 = vld [vmem:[%s13 + $0x17c] sm:$0xff]
    %v2726 = vld [vmem:[%s13 + $0x184] sm:$0xf]
    %v2727 = vld [vmem:[%s13 + $0x188] sm:$0xff]
    %v2728 = vld [vmem:[%s13 + $0x190] sm:$0xff]
    %v2729 = vld [vmem:[%s13 + $0x198] sm:$0xff]
    %v2730 = vld [vmem:[%s13 + $0x1a0] sm:$0xf]
    %v2731 = vld [vmem:[%s13 + $0x1a4] sm:$0xff]
    %v2732 = vld [vmem:[%s13 + $0x1ac] sm:$0xff]
    %v2733 = vld [vmem:[%s13 + $0x1b4] sm:$0xff]
    %v2734 = vld [vmem:[%s13 + $0x1bc] sm:$0xf]
    %v2735 = vld [vmem:[%s13 + $0x1c0] sm:$0xff]
    %v2736 = vld [vmem:[%s13 + $0x1c8] sm:$0xff]
    %v2737 = vld [vmem:[%s13 + $0x1d0] sm:$0xff]
    %v2738 = vld [vmem:[%s13 + $0x1d8] sm:$0xf]
    %v2739 = vld [vmem:[%s13 + $0x1dc] sm:$0xff]
    %v2740 = vld [vmem:[%s13 + $0x1e4] sm:$0xff]
    %v2741 = vld [vmem:[%s13 + $0x1ec] sm:$0xff]
    %v2742 = vld [vmem:[%s13 + $0x1f4] sm:$0xf]
    %v2743 = vld [vmem:[%s13 + $0x1f8] sm:$0xff]
    %v2744 = vld [vmem:[%s13 + $0x200] sm:$0xff]
    %v2745 = vld [vmem:[%s13 + $0x208] sm:$0xff]
    %v2746 = vld [vmem:[%s13 + $0x210] sm:$0xf]
    %v2747 = vld [vmem:[%s13 + $0x214] sm:$0xff]
    %v2748 = vld [vmem:[%s13 + $0x21c] sm:$0xff]
    %v2749 = vld [vmem:[%s13 + $0x224] sm:$0xff]
    %v2750 = vld [vmem:[%s13 + $0x22c] sm:$0xf]
    %v2751 = vld [vmem:[%s13 + $0x230] sm:$0xff]
    %v2752 = vld [vmem:[%s13 + $0x238] sm:$0xff]
    %v2753 = vld [vmem:[%s13 + $0x240] sm:$0xff]
    %v2754 = vld [vmem:[%s13 + $0x248] sm:$0xf]
    %v2755 = vld [vmem:[%s13 + $0x24c] sm:$0xff]
    %v2756 = vld [vmem:[%s13 + $0x254] sm:$0xff]
    %v2757 = vld [vmem:[%s13 + $0x25c] sm:$0xff]
    %v2758 = vld [vmem:[%s13 + $0x264] sm:$0xf]
    %v2759 = vld [vmem:[%s13 + $0x268] sm:$0xff]
    %v2760 = vld [vmem:[%s13 + $0x270] sm:$0xff]
    %v2761 = vld [vmem:[%s13 + $0x278] sm:$0xff]
    %v2762 = vld [vmem:[%s13 + $0x280] sm:$0xf]
    %v2763 = vld [vmem:[%s13 + $0x284] sm:$0xff]
    %v2764 = vld [vmem:[%s13 + $0x28c] sm:$0xff]
    %v2765 = vld [vmem:[%s13 + $0x294] sm:$0xff]
    %v2766 = vld [vmem:[%s13 + $0x29c] sm:$0xf]
    %v2767 = vld [vmem:[%s13 + $0x2a0] sm:$0xff]
    %v2768 = vld [vmem:[%s13 + $0x2a8] sm:$0xff]
    %v2769 = vld [vmem:[%s13 + $0x2b0] sm:$0xff]
    %v2770 = vld [vmem:[%s13 + $0x2b8] sm:$0xf]
    %v2771 = vld [vmem:[%s13 + $0x2bc] sm:$0xff]
    %v2772 = vld [vmem:[%s13 + $0x2c4] sm:$0xff]
    %v2773 = vld [vmem:[%s13 + $0x2cc] sm:$0xff]
    %v2774 = vld [vmem:[%s13 + $0x2d4] sm:$0xf]
    %v2775 = vld [vmem:[%s13 + $0x2d8] sm:$0xff]
    %v2776 = vld [vmem:[%s13 + $0x2e0] sm:$0xff]
    %v2777 = vld [vmem:[%s13 + $0x2e8] sm:$0xff]
    %v2778 = vld [vmem:[%s13 + $0x2f0] sm:$0xf]
    %v2779 = vld [vmem:[%s13 + $0x2f4] sm:$0xff]
    %v2780 = vld [vmem:[%s13 + $0x2fc] sm:$0xff]
    %v2781 = vld [vmem:[%s13 + $0x304] sm:$0xff]
    %v2782 = vld [vmem:[%s13 + $0x30c] sm:$0xf]
    %v2783 = vld [vmem:[%s13 + $0x310] sm:$0xff]
    %v2784 = vld [vmem:[%s13 + $0x318] sm:$0xff]
    %v2785 = vld [vmem:[%s13 + $0x320] sm:$0xff]
    %v2786 = vld [vmem:[%s13 + $0x328] sm:$0xf]
    %v2787 = vld [vmem:[%s13 + $0x32c] sm:$0xff]
    %v2788 = vld [vmem:[%s13 + $0x334] sm:$0xff]
    %v2789 = vld [vmem:[%s13 + $0x33c] sm:$0xff]
    %v2790 = vld [vmem:[%s13 + $0x344] sm:$0xf]
    %v2791 = vld [vmem:[%s13 + $0x348] sm:$0xff]
    %v2792 = vld [vmem:[%s13 + $0x350] sm:$0xff]
    %v2793 = vld [vmem:[%s13 + $0x358] sm:$0xff]
    %v2794 = vld [vmem:[%s13 + $0x360] sm:$0xf]
    %v2795 = vld [vmem:[%s13 + $0x364] sm:$0xff]
    %v2796 = vld [vmem:[%s13 + $0x36c] sm:$0xff]
    %v2797 = vld [vmem:[%s13 + $0x374] sm:$0xff]
    %v2798 = vld [vmem:[%s13 + $0x37c] sm:$0xf]
    %v2799 = vld [vmem:[%s13 + $0x380] sm:$0xff]
    %v2800 = vld [vmem:[%s13 + $0x388] sm:$0xff]
    %v2801 = vld [vmem:[%s13 + $0x390] sm:$0xff]
    %v2802 = vld [vmem:[%s13 + $0x398] sm:$0xf]
    %v2803 = vld [vmem:[%s13 + $0x39c] sm:$0xff]
    %v2804 = vld [vmem:[%s13 + $0x3a4] sm:$0xff]
    %v2805 = vld [vmem:[%s13 + $0x3ac] sm:$0xff]
    %v2806 = vld [vmem:[%s13 + $0x3b4] sm:$0xf]
    %v2807 = vld [vmem:[%s13 + $0x3b8] sm:$0xff]
    %v2808 = vld [vmem:[%s13 + $0x3c0] sm:$0xff]
    %v2809 = vld [vmem:[%s13 + $0x3c8] sm:$0xff]
    %v2810 = vld [vmem:[%s13 + $0x3d0] sm:$0xf]
    %v2811 = vld [vmem:[%s13 + $0x3d4] sm:$0xff]
    %v2812 = vld [vmem:[%s13 + $0x3dc] sm:$0xff]
    %v2813 = vld [vmem:[%s13 + $0x3e4] sm:$0xff]
    %v2814 = vld [vmem:[%s13 + $0x3ec] sm:$0xf]
    %v2815 = vld [vmem:[%s13 + $0x3f0] sm:$0xff]
    %v2816 = vld [vmem:[%s13 + $0x3f8] sm:$0xff]
    %v2817 = vld [vmem:[%s13 + $0x400] sm:$0xff]
    %v2818 = vld [vmem:[%s13 + $0x408] sm:$0xf]
    %v2819 = vld [vmem:[%s13 + $0x40c] sm:$0xff]
    %v2820 = vld [vmem:[%s13 + $0x414] sm:$0xff]
    %v2821 = vld [vmem:[%s13 + $0x41c] sm:$0xff]
    %v2822 = vld [vmem:[%s13 + $0x424] sm:$0xf]
    %v2823 = vld [vmem:[%s13 + $0x428] sm:$0xff]
    %v2824 = vld [vmem:[%s13 + $0x430] sm:$0xff]
    %v2825 = vld [vmem:[%s13 + $0x438] sm:$0xff]
    %v2826 = vld [vmem:[%s13 + $0x440] sm:$0xf]
    %v2827 = vld [vmem:[%s13 + $0x444] sm:$0xff]
    %v2828 = vld [vmem:[%s13 + $0x44c] sm:$0xff]
    %v2829 = vld [vmem:[%s13 + $0x454] sm:$0xff]
    %v2830 = vld [vmem:[%s13 + $0x45c] sm:$0xf]
    %v2831 = vld [vmem:[%s13 + $0x460] sm:$0xff]
    %v2832 = vld [vmem:[%s13 + $0x468] sm:$0xff]
    %v2833 = vld [vmem:[%s13 + $0x470] sm:$0xff]
    %v2834 = vld [vmem:[%s13 + $0x478] sm:$0xf]
    %v2835 = vld [vmem:[%s13 + $0x47c] sm:$0xff]
    %v2836 = vld [vmem:[%s13 + $0x484] sm:$0xff]
    %v2837 = vld [vmem:[%s13 + $0x48c] sm:$0xff]
    %v2838 = vld [vmem:[%s13 + $0x494] sm:$0xf]
    %v2839 = vld [vmem:[%s13 + $0x498] sm:$0xff]
    %v2840 = vld [vmem:[%s13 + $0x4a0] sm:$0xff]
    %v2841 = vld [vmem:[%s13 + $0x4a8] sm:$0xff]
    %v2842 = vld [vmem:[%s13 + $0x4b0] sm:$0xf]
    %v2843 = vld [vmem:[%s13 + $0x4b4] sm:$0xff]
    %v2844 = vld [vmem:[%s13 + $0x4bc] sm:$0xff]
    %v2845 = vld [vmem:[%s13 + $0x4c4] sm:$0xff]
    %v2846 = vld [vmem:[%s13 + $0x4cc] sm:$0xf]
    %v2847 = vld [vmem:[%s13 + $0x4d0] sm:$0xff]
    %v2848 = vld [vmem:[%s13 + $0x4d8] sm:$0xff]
    %v2849 = vld [vmem:[%s13 + $0x4e0] sm:$0xff]
    %v2850 = vld [vmem:[%s13 + $0x4e8] sm:$0xf]
    %v2851 = vld [vmem:[%s13 + $0x4ec] sm:$0xff]
    %v2852 = vld [vmem:[%s13 + $0x4f4] sm:$0xff]
    %v2853 = vld [vmem:[%s13 + $0x4fc] sm:$0xff]
    %v2854 = vld [vmem:[%s13 + $0x504] sm:$0xf]
    %v2855 = vld [vmem:[%s13 + $0x508] sm:$0xff]
    %v2856 = vld [vmem:[%s13 + $0x510] sm:$0xff]
    %v2857 = vld [vmem:[%s13 + $0x518] sm:$0xff]
    %v2858 = vld [vmem:[%s13 + $0x520] sm:$0xf]
    %v2859 = vld [vmem:[%s13 + $0x524] sm:$0xff]
    %v2860 = vld [vmem:[%s13 + $0x52c] sm:$0xff]
    %v2861 = vld [vmem:[%s13 + $0x534] sm:$0xff]
    %v2862 = vld [vmem:[%s13 + $0x53c] sm:$0xf]
    %v2863 = vld [vmem:[%s13 + $0x540] sm:$0xff]
    %v2864 = vld [vmem:[%s13 + $0x548] sm:$0xff]
    %v2865 = vld [vmem:[%s13 + $0x550] sm:$0xff]
    %v2866 = vld [vmem:[%s13 + $0x558] sm:$0xf]
    %v2867 = vld [vmem:[%s13 + $0x55c] sm:$0xff]
    %v2868 = vld [vmem:[%s13 + $0x564] sm:$0xff]
    %v2869 = vld [vmem:[%s13 + $0x56c] sm:$0xff]
    %v2870 = vld [vmem:[%s13 + $0x574] sm:$0xf]
    %v2871 = vld [vmem:[%s13 + $0x578] sm:$0xff]
    %v2872 = vld [vmem:[%s13 + $0x580] sm:$0xff]
    %v2873 = vld [vmem:[%s13 + $0x588] sm:$0xff]
    %v2874 = vld [vmem:[%s13 + $0x590] sm:$0xf]
    %v2875 = vld [vmem:[%s13 + $0x594] sm:$0xff]
    %v2876 = vld [vmem:[%s13 + $0x59c] sm:$0xff]
    %v2877 = vld [vmem:[%s13 + $0x5a4] sm:$0xff]
    %v2878 = vld [vmem:[%s13 + $0x5ac] sm:$0xf]
    %v2879 = vld [vmem:[%s13 + $0x5b0] sm:$0xff]
    %v2880 = vld [vmem:[%s13 + $0x5b8] sm:$0xff]
    %v2881 = vld [vmem:[%s13 + $0x5c0] sm:$0xff]
    %v2882 = vld [vmem:[%s13 + $0x5c8] sm:$0xf]
    %v2883 = vld [vmem:[%s13 + $0x5cc] sm:$0xff]
    %v2884 = vld [vmem:[%s13 + $0x5d4] sm:$0xff]
    %v2885 = vld [vmem:[%s13 + $0x5dc] sm:$0xff]
    %v2886 = vld [vmem:[%s13 + $0x5e4] sm:$0xf]
    %v2887 = vld [vmem:[%s13 + $0x5e8] sm:$0xff]
    %v2888 = vld [vmem:[%s13 + $0x5f0] sm:$0xff]
    %v2889 = vld [vmem:[%s13 + $0x5f8] sm:$0xff]
    %v2890 = vld [vmem:[%s13 + $0x600] sm:$0xf]
    %v2891 = vld [vmem:[%s13 + $0x604] sm:$0xff]
    %v2892 = vld [vmem:[%s13 + $0x60c] sm:$0xff]
    %v2893 = vld [vmem:[%s13 + $0x614] sm:$0xff]
    %v2894 = vld [vmem:[%s13 + $0x61c] sm:$0xf]
    %v2895 = vld [vmem:[%s13 + $0x620] sm:$0xff]
    %v2896 = vld [vmem:[%s13 + $0x628] sm:$0xff]
    %v2897 = vld [vmem:[%s13 + $0x630] sm:$0xff]
    %v2898 = vld [vmem:[%s13 + $0x638] sm:$0xf]
    %v2899 = vld [vmem:[%s13 + $0x63c] sm:$0xff]
    %v2900 = vld [vmem:[%s13 + $0x644] sm:$0xff]
    %v2901 = vld [vmem:[%s13 + $0x64c] sm:$0xff]
    %v2902 = vld [vmem:[%s13 + $0x654] sm:$0xf]
    %v2903 = vld [vmem:[%s13 + $0x658] sm:$0xff]
    %v2904 = vld [vmem:[%s13 + $0x660] sm:$0xff]
    %v2905 = vld [vmem:[%s13 + $0x668] sm:$0xff]
    %v2906 = vld [vmem:[%s13 + $0x670] sm:$0xf]
    %v2907 = vld [vmem:[%s13 + $0x674] sm:$0xff]
    %v2908 = vld [vmem:[%s13 + $0x67c] sm:$0xff]
    %v2909 = vld [vmem:[%s13 + $0x684] sm:$0xff]
    %v2910 = vld [vmem:[%s13 + $0x68c] sm:$0xf]
    %v2911 = vld [vmem:[%s13 + $0x690] sm:$0xff]
    %v2912 = vld [vmem:[%s13 + $0x698] sm:$0xff]
    %v2913 = vld [vmem:[%s13 + $0x6a0] sm:$0xff]
    %v2914 = vld [vmem:[%s13 + $0x6a8] sm:$0xf]
    %v2915 = vld [vmem:[%s13 + $0x6ac] sm:$0xff]
    %v2916 = vld [vmem:[%s13 + $0x6b4] sm:$0xff]
    %v2917 = vld [vmem:[%s13 + $0x6bc] sm:$0xff]
    %v2918 = vld [vmem:[%s13 + $0x6c4] sm:$0xf]
    %v2919 = vld [vmem:[%s13 + $0x6c8] sm:$0xff]
    %v2920 = vld [vmem:[%s13 + $0x6d0] sm:$0xff]
    %v2921 = vld [vmem:[%s13 + $0x6d8] sm:$0xff]
    %v2922 = vld [vmem:[%s13 + $0x6e0] sm:$0xf]
    %v2923 = vld [vmem:[%s13 + $0x6e4] sm:$0xff]
    %v2924 = vld [vmem:[%s13 + $0x6ec] sm:$0xff]
    %v2925 = vld [vmem:[%s13 + $0x6f4] sm:$0xff]
    %v2926 = vld [vmem:[%s13 + $0x6fc] sm:$0xf]
    %v2927 = vld [vmem:[%s14] sm:$0x7f]
    %v2929 = vlaneseq
    %v2930 = vshrl.u32 %v2929, 7
    %v2931 = vsub.s32 0, %v2930
    %v2932 = vrot.slane %v2927, %v2931
    %v2933 = vlaneseq
    %v2934 = vshrl.u32 %v2933, 7
    %v2935 = vsub.s32 1, %v2934
    %v2936 = vrot.slane %v2927, %v2935
    %v2937 = vlaneseq
    %v2938 = vshrl.u32 %v2937, 7
    %v2939 = vsub.s32 2, %v2938
    %v2940 = vrot.slane %v2927, %v2939
    %v2941 = vlaneseq
    %v2942 = vshrl.u32 %v2941, 7
    %v2943 = vsub.s32 3, %v2942
    %v2944 = vrot.slane %v2927, %v2943
    %v2945 = vlaneseq
    %v2946 = vshrl.u32 %v2945, 7
    %v2947 = vsub.s32 4, %v2946
    %v2948 = vrot.slane %v2927, %v2947
    %v2949 = vlaneseq
    %v2950 = vshrl.u32 %v2949, 7
    %v2951 = vsub.s32 5, %v2950
    %v2952 = vrot.slane %v2927, %v2951
    %v2953 = vlaneseq
    %v2954 = vshrl.u32 %v2953, 7
    %v2955 = vsub.s32 6, %v2954
    %v2956 = vrot.slane %v2927, %v2955
    %v3220 = vunpack.c.l.b16 %v2671
    %v3221 = vunpack.c.h.b16 %v2671
    %v3222 = vunpack.c.l.b16 %v2672
    %v3223 = vunpack.c.h.b16 %v2672
    %v3224 = vunpack.c.l.b16 %v2673
    %v3225 = vunpack.c.h.b16 %v2673
    %v3226 = vunpack.c.l.b16 %v2674
    %v3227 = vunpack.c.l.b16 %v2675
    %v3228 = vunpack.c.h.b16 %v2675
    %v3229 = vunpack.c.l.b16 %v2676
    %v3230 = vunpack.c.h.b16 %v2676
    %v3231 = vunpack.c.l.b16 %v2677
    %v3232 = vunpack.c.h.b16 %v2677
    %v3233 = vunpack.c.l.b16 %v2678
    %v3234 = vunpack.c.l.b16 %v2679
    %v3235 = vunpack.c.h.b16 %v2679
    %v3236 = vunpack.c.l.b16 %v2680
    %v3237 = vunpack.c.h.b16 %v2680
    %v3238 = vunpack.c.l.b16 %v2681
    %v3239 = vunpack.c.h.b16 %v2681
    %v3240 = vunpack.c.l.b16 %v2682
    %v3241 = vunpack.c.l.b16 %v2683
    %v3242 = vunpack.c.h.b16 %v2683
    %v3243 = vunpack.c.l.b16 %v2684
    %v3244 = vunpack.c.h.b16 %v2684
    %v3245 = vunpack.c.l.b16 %v2685
    %v3246 = vunpack.c.h.b16 %v2685
    %v3247 = vunpack.c.l.b16 %v2686
    %v3248 = vunpack.c.l.b16 %v2687
    %v3249 = vunpack.c.h.b16 %v2687
    %v3250 = vunpack.c.l.b16 %v2688
    %v3251 = vunpack.c.h.b16 %v2688
    %v3252 = vunpack.c.l.b16 %v2689
    %v3253 = vunpack.c.h.b16 %v2689
    %v3254 = vunpack.c.l.b16 %v2690
    %v3255 = vunpack.c.l.b16 %v2691
    %v3256 = vunpack.c.h.b16 %v2691
    %v3257 = vunpack.c.l.b16 %v2692
    %v3258 = vunpack.c.h.b16 %v2692
    %v3259 = vunpack.c.l.b16 %v2693
    %v3260 = vunpack.c.h.b16 %v2693
    %v3261 = vunpack.c.l.b16 %v2694
    %v3262 = vunpack.c.l.b16 %v2695
    %v3263 = vunpack.c.h.b16 %v2695
    %v3264 = vunpack.c.l.b16 %v2696
    %v3265 = vunpack.c.h.b16 %v2696
    %v3266 = vunpack.c.l.b16 %v2697
    %v3267 = vunpack.c.h.b16 %v2697
    %v3268 = vunpack.c.l.b16 %v2698
    %v3269 = vunpack.c.l.b16 %v2699
    %v3270 = vunpack.c.h.b16 %v2699
    %v3271 = vunpack.c.l.b16 %v2700
    %v3272 = vunpack.c.h.b16 %v2700
    %v3273 = vunpack.c.l.b16 %v2701
    %v3274 = vunpack.c.h.b16 %v2701
    %v3275 = vunpack.c.l.b16 %v2702
    %v3276 = vunpack.c.l.b16 %v2703
    %v3277 = vunpack.c.h.b16 %v2703
    %v3278 = vunpack.c.l.b16 %v2704
    %v3279 = vunpack.c.h.b16 %v2704
    %v3280 = vunpack.c.l.b16 %v2705
    %v3281 = vunpack.c.h.b16 %v2705
    %v3282 = vunpack.c.l.b16 %v2706
    %v3283 = vunpack.c.l.b16 %v2707
    %v3284 = vunpack.c.h.b16 %v2707
    %v3285 = vunpack.c.l.b16 %v2708
    %v3286 = vunpack.c.h.b16 %v2708
    %v3287 = vunpack.c.l.b16 %v2709
    %v3288 = vunpack.c.h.b16 %v2709
    %v3289 = vunpack.c.l.b16 %v2710
    %v3290 = vunpack.c.l.b16 %v2711
    %v3291 = vunpack.c.h.b16 %v2711
    %v3292 = vunpack.c.l.b16 %v2712
    %v3293 = vunpack.c.h.b16 %v2712
    %v3294 = vunpack.c.l.b16 %v2713
    %v3295 = vunpack.c.h.b16 %v2713
    %v3296 = vunpack.c.l.b16 %v2714
    %v3297 = vunpack.c.l.b16 %v2715
    %v3298 = vunpack.c.h.b16 %v2715
    %v3299 = vunpack.c.l.b16 %v2716
    %v3300 = vunpack.c.h.b16 %v2716
    %v3301 = vunpack.c.l.b16 %v2717
    %v3302 = vunpack.c.h.b16 %v2717
    %v3303 = vunpack.c.l.b16 %v2718
    %v3304 = vunpack.c.l.b16 %v2719
    %v3305 = vunpack.c.h.b16 %v2719
    %v3306 = vunpack.c.l.b16 %v2720
    %v3307 = vunpack.c.h.b16 %v2720
    %v3308 = vunpack.c.l.b16 %v2721
    %v3309 = vunpack.c.h.b16 %v2721
    %v3310 = vunpack.c.l.b16 %v2722
    %v3311 = vunpack.c.l.b16 %v2723
    %v3312 = vunpack.c.h.b16 %v2723
    %v3313 = vunpack.c.l.b16 %v2724
    %v3314 = vunpack.c.h.b16 %v2724
    %v3315 = vunpack.c.l.b16 %v2725
    %v3316 = vunpack.c.h.b16 %v2725
    %v3317 = vunpack.c.l.b16 %v2726
    %v3318 = vunpack.c.l.b16 %v2727
    %v3319 = vunpack.c.h.b16 %v2727
    %v3320 = vunpack.c.l.b16 %v2728
    %v3321 = vunpack.c.h.b16 %v2728
    %v3322 = vunpack.c.l.b16 %v2729
    %v3323 = vunpack.c.h.b16 %v2729
    %v3324 = vunpack.c.l.b16 %v2730
    %v3325 = vunpack.c.l.b16 %v2731
    %v3326 = vunpack.c.h.b16 %v2731
    %v3327 = vunpack.c.l.b16 %v2732
    %v3328 = vunpack.c.h.b16 %v2732
    %v3329 = vunpack.c.l.b16 %v2733
    %v3330 = vunpack.c.h.b16 %v2733
    %v3331 = vunpack.c.l.b16 %v2734
    %v3332 = vunpack.c.l.b16 %v2735
    %v3333 = vunpack.c.h.b16 %v2735
    %v3334 = vunpack.c.l.b16 %v2736
    %v3335 = vunpack.c.h.b16 %v2736
    %v3336 = vunpack.c.l.b16 %v2737
    %v3337 = vunpack.c.h.b16 %v2737
    %v3338 = vunpack.c.l.b16 %v2738
    %v3339 = vunpack.c.l.b16 %v2739
    %v3340 = vunpack.c.h.b16 %v2739
    %v3341 = vunpack.c.l.b16 %v2740
    %v3342 = vunpack.c.h.b16 %v2740
    %v3343 = vunpack.c.l.b16 %v2741
    %v3344 = vunpack.c.h.b16 %v2741
    %v3345 = vunpack.c.l.b16 %v2742
    %v3346 = vunpack.c.l.b16 %v2743
    %v3347 = vunpack.c.h.b16 %v2743
    %v3348 = vunpack.c.l.b16 %v2744
    %v3349 = vunpack.c.h.b16 %v2744
    %v3350 = vunpack.c.l.b16 %v2745
    %v3351 = vunpack.c.h.b16 %v2745
    %v3352 = vunpack.c.l.b16 %v2746
    %v3353 = vunpack.c.l.b16 %v2747
    %v3354 = vunpack.c.h.b16 %v2747
    %v3355 = vunpack.c.l.b16 %v2748
    %v3356 = vunpack.c.h.b16 %v2748
    %v3357 = vunpack.c.l.b16 %v2749
    %v3358 = vunpack.c.h.b16 %v2749
    %v3359 = vunpack.c.l.b16 %v2750
    %v3360 = vunpack.c.l.b16 %v2751
    %v3361 = vunpack.c.h.b16 %v2751
    %v3362 = vunpack.c.l.b16 %v2752
    %v3363 = vunpack.c.h.b16 %v2752
    %v3364 = vunpack.c.l.b16 %v2753
    %v3365 = vunpack.c.h.b16 %v2753
    %v3366 = vunpack.c.l.b16 %v2754
    %v3367 = vunpack.c.l.b16 %v2755
    %v3368 = vunpack.c.h.b16 %v2755
    %v3369 = vunpack.c.l.b16 %v2756
    %v3370 = vunpack.c.h.b16 %v2756
    %v3371 = vunpack.c.l.b16 %v2757
    %v3372 = vunpack.c.h.b16 %v2757
    %v3373 = vunpack.c.l.b16 %v2758
    %v3374 = vunpack.c.l.b16 %v2759
    %v3375 = vunpack.c.h.b16 %v2759
    %v3376 = vunpack.c.l.b16 %v2760
    %v3377 = vunpack.c.h.b16 %v2760
    %v3378 = vunpack.c.l.b16 %v2761
    %v3379 = vunpack.c.h.b16 %v2761
    %v3380 = vunpack.c.l.b16 %v2762
    %v3381 = vunpack.c.l.b16 %v2763
    %v3382 = vunpack.c.h.b16 %v2763
    %v3383 = vunpack.c.l.b16 %v2764
    %v3384 = vunpack.c.h.b16 %v2764
    %v3385 = vunpack.c.l.b16 %v2765
    %v3386 = vunpack.c.h.b16 %v2765
    %v3387 = vunpack.c.l.b16 %v2766
    %v3388 = vunpack.c.l.b16 %v2767
    %v3389 = vunpack.c.h.b16 %v2767
    %v3390 = vunpack.c.l.b16 %v2768
    %v3391 = vunpack.c.h.b16 %v2768
    %v3392 = vunpack.c.l.b16 %v2769
    %v3393 = vunpack.c.h.b16 %v2769
    %v3394 = vunpack.c.l.b16 %v2770
    %v3395 = vunpack.c.l.b16 %v2771
    %v3396 = vunpack.c.h.b16 %v2771
    %v3397 = vunpack.c.l.b16 %v2772
    %v3398 = vunpack.c.h.b16 %v2772
    %v3399 = vunpack.c.l.b16 %v2773
    %v3400 = vunpack.c.h.b16 %v2773
    %v3401 = vunpack.c.l.b16 %v2774
    %v3402 = vunpack.c.l.b16 %v2775
    %v3403 = vunpack.c.h.b16 %v2775
    %v3404 = vunpack.c.l.b16 %v2776
    %v3405 = vunpack.c.h.b16 %v2776
    %v3406 = vunpack.c.l.b16 %v2777
    %v3407 = vunpack.c.h.b16 %v2777
    %v3408 = vunpack.c.l.b16 %v2778
    %v3409 = vunpack.c.l.b16 %v2779
    %v3410 = vunpack.c.h.b16 %v2779
    %v3411 = vunpack.c.l.b16 %v2780
    %v3412 = vunpack.c.h.b16 %v2780
    %v3413 = vunpack.c.l.b16 %v2781
    %v3414 = vunpack.c.h.b16 %v2781
    %v3415 = vunpack.c.l.b16 %v2782
    %v3416 = vunpack.c.l.b16 %v2783
    %v3417 = vunpack.c.h.b16 %v2783
    %v3418 = vunpack.c.l.b16 %v2784
    %v3419 = vunpack.c.h.b16 %v2784
    %v3420 = vunpack.c.l.b16 %v2785
    %v3421 = vunpack.c.h.b16 %v2785
    %v3422 = vunpack.c.l.b16 %v2786
    %v3423 = vunpack.c.l.b16 %v2787
    %v3424 = vunpack.c.h.b16 %v2787
    %v3425 = vunpack.c.l.b16 %v2788
    %v3426 = vunpack.c.h.b16 %v2788
    %v3427 = vunpack.c.l.b16 %v2789
    %v3428 = vunpack.c.h.b16 %v2789
    %v3429 = vunpack.c.l.b16 %v2790
    %v3430 = vunpack.c.l.b16 %v2791
    %v3431 = vunpack.c.h.b16 %v2791
    %v3432 = vunpack.c.l.b16 %v2792
    %v3433 = vunpack.c.h.b16 %v2792
    %v3434 = vunpack.c.l.b16 %v2793
    %v3435 = vunpack.c.h.b16 %v2793
    %v3436 = vunpack.c.l.b16 %v2794
    %v3437 = vunpack.c.l.b16 %v2795
    %v3438 = vunpack.c.h.b16 %v2795
    %v3439 = vunpack.c.l.b16 %v2796
    %v3440 = vunpack.c.h.b16 %v2796
    %v3441 = vunpack.c.l.b16 %v2797
    %v3442 = vunpack.c.h.b16 %v2797
    %v3443 = vunpack.c.l.b16 %v2798
    %v3444 = vunpack.c.l.b16 %v2799
    %v3445 = vunpack.c.h.b16 %v2799
    %v3446 = vunpack.c.l.b16 %v2800
    %v3447 = vunpack.c.h.b16 %v2800
    %v3448 = vunpack.c.l.b16 %v2801
    %v3449 = vunpack.c.h.b16 %v2801
    %v3450 = vunpack.c.l.b16 %v2802
    %v3451 = vunpack.c.l.b16 %v2803
    %v3452 = vunpack.c.h.b16 %v2803
    %v3453 = vunpack.c.l.b16 %v2804
    %v3454 = vunpack.c.h.b16 %v2804
    %v3455 = vunpack.c.l.b16 %v2805
    %v3456 = vunpack.c.h.b16 %v2805
    %v3457 = vunpack.c.l.b16 %v2806
    %v3458 = vunpack.c.l.b16 %v2807
    %v3459 = vunpack.c.h.b16 %v2807
    %v3460 = vunpack.c.l.b16 %v2808
    %v3461 = vunpack.c.h.b16 %v2808
    %v3462 = vunpack.c.l.b16 %v2809
    %v3463 = vunpack.c.h.b16 %v2809
    %v3464 = vunpack.c.l.b16 %v2810
    %v3465 = vunpack.c.l.b16 %v2811
    %v3466 = vunpack.c.h.b16 %v2811
    %v3467 = vunpack.c.l.b16 %v2812
    %v3468 = vunpack.c.h.b16 %v2812
    %v3469 = vunpack.c.l.b16 %v2813
    %v3470 = vunpack.c.h.b16 %v2813
    %v3471 = vunpack.c.l.b16 %v2814
    %v3472 = vunpack.c.l.b16 %v2815
    %v3473 = vunpack.c.h.b16 %v2815
    %v3474 = vunpack.c.l.b16 %v2816
    %v3475 = vunpack.c.h.b16 %v2816
    %v3476 = vunpack.c.l.b16 %v2817
    %v3477 = vunpack.c.h.b16 %v2817
    %v3478 = vunpack.c.l.b16 %v2818
    %v3479 = vunpack.c.l.b16 %v2819
    %v3480 = vunpack.c.h.b16 %v2819
    %v3481 = vunpack.c.l.b16 %v2820
    %v3482 = vunpack.c.h.b16 %v2820
    %v3483 = vunpack.c.l.b16 %v2821
    %v3484 = vunpack.c.h.b16 %v2821
    %v3485 = vunpack.c.l.b16 %v2822
    %v3486 = vunpack.c.l.b16 %v2823
    %v3487 = vunpack.c.h.b16 %v2823
    %v3488 = vunpack.c.l.b16 %v2824
    %v3489 = vunpack.c.h.b16 %v2824
    %v3490 = vunpack.c.l.b16 %v2825
    %v3491 = vunpack.c.h.b16 %v2825
    %v3492 = vunpack.c.l.b16 %v2826
    %v3493 = vunpack.c.l.b16 %v2827
    %v3494 = vunpack.c.h.b16 %v2827
    %v3495 = vunpack.c.l.b16 %v2828
    %v3496 = vunpack.c.h.b16 %v2828
    %v3497 = vunpack.c.l.b16 %v2829
    %v3498 = vunpack.c.h.b16 %v2829
    %v3499 = vunpack.c.l.b16 %v2830
    %v3500 = vunpack.c.l.b16 %v2831
    %v3501 = vunpack.c.h.b16 %v2831
    %v3502 = vunpack.c.l.b16 %v2832
    %v3503 = vunpack.c.h.b16 %v2832
    %v3504 = vunpack.c.l.b16 %v2833
    %v3505 = vunpack.c.h.b16 %v2833
    %v3506 = vunpack.c.l.b16 %v2834
    %v3507 = vunpack.c.l.b16 %v2835
    %v3508 = vunpack.c.h.b16 %v2835
    %v3509 = vunpack.c.l.b16 %v2836
    %v3510 = vunpack.c.h.b16 %v2836
    %v3511 = vunpack.c.l.b16 %v2837
    %v3512 = vunpack.c.h.b16 %v2837
    %v3513 = vunpack.c.l.b16 %v2838
    %v3514 = vunpack.c.l.b16 %v2839
    %v3515 = vunpack.c.h.b16 %v2839
    %v3516 = vunpack.c.l.b16 %v2840
    %v3517 = vunpack.c.h.b16 %v2840
    %v3518 = vunpack.c.l.b16 %v2841
    %v3519 = vunpack.c.h.b16 %v2841
    %v3520 = vunpack.c.l.b16 %v2842
    %v3521 = vunpack.c.l.b16 %v2843
    %v3522 = vunpack.c.h.b16 %v2843
    %v3523 = vunpack.c.l.b16 %v2844
    %v3524 = vunpack.c.h.b16 %v2844
    %v3525 = vunpack.c.l.b16 %v2845
    %v3526 = vunpack.c.h.b16 %v2845
    %v3527 = vunpack.c.l.b16 %v2846
    %v3528 = vunpack.c.l.b16 %v2847
    %v3529 = vunpack.c.h.b16 %v2847
    %v3530 = vunpack.c.l.b16 %v2848
    %v3531 = vunpack.c.h.b16 %v2848
    %v3532 = vunpack.c.l.b16 %v2849
    %v3533 = vunpack.c.h.b16 %v2849
    %v3534 = vunpack.c.l.b16 %v2850
    %v3535 = vunpack.c.l.b16 %v2851
    %v3536 = vunpack.c.h.b16 %v2851
    %v3537 = vunpack.c.l.b16 %v2852
    %v3538 = vunpack.c.h.b16 %v2852
    %v3539 = vunpack.c.l.b16 %v2853
    %v3540 = vunpack.c.h.b16 %v2853
    %v3541 = vunpack.c.l.b16 %v2854
    %v3542 = vunpack.c.l.b16 %v2855
    %v3543 = vunpack.c.h.b16 %v2855
    %v3544 = vunpack.c.l.b16 %v2856
    %v3545 = vunpack.c.h.b16 %v2856
    %v3546 = vunpack.c.l.b16 %v2857
    %v3547 = vunpack.c.h.b16 %v2857
    %v3548 = vunpack.c.l.b16 %v2858
    %v3549 = vunpack.c.l.b16 %v2859
    %v3550 = vunpack.c.h.b16 %v2859
    %v3551 = vunpack.c.l.b16 %v2860
    %v3552 = vunpack.c.h.b16 %v2860
    %v3553 = vunpack.c.l.b16 %v2861
    %v3554 = vunpack.c.h.b16 %v2861
    %v3555 = vunpack.c.l.b16 %v2862
    %v3556 = vunpack.c.l.b16 %v2863
    %v3557 = vunpack.c.h.b16 %v2863
    %v3558 = vunpack.c.l.b16 %v2864
    %v3559 = vunpack.c.h.b16 %v2864
    %v3560 = vunpack.c.l.b16 %v2865
    %v3561 = vunpack.c.h.b16 %v2865
    %v3562 = vunpack.c.l.b16 %v2866
    %v3563 = vunpack.c.l.b16 %v2867
    %v3564 = vunpack.c.h.b16 %v2867
    %v3565 = vunpack.c.l.b16 %v2868
    %v3566 = vunpack.c.h.b16 %v2868
    %v3567 = vunpack.c.l.b16 %v2869
    %v3568 = vunpack.c.h.b16 %v2869
    %v3569 = vunpack.c.l.b16 %v2870
    %v3570 = vunpack.c.l.b16 %v2871
    %v3571 = vunpack.c.h.b16 %v2871
    %v3572 = vunpack.c.l.b16 %v2872
    %v3573 = vunpack.c.h.b16 %v2872
    %v3574 = vunpack.c.l.b16 %v2873
    %v3575 = vunpack.c.h.b16 %v2873
    %v3576 = vunpack.c.l.b16 %v2874
    %v3577 = vunpack.c.l.b16 %v2875
    %v3578 = vunpack.c.h.b16 %v2875
    %v3579 = vunpack.c.l.b16 %v2876
    %v3580 = vunpack.c.h.b16 %v2876
    %v3581 = vunpack.c.l.b16 %v2877
    %v3582 = vunpack.c.h.b16 %v2877
    %v3583 = vunpack.c.l.b16 %v2878
    %v3584 = vunpack.c.l.b16 %v2879
    %v3585 = vunpack.c.h.b16 %v2879
    %v3586 = vunpack.c.l.b16 %v2880
    %v3587 = vunpack.c.h.b16 %v2880
    %v3588 = vunpack.c.l.b16 %v2881
    %v3589 = vunpack.c.h.b16 %v2881
    %v3590 = vunpack.c.l.b16 %v2882
    %v3591 = vunpack.c.l.b16 %v2883
    %v3592 = vunpack.c.h.b16 %v2883
    %v3593 = vunpack.c.l.b16 %v2884
    %v3594 = vunpack.c.h.b16 %v2884
    %v3595 = vunpack.c.l.b16 %v2885
    %v3596 = vunpack.c.h.b16 %v2885
    %v3597 = vunpack.c.l.b16 %v2886
    %v3598 = vunpack.c.l.b16 %v2887
    %v3599 = vunpack.c.h.b16 %v2887
    %v3600 = vunpack.c.l.b16 %v2888
    %v3601 = vunpack.c.h.b16 %v2888
    %v3602 = vunpack.c.l.b16 %v2889
    %v3603 = vunpack.c.h.b16 %v2889
    %v3604 = vunpack.c.l.b16 %v2890
    %v3605 = vunpack.c.l.b16 %v2891
    %v3606 = vunpack.c.h.b16 %v2891
    %v3607 = vunpack.c.l.b16 %v2892
    %v3608 = vunpack.c.h.b16 %v2892
    %v3609 = vunpack.c.l.b16 %v2893
    %v3610 = vunpack.c.h.b16 %v2893
    %v3611 = vunpack.c.l.b16 %v2894
    %v3612 = vunpack.c.l.b16 %v2895
    %v3613 = vunpack.c.h.b16 %v2895
    %v3614 = vunpack.c.l.b16 %v2896
    %v3615 = vunpack.c.h.b16 %v2896
    %v3616 = vunpack.c.l.b16 %v2897
    %v3617 = vunpack.c.h.b16 %v2897
    %v3618 = vunpack.c.l.b16 %v2898
    %v3619 = vunpack.c.l.b16 %v2899
    %v3620 = vunpack.c.h.b16 %v2899
    %v3621 = vunpack.c.l.b16 %v2900
    %v3622 = vunpack.c.h.b16 %v2900
    %v3623 = vunpack.c.l.b16 %v2901
    %v3624 = vunpack.c.h.b16 %v2901
    %v3625 = vunpack.c.l.b16 %v2902
    %v3626 = vunpack.c.l.b16 %v2903
    %v3627 = vunpack.c.h.b16 %v2903
    %v3628 = vunpack.c.l.b16 %v2904
    %v3629 = vunpack.c.h.b16 %v2904
    %v3630 = vunpack.c.l.b16 %v2905
    %v3631 = vunpack.c.h.b16 %v2905
    %v3632 = vunpack.c.l.b16 %v2906
    %v3633 = vunpack.c.l.b16 %v2907
    %v3634 = vunpack.c.h.b16 %v2907
    %v3635 = vunpack.c.l.b16 %v2908
    %v3636 = vunpack.c.h.b16 %v2908
    %v3637 = vunpack.c.l.b16 %v2909
    %v3638 = vunpack.c.h.b16 %v2909
    %v3639 = vunpack.c.l.b16 %v2910
    %v3640 = vunpack.c.l.b16 %v2911
    %v3641 = vunpack.c.h.b16 %v2911
    %v3642 = vunpack.c.l.b16 %v2912
    %v3643 = vunpack.c.h.b16 %v2912
    %v3644 = vunpack.c.l.b16 %v2913
    %v3645 = vunpack.c.h.b16 %v2913
    %v3646 = vunpack.c.l.b16 %v2914
    %v3647 = vunpack.c.l.b16 %v2915
    %v3648 = vunpack.c.h.b16 %v2915
    %v3649 = vunpack.c.l.b16 %v2916
    %v3650 = vunpack.c.h.b16 %v2916
    %v3651 = vunpack.c.l.b16 %v2917
    %v3652 = vunpack.c.h.b16 %v2917
    %v3653 = vunpack.c.l.b16 %v2918
    %v3654 = vunpack.c.l.b16 %v2919
    %v3655 = vunpack.c.h.b16 %v2919
    %v3656 = vunpack.c.l.b16 %v2920
    %v3657 = vunpack.c.h.b16 %v2920
    %v3658 = vunpack.c.l.b16 %v2921
    %v3659 = vunpack.c.h.b16 %v2921
    %v3660 = vunpack.c.l.b16 %v2922
    %v3661 = vunpack.c.l.b16 %v2923
    %v3662 = vunpack.c.h.b16 %v2923
    %v3663 = vunpack.c.l.b16 %v2924
    %v3664 = vunpack.c.h.b16 %v2924
    %v3665 = vunpack.c.l.b16 %v2925
    %v3666 = vunpack.c.h.b16 %v2925
    %v3667 = vunpack.c.l.b16 %v2926
    %v3668 = vpack.c.b16 %v3227, %v3220
    %v3669 = vpack.c.b16 %v3228, %v3221
    %v3670 = vpack.c.b16 %v3229, %v3222
    %v3671 = vpack.c.b16 %v3230, %v3223
    %v3672 = vpack.c.b16 %v3231, %v3224
    %v3673 = vpack.c.b16 %v3232, %v3225
    %v3674 = vpack.c.b16 %v3233, %v3226
    %v3675 = vpack.c.b16 %v3241, %v3234
    %v3676 = vpack.c.b16 %v3242, %v3235
    %v3677 = vpack.c.b16 %v3243, %v3236
    %v3678 = vpack.c.b16 %v3244, %v3237
    %v3679 = vpack.c.b16 %v3245, %v3238
    %v3680 = vpack.c.b16 %v3246, %v3239
    %v3681 = vpack.c.b16 %v3247, %v3240
    %v3682 = vpack.c.b16 %v3255, %v3248
    %v3683 = vpack.c.b16 %v3256, %v3249
    %v3684 = vpack.c.b16 %v3257, %v3250
    %v3685 = vpack.c.b16 %v3258, %v3251
    %v3686 = vpack.c.b16 %v3259, %v3252
    %v3687 = vpack.c.b16 %v3260, %v3253
    %v3688 = vpack.c.b16 %v3261, %v3254
    %v3689 = vpack.c.b16 %v3269, %v3262
    %v3690 = vpack.c.b16 %v3270, %v3263
    %v3691 = vpack.c.b16 %v3271, %v3264
    %v3692 = vpack.c.b16 %v3272, %v3265
    %v3693 = vpack.c.b16 %v3273, %v3266
    %v3694 = vpack.c.b16 %v3274, %v3267
    %v3695 = vpack.c.b16 %v3275, %v3268
    %v3696 = vpack.c.b16 %v3283, %v3276
    %v3697 = vpack.c.b16 %v3284, %v3277
    %v3698 = vpack.c.b16 %v3285, %v3278
    %v3699 = vpack.c.b16 %v3286, %v3279
    %v3700 = vpack.c.b16 %v3287, %v3280
    %v3701 = vpack.c.b16 %v3288, %v3281
    %v3702 = vpack.c.b16 %v3289, %v3282
    %v3703 = vpack.c.b16 %v3297, %v3290
    %v3704 = vpack.c.b16 %v3298, %v3291
    %v3705 = vpack.c.b16 %v3299, %v3292
    %v3706 = vpack.c.b16 %v3300, %v3293
    %v3707 = vpack.c.b16 %v3301, %v3294
    %v3708 = vpack.c.b16 %v3302, %v3295
    %v3709 = vpack.c.b16 %v3303, %v3296
    %v3710 = vpack.c.b16 %v3311, %v3304
    %v3711 = vpack.c.b16 %v3312, %v3305
    %v3712 = vpack.c.b16 %v3313, %v3306
    %v3713 = vpack.c.b16 %v3314, %v3307
    %v3714 = vpack.c.b16 %v3315, %v3308
    %v3715 = vpack.c.b16 %v3316, %v3309
    %v3716 = vpack.c.b16 %v3317, %v3310
    %v3717 = vpack.c.b16 %v3325, %v3318
    %v3718 = vpack.c.b16 %v3326, %v3319
    %v3719 = vpack.c.b16 %v3327, %v3320
    %v3720 = vpack.c.b16 %v3328, %v3321
    %v3721 = vpack.c.b16 %v3329, %v3322
    %v3722 = vpack.c.b16 %v3330, %v3323
    %v3723 = vpack.c.b16 %v3331, %v3324
    %v3724 = vpack.c.b16 %v3339, %v3332
    %v3725 = vpack.c.b16 %v3340, %v3333
    %v3726 = vpack.c.b16 %v3341, %v3334
    %v3727 = vpack.c.b16 %v3342, %v3335
    %v3728 = vpack.c.b16 %v3343, %v3336
    %v3729 = vpack.c.b16 %v3344, %v3337
    %v3730 = vpack.c.b16 %v3345, %v3338
    %v3731 = vpack.c.b16 %v3353, %v3346
    %v3732 = vpack.c.b16 %v3354, %v3347
    %v3733 = vpack.c.b16 %v3355, %v3348
    %v3734 = vpack.c.b16 %v3356, %v3349
    %v3735 = vpack.c.b16 %v3357, %v3350
    %v3736 = vpack.c.b16 %v3358, %v3351
    %v3737 = vpack.c.b16 %v3359, %v3352
    %v3738 = vpack.c.b16 %v3367, %v3360
    %v3739 = vpack.c.b16 %v3368, %v3361
    %v3740 = vpack.c.b16 %v3369, %v3362
    %v3741 = vpack.c.b16 %v3370, %v3363
    %v3742 = vpack.c.b16 %v3371, %v3364
    %v3743 = vpack.c.b16 %v3372, %v3365
    %v3744 = vpack.c.b16 %v3373, %v3366
    %v3745 = vpack.c.b16 %v3381, %v3374
    %v3746 = vpack.c.b16 %v3382, %v3375
    %v3747 = vpack.c.b16 %v3383, %v3376
    %v3748 = vpack.c.b16 %v3384, %v3377
    %v3749 = vpack.c.b16 %v3385, %v3378
    %v3750 = vpack.c.b16 %v3386, %v3379
    %v3751 = vpack.c.b16 %v3387, %v3380
    %v3752 = vpack.c.b16 %v3395, %v3388
    %v3753 = vpack.c.b16 %v3396, %v3389
    %v3754 = vpack.c.b16 %v3397, %v3390
    %v3755 = vpack.c.b16 %v3398, %v3391
    %v3756 = vpack.c.b16 %v3399, %v3392
    %v3757 = vpack.c.b16 %v3400, %v3393
    %v3758 = vpack.c.b16 %v3401, %v3394
    %v3759 = vpack.c.b16 %v3409, %v3402
    %v3760 = vpack.c.b16 %v3410, %v3403
    %v3761 = vpack.c.b16 %v3411, %v3404
    %v3762 = vpack.c.b16 %v3412, %v3405
    %v3763 = vpack.c.b16 %v3413, %v3406
    %v3764 = vpack.c.b16 %v3414, %v3407
    %v3765 = vpack.c.b16 %v3415, %v3408
    %v3766 = vpack.c.b16 %v3423, %v3416
    %v3767 = vpack.c.b16 %v3424, %v3417
    %v3768 = vpack.c.b16 %v3425, %v3418
    %v3769 = vpack.c.b16 %v3426, %v3419
    %v3770 = vpack.c.b16 %v3427, %v3420
    %v3771 = vpack.c.b16 %v3428, %v3421
    %v3772 = vpack.c.b16 %v3429, %v3422
    %v3773 = vpack.c.b16 %v3437, %v3430
    %v3774 = vpack.c.b16 %v3438, %v3431
    %v3775 = vpack.c.b16 %v3439, %v3432
    %v3776 = vpack.c.b16 %v3440, %v3433
    %v3777 = vpack.c.b16 %v3441, %v3434
    %v3778 = vpack.c.b16 %v3442, %v3435
    %v3779 = vpack.c.b16 %v3443, %v3436
    %v3780 = vpack.c.b16 %v3451, %v3444
    %v3781 = vpack.c.b16 %v3452, %v3445
    %v3782 = vpack.c.b16 %v3453, %v3446
    %v3783 = vpack.c.b16 %v3454, %v3447
    %v3784 = vpack.c.b16 %v3455, %v3448
    %v3785 = vpack.c.b16 %v3456, %v3449
    %v3786 = vpack.c.b16 %v3457, %v3450
    %v3787 = vpack.c.b16 %v3465, %v3458
    %v3788 = vpack.c.b16 %v3466, %v3459
    %v3789 = vpack.c.b16 %v3467, %v3460
    %v3790 = vpack.c.b16 %v3468, %v3461
    %v3791 = vpack.c.b16 %v3469, %v3462
    %v3792 = vpack.c.b16 %v3470, %v3463
    %v3793 = vpack.c.b16 %v3471, %v3464
    %v3794 = vpack.c.b16 %v3479, %v3472
    %v3795 = vpack.c.b16 %v3480, %v3473
    %v3796 = vpack.c.b16 %v3481, %v3474
    %v3797 = vpack.c.b16 %v3482, %v3475
    %v3798 = vpack.c.b16 %v3483, %v3476
    %v3799 = vpack.c.b16 %v3484, %v3477
    %v3800 = vpack.c.b16 %v3485, %v3478
    %v3801 = vpack.c.b16 %v3493, %v3486
    %v3802 = vpack.c.b16 %v3494, %v3487
    %v3803 = vpack.c.b16 %v3495, %v3488
    %v3804 = vpack.c.b16 %v3496, %v3489
    %v3805 = vpack.c.b16 %v3497, %v3490
    %v3806 = vpack.c.b16 %v3498, %v3491
    %v3807 = vpack.c.b16 %v3499, %v3492
    %v3808 = vpack.c.b16 %v3507, %v3500
    %v3809 = vpack.c.b16 %v3508, %v3501
    %v3810 = vpack.c.b16 %v3509, %v3502
    %v3811 = vpack.c.b16 %v3510, %v3503
    %v3812 = vpack.c.b16 %v3511, %v3504
    %v3813 = vpack.c.b16 %v3512, %v3505
    %v3814 = vpack.c.b16 %v3513, %v3506
    %v3815 = vpack.c.b16 %v3521, %v3514
    %v3816 = vpack.c.b16 %v3522, %v3515
    %v3817 = vpack.c.b16 %v3523, %v3516
    %v3818 = vpack.c.b16 %v3524, %v3517
    %v3819 = vpack.c.b16 %v3525, %v3518
    %v3820 = vpack.c.b16 %v3526, %v3519
    %v3821 = vpack.c.b16 %v3527, %v3520
    %v3822 = vpack.c.b16 %v3535, %v3528
    %v3823 = vpack.c.b16 %v3536, %v3529
    %v3824 = vpack.c.b16 %v3537, %v3530
    %v3825 = vpack.c.b16 %v3538, %v3531
    %v3826 = vpack.c.b16 %v3539, %v3532
    %v3827 = vpack.c.b16 %v3540, %v3533
    %v3828 = vpack.c.b16 %v3541, %v3534
    %v3829 = vpack.c.b16 %v3549, %v3542
    %v3830 = vpack.c.b16 %v3550, %v3543
    %v3831 = vpack.c.b16 %v3551, %v3544
    %v3832 = vpack.c.b16 %v3552, %v3545
    %v3833 = vpack.c.b16 %v3553, %v3546
    %v3834 = vpack.c.b16 %v3554, %v3547
    %v3835 = vpack.c.b16 %v3555, %v3548
    %v3836 = vpack.c.b16 %v3563, %v3556
    %v3837 = vpack.c.b16 %v3564, %v3557
    %v3838 = vpack.c.b16 %v3565, %v3558
    %v3839 = vpack.c.b16 %v3566, %v3559
    %v3840 = vpack.c.b16 %v3567, %v3560
    %v3841 = vpack.c.b16 %v3568, %v3561
    %v3842 = vpack.c.b16 %v3569, %v3562
    %v3843 = vpack.c.b16 %v3577, %v3570
    %v3844 = vpack.c.b16 %v3578, %v3571
    %v3845 = vpack.c.b16 %v3579, %v3572
    %v3846 = vpack.c.b16 %v3580, %v3573
    %v3847 = vpack.c.b16 %v3581, %v3574
    %v3848 = vpack.c.b16 %v3582, %v3575
    %v3849 = vpack.c.b16 %v3583, %v3576
    %v3850 = vpack.c.b16 %v3591, %v3584
    %v3851 = vpack.c.b16 %v3592, %v3585
    %v3852 = vpack.c.b16 %v3593, %v3586
    %v3853 = vpack.c.b16 %v3594, %v3587
    %v3854 = vpack.c.b16 %v3595, %v3588
    %v3855 = vpack.c.b16 %v3596, %v3589
    %v3856 = vpack.c.b16 %v3597, %v3590
    %v3857 = vpack.c.b16 %v3605, %v3598
    %v3858 = vpack.c.b16 %v3606, %v3599
    %v3859 = vpack.c.b16 %v3607, %v3600
    %v3860 = vpack.c.b16 %v3608, %v3601
    %v3861 = vpack.c.b16 %v3609, %v3602
    %v3862 = vpack.c.b16 %v3610, %v3603
    %v3863 = vpack.c.b16 %v3611, %v3604
    %v3864 = vpack.c.b16 %v3619, %v3612
    %v3865 = vpack.c.b16 %v3620, %v3613
    %v3866 = vpack.c.b16 %v3621, %v3614
    %v3867 = vpack.c.b16 %v3622, %v3615
    %v3868 = vpack.c.b16 %v3623, %v3616
    %v3869 = vpack.c.b16 %v3624, %v3617
    %v3870 = vpack.c.b16 %v3625, %v3618
    %v3871 = vpack.c.b16 %v3633, %v3626
    %v3872 = vpack.c.b16 %v3634, %v3627
    %v3873 = vpack.c.b16 %v3635, %v3628
    %v3874 = vpack.c.b16 %v3636, %v3629
    %v3875 = vpack.c.b16 %v3637, %v3630
    %v3876 = vpack.c.b16 %v3638, %v3631
    %v3877 = vpack.c.b16 %v3639, %v3632
    %v3878 = vpack.c.b16 %v3647, %v3640
    %v3879 = vpack.c.b16 %v3648, %v3641
    %v3880 = vpack.c.b16 %v3649, %v3642
    %v3881 = vpack.c.b16 %v3650, %v3643
    %v3882 = vpack.c.b16 %v3651, %v3644
    %v3883 = vpack.c.b16 %v3652, %v3645
    %v3884 = vpack.c.b16 %v3653, %v3646
    %v3885 = vpack.c.b16 %v3661, %v3654
    %v3886 = vpack.c.b16 %v3662, %v3655
    %v3887 = vpack.c.b16 %v3663, %v3656
    %v3888 = vpack.c.b16 %v3664, %v3657
    %v3889 = vpack.c.b16 %v3665, %v3658
    %v3890 = vpack.c.b16 %v3666, %v3659
    %v3891 = vpack.c.b16 %v3667, %v3660
    %4116 = vmatprep.subr.bf16.mxu0 %v3669
    %4117 = vmatpush1.bf16.msra.mxu0 %v3668
    %4118 = vmatprep.subr.bf16.mxu0 %v3676
    %4119 = vmatpush1.bf16.msra.mxu0 %v3675
    %4120 = vmatprep.subr.bf16.mxu0 %v3683
    %4121 = vmatpush1.bf16.msra.mxu0 %v3682
    %4122 = vmatprep.subr.bf16.mxu0 %v3690
    %4123 = vmatpush1.bf16.msra.mxu0 %v3689
    %4124 = vmatprep.subr.bf16.mxu0 %v3697
    %4125 = vmatpush1.bf16.msra.mxu0 %v3696
    %4126 = vmatprep.subr.bf16.mxu0 %v3704
    %4127 = vmatpush1.bf16.msra.mxu0 %v3703
    %4128 = vmatprep.subr.bf16.mxu0 %v3711
    %4129 = vmatpush1.bf16.msra.mxu0 %v3710
    %4130 = vmatprep.subr.bf16.mxu0 %v3718
    %4131 = vmatpush1.bf16.msra.mxu0 %v3717
    %4132 = vmatprep.subr.bf16.mxu0 %v3725
    %4133 = vmatpush1.bf16.msra.mxu0 %v3724
    %4134 = vmatprep.subr.bf16.mxu0 %v3732
    %4135 = vmatpush1.bf16.msra.mxu0 %v3731
    %4136 = vmatprep.subr.bf16.mxu0 %v3739
    %4137 = vmatpush1.bf16.msra.mxu0 %v3738
    %4138 = vmatprep.subr.bf16.mxu0 %v3746
    %4139 = vmatpush1.bf16.msra.mxu0 %v3745
    %4140 = vmatprep.subr.bf16.mxu0 %v3753
    %4141 = vmatpush1.bf16.msra.mxu0 %v3752
    %4142 = vmatprep.subr.bf16.mxu0 %v3760
    %4143 = vmatpush1.bf16.msra.mxu0 %v3759
    %4144 = vmatprep.subr.bf16.mxu0 %v3767
    %4145 = vmatpush1.bf16.msra.mxu0 %v3766
    %4146 = vmatprep.subr.bf16.mxu0 %v3774
    %4147 = vmatpush1.bf16.msra.mxu0 %v3773
    %4148 = vmatprep.mubr.bf16.mxu0 %v2668
    %4149 = vmatmul.mubr.bf16.gmra.mrb[0].mxu0 %v2667
    %v4150 = vpop.f32.mrb[0].mxu0
    %v4151 = vadd.f32 %v2932, %v4150
    %v4152 = vpop.f32.mrb[0].mxu0
    %v4153 = vadd.f32 %v2936, %v4152
    %v4154 = vpop.f32.mrb[0].mxu0
    %v4155 = vadd.f32 %v2932, %v4154
    %v4156 = vpop.f32.mrb[0].mxu0
    %v4157 = vadd.f32 %v2936, %v4156
    %4158 = vdwg.mxu0
    %4159 = vmatprep.subr.bf16.mxu0 %v3781
    %4160 = vmatpush1.bf16.msra.mxu0 %v3780
    %4161 = vmatprep.subr.bf16.mxu0 %v3788
    %4162 = vmatpush1.bf16.msra.mxu0 %v3787
    %4163 = vmatprep.subr.bf16.mxu0 %v3795
    %4164 = vmatpush1.bf16.msra.mxu0 %v3794
    %4165 = vmatprep.subr.bf16.mxu0 %v3802
    %4166 = vmatpush1.bf16.msra.mxu0 %v3801
    %4167 = vmatprep.subr.bf16.mxu0 %v3809
    %4168 = vmatpush1.bf16.msra.mxu0 %v3808
    %4169 = vmatprep.subr.bf16.mxu0 %v3816
    %4170 = vmatpush1.bf16.msra.mxu0 %v3815
    %4171 = vmatprep.subr.bf16.mxu0 %v3823
    %4172 = vmatpush1.bf16.msra.mxu0 %v3822
    %4173 = vmatprep.subr.bf16.mxu0 %v3830
    %4174 = vmatpush1.bf16.msra.mxu0 %v3829
    %4175 = vmatprep.subr.bf16.mxu0 %v3837
    %4176 = vmatpush1.bf16.msra.mxu0 %v3836
    %4177 = vmatprep.subr.bf16.mxu0 %v3844
    %4178 = vmatpush1.bf16.msra.mxu0 %v3843
    %4179 = vmatprep.subr.bf16.mxu0 %v3851
    %4180 = vmatpush1.bf16.msra.mxu0 %v3850
    %4181 = vmatprep.subr.bf16.mxu0 %v3858
    %4182 = vmatpush1.bf16.msra.mxu0 %v3857
    %4183 = vmatprep.subr.bf16.mxu0 %v3865
    %4184 = vmatpush1.bf16.msra.mxu0 %v3864
    %4185 = vmatprep.subr.bf16.mxu0 %v3872
    %4186 = vmatpush1.bf16.msra.mxu0 %v3871
    %4187 = vmatprep.subr.bf16.mxu0 %v3879
    %4188 = vmatpush1.bf16.msra.mxu0 %v3878
    %4189 = vmatprep.subr.bf16.mxu0 %v3886
    %4190 = vmatpush1.bf16.msra.mxu0 %v3885
    %4191 = vmatprep.mubr.bf16.mxu0 %v2670
    %4192 = vmatmul.mubr.bf16.gmra.mrb[0].mxu0 %v2669
    %v4193 = vpop.f32.mrb[0].mxu0
    %v4194 = vadd.f32 %v4151, %v4193
    %v4195 = vpop.f32.mrb[0].mxu0
    %v4196 = vadd.f32 %v4153, %v4195
    %v4197 = vpop.f32.mrb[0].mxu0
    %v4198 = vadd.f32 %v4155, %v4197
    %v4199 = vpop.f32.mrb[0].mxu0
    %v4200 = vadd.f32 %v4157, %v4199
    %4201 = vdwg.mxu0
    %4202 = vmatprep.subr.bf16.mxu0 %v3671
    %4203 = vmatpush1.bf16.msra.mxu0 %v3670
    %4204 = vmatprep.subr.bf16.mxu0 %v3678
    %4205 = vmatpush1.bf16.msra.mxu0 %v3677
    %4206 = vmatprep.subr.bf16.mxu0 %v3685
    %4207 = vmatpush1.bf16.msra.mxu0 %v3684
    %4208 = vmatprep.subr.bf16.mxu0 %v3692
    %4209 = vmatpush1.bf16.msra.mxu0 %v3691
    %4210 = vmatprep.subr.bf16.mxu0 %v3699
    %4211 = vmatpush1.bf16.msra.mxu0 %v3698
    %4212 = vmatprep.subr.bf16.mxu0 %v3706
    %4213 = vmatpush1.bf16.msra.mxu0 %v3705
    %4214 = vmatprep.subr.bf16.mxu0 %v3713
    %4215 = vmatpush1.bf16.msra.mxu0 %v3712
    %4216 = vmatprep.subr.bf16.mxu0 %v3720
    %4217 = vmatpush1.bf16.msra.mxu0 %v3719
    %4218 = vmatprep.subr.bf16.mxu0 %v3727
    %4219 = vmatpush1.bf16.msra.mxu0 %v3726
    %4220 = vmatprep.subr.bf16.mxu0 %v3734
    %4221 = vmatpush1.bf16.msra.mxu0 %v3733
    %4222 = vmatprep.subr.bf16.mxu0 %v3741
    %4223 = vmatpush1.bf16.msra.mxu0 %v3740
    %4224 = vmatprep.subr.bf16.mxu0 %v3748
    %4225 = vmatpush1.bf16.msra.mxu0 %v3747
    %4226 = vmatprep.subr.bf16.mxu0 %v3755
    %4227 = vmatpush1.bf16.msra.mxu0 %v3754
    %4228 = vmatprep.subr.bf16.mxu0 %v3762
    %4229 = vmatpush1.bf16.msra.mxu0 %v3761
    %4230 = vmatprep.subr.bf16.mxu0 %v3769
    %4231 = vmatpush1.bf16.msra.mxu0 %v3768
    %4232 = vmatprep.subr.bf16.mxu0 %v3776
    %4233 = vmatpush1.bf16.msra.mxu0 %v3775
    %4234 = vmatprep.mubr.bf16.mxu0 %v2668
    %4235 = vmatmul.mubr.bf16.gmra.mrb[0].mxu0 %v2667
    %v4236 = vpop.f32.mrb[0].mxu0
    %v4237 = vadd.f32 %v2940, %v4236
    %v4238 = vpop.f32.mrb[0].mxu0
    %v4239 = vadd.f32 %v2944, %v4238
    %v4240 = vpop.f32.mrb[0].mxu0
    %v4241 = vadd.f32 %v2940, %v4240
    %v4242 = vpop.f32.mrb[0].mxu0
    %v4243 = vadd.f32 %v2944, %v4242
    %4244 = vdwg.mxu0
    %4245 = vmatprep.subr.bf16.mxu0 %v3783
    %4246 = vmatpush1.bf16.msra.mxu0 %v3782
    %4247 = vmatprep.subr.bf16.mxu0 %v3790
    %4248 = vmatpush1.bf16.msra.mxu0 %v3789
    %4249 = vmatprep.subr.bf16.mxu0 %v3797
    %4250 = vmatpush1.bf16.msra.mxu0 %v3796
    %4251 = vmatprep.subr.bf16.mxu0 %v3804
    %4252 = vmatpush1.bf16.msra.mxu0 %v3803
    %4253 = vmatprep.subr.bf16.mxu0 %v3811
    %4254 = vmatpush1.bf16.msra.mxu0 %v3810
    %4255 = vmatprep.subr.bf16.mxu0 %v3818
    %4256 = vmatpush1.bf16.msra.mxu0 %v3817
    %4257 = vmatprep.subr.bf16.mxu0 %v3825
    %4258 = vmatpush1.bf16.msra.mxu0 %v3824
    %4259 = vmatprep.subr.bf16.mxu0 %v3832
    %4260 = vmatpush1.bf16.msra.mxu0 %v3831
    %4261 = vmatprep.subr.bf16.mxu0 %v3839
    %4262 = vmatpush1.bf16.msra.mxu0 %v3838
    %4263 = vmatprep.subr.bf16.mxu0 %v3846
    %4264 = vmatpush1.bf16.msra.mxu0 %v3845
    %4265 = vmatprep.subr.bf16.mxu0 %v3853
    %4266 = vmatpush1.bf16.msra.mxu0 %v3852
    %4267 = vmatprep.subr.bf16.mxu0 %v3860
    %4268 = vmatpush1.bf16.msra.mxu0 %v3859
    %4269 = vmatprep.subr.bf16.mxu0 %v3867
    %4270 = vmatpush1.bf16.msra.mxu0 %v3866
    %4271 = vmatprep.subr.bf16.mxu0 %v3874
    %4272 = vmatpush1.bf16.msra.mxu0 %v3873
    %4273 = vmatprep.subr.bf16.mxu0 %v3881
    %4274 = vmatpush1.bf16.msra.mxu0 %v3880
    %4275 = vmatprep.subr.bf16.mxu0 %v3888
    %4276 = vmatpush1.bf16.msra.mxu0 %v3887
    %4277 = vmatprep.mubr.bf16.mxu0 %v2670
    %4278 = vmatmul.mubr.bf16.gmra.mrb[0].mxu0 %v2669
    %v4279 = vpop.f32.mrb[0].mxu0
    %v4280 = vadd.f32 %v4237, %v4279
    %v4281 = vpop.f32.mrb[0].mxu0
    %v4282 = vadd.f32 %v4239, %v4281
    %v4283 = vpop.f32.mrb[0].mxu0
    %v4284 = vadd.f32 %v4241, %v4283
    %v4285 = vpop.f32.mrb[0].mxu0
    %v4286 = vadd.f32 %v4243, %v4285
    %4287 = vdwg.mxu0
    %4288 = vmatprep.subr.bf16.mxu0 %v3673
    %4289 = vmatpush1.bf16.msra.mxu0 %v3672
    %4290 = vmatprep.subr.bf16.mxu0 %v3680
    %4291 = vmatpush1.bf16.msra.mxu0 %v3679
    %4292 = vmatprep.subr.bf16.mxu0 %v3687
    %4293 = vmatpush1.bf16.msra.mxu0 %v3686
    %4294 = vmatprep.subr.bf16.mxu0 %v3694
    %4295 = vmatpush1.bf16.msra.mxu0 %v3693
    %4296 = vmatprep.subr.bf16.mxu0 %v3701
    %4297 = vmatpush1.bf16.msra.mxu0 %v3700
    %4298 = vmatprep.subr.bf16.mxu0 %v3708
    %4299 = vmatpush1.bf16.msra.mxu0 %v3707
    %4300 = vmatprep.subr.bf16.mxu0 %v3715
    %4301 = vmatpush1.bf16.msra.mxu0 %v3714
    %4302 = vmatprep.subr.bf16.mxu0 %v3722
    %4303 = vmatpush1.bf16.msra.mxu0 %v3721
    %4304 = vmatprep.subr.bf16.mxu0 %v3729
    %4305 = vmatpush1.bf16.msra.mxu0 %v3728
    %4306 = vmatprep.subr.bf16.mxu0 %v3736
    %4307 = vmatpush1.bf16.msra.mxu0 %v3735
    %4308 = vmatprep.subr.bf16.mxu0 %v3743
    %4309 = vmatpush1.bf16.msra.mxu0 %v3742
    %4310 = vmatprep.subr.bf16.mxu0 %v3750
    %4311 = vmatpush1.bf16.msra.mxu0 %v3749
    %4312 = vmatprep.subr.bf16.mxu0 %v3757
    %4313 = vmatpush1.bf16.msra.mxu0 %v3756
    %4314 = vmatprep.subr.bf16.mxu0 %v3764
    %4315 = vmatpush1.bf16.msra.mxu0 %v3763
    %4316 = vmatprep.subr.bf16.mxu0 %v3771
    %4317 = vmatpush1.bf16.msra.mxu0 %v3770
    %4318 = vmatprep.subr.bf16.mxu0 %v3778
    %4319 = vmatpush1.bf16.msra.mxu0 %v3777
    %4320 = vmatprep.mubr.bf16.mxu0 %v2668
    %4321 = vmatmul.mubr.bf16.gmra.mrb[0].mxu0 %v2667
    %v4322 = vpop.f32.mrb[0].mxu0
    %v4323 = vadd.f32 %v2948, %v4322
    %v4324 = vpop.f32.mrb[0].mxu0
    %v4325 = vadd.f32 %v2952, %v4324
    %v4326 = vpop.f32.mrb[0].mxu0
    %v4327 = vadd.f32 %v2948, %v4326
    %v4328 = vpop.f32.mrb[0].mxu0
    %v4329 = vadd.f32 %v2952, %v4328
    %4330 = vdwg.mxu0
    %4331 = vmatprep.subr.bf16.mxu0 %v3785
    %4332 = vmatpush1.bf16.msra.mxu0 %v3784
    %4333 = vmatprep.subr.bf16.mxu0 %v3792
    %4334 = vmatpush1.bf16.msra.mxu0 %v3791
    %4335 = vmatprep.subr.bf16.mxu0 %v3799
    %4336 = vmatpush1.bf16.msra.mxu0 %v3798
    %4337 = vmatprep.subr.bf16.mxu0 %v3806
    %4338 = vmatpush1.bf16.msra.mxu0 %v3805
    %4339 = vmatprep.subr.bf16.mxu0 %v3813
    %4340 = vmatpush1.bf16.msra.mxu0 %v3812
    %4341 = vmatprep.subr.bf16.mxu0 %v3820
    %4342 = vmatpush1.bf16.msra.mxu0 %v3819
    %4343 = vmatprep.subr.bf16.mxu0 %v3827
    %4344 = vmatpush1.bf16.msra.mxu0 %v3826
    %4345 = vmatprep.subr.bf16.mxu0 %v3834
    %4346 = vmatpush1.bf16.msra.mxu0 %v3833
    %4347 = vmatprep.subr.bf16.mxu0 %v3841
    %4348 = vmatpush1.bf16.msra.mxu0 %v3840
    %4349 = vmatprep.subr.bf16.mxu0 %v3848
    %4350 = vmatpush1.bf16.msra.mxu0 %v3847
    %4351 = vmatprep.subr.bf16.mxu0 %v3855
    %4352 = vmatpush1.bf16.msra.mxu0 %v3854
    %4353 = vmatprep.subr.bf16.mxu0 %v3862
    %4354 = vmatpush1.bf16.msra.mxu0 %v3861
    %4355 = vmatprep.subr.bf16.mxu0 %v3869
    %4356 = vmatpush1.bf16.msra.mxu0 %v3868
    %4357 = vmatprep.subr.bf16.mxu0 %v3876
    %4358 = vmatpush1.bf16.msra.mxu0 %v3875
    %4359 = vmatprep.subr.bf16.mxu0 %v3883
    %4360 = vmatpush1.bf16.msra.mxu0 %v3882
    %4361 = vmatprep.subr.bf16.mxu0 %v3890
    %4362 = vmatpush1.bf16.msra.mxu0 %v3889
    %4363 = vmatprep.mubr.bf16.mxu0 %v2670
    %4364 = vmatmul.mubr.bf16.gmra.mrb[0].mxu0 %v2669
    %v4365 = vpop.f32.mrb[0].mxu0
    %v4366 = vadd.f32 %v4323, %v4365
    %v4367 = vpop.f32.mrb[0].mxu0
    %v4368 = vadd.f32 %v4325, %v4367
    %v4369 = vpop.f32.mrb[0].mxu0
    %v4370 = vadd.f32 %v4327, %v4369
    %v4371 = vpop.f32.mrb[0].mxu0
    %v4372 = vadd.f32 %v4329, %v4371
    %4373 = vdwg.mxu0
    %4374 = vmatprep.subr.bf16.mxu0 0
    %4375 = vmatpush1.bf16.msra.mxu0 %v3674
    %4376 = vmatprep.subr.bf16.mxu0 0
    %4377 = vmatpush1.bf16.msra.mxu0 %v3681
    %4378 = vmatprep.subr.bf16.mxu0 0
    %4379 = vmatpush1.bf16.msra.mxu0 %v3688
    %4380 = vmatprep.subr.bf16.mxu0 0
    %4381 = vmatpush1.bf16.msra.mxu0 %v3695
    %4382 = vmatprep.subr.bf16.mxu0 0
    %4383 = vmatpush1.bf16.msra.mxu0 %v3702
    %4384 = vmatprep.subr.bf16.mxu0 0
    %4385 = vmatpush1.bf16.msra.mxu0 %v3709
    %4386 = vmatprep.subr.bf16.mxu0 0
    %4387 = vmatpush1.bf16.msra.mxu0 %v3716
    %4388 = vmatprep.subr.bf16.mxu0 0
    %4389 = vmatpush1.bf16.msra.mxu0 %v3723
    %4390 = vmatprep.subr.bf16.mxu0 0
    %4391 = vmatpush1.bf16.msra.mxu0 %v3730
    %4392 = vmatprep.subr.bf16.mxu0 0
    %4393 = vmatpush1.bf16.msra.mxu0 %v3737
    %4394 = vmatprep.subr.bf16.mxu0 0
    %4395 = vmatpush1.bf16.msra.mxu0 %v3744
    %4396 = vmatprep.subr.bf16.mxu0 0
    %4397 = vmatpush1.bf16.msra.mxu0 %v3751
    %4398 = vmatprep.subr.bf16.mxu0 0
    %4399 = vmatpush1.bf16.msra.mxu0 %v3758
    %4400 = vmatprep.subr.bf16.mxu0 0
    %4401 = vmatpush1.bf16.msra.mxu0 %v3765
    %4402 = vmatprep.subr.bf16.mxu0 0
    %4403 = vmatpush1.bf16.msra.mxu0 %v3772
    %4404 = vmatprep.subr.bf16.mxu0 0
    %4405 = vmatpush1.bf16.msra.mxu0 %v3779
    %4406 = vmatprep.mubr.bf16.mxu0 %v2668
    %4407 = vmatmul.mubr.bf16.gmra.mrb[0].mxu0 %v2667
    %v4408 = vpop.f32.mrb[0].mxu0
    %v4409 = vadd.f32 %v2956, %v4408
    %v4410 = vpop.f32.mrb[0].mxu0
    %v4411 = vpop.f32.mrb[0].mxu0
    %v4412 = vadd.f32 %v2956, %v4411
    %v4413 = vpop.f32.mrb[0].mxu0
    %4414 = vdwg.mxu0
    %4415 = vmatprep.subr.bf16.mxu0 0
    %4416 = vmatpush1.bf16.msra.mxu0 %v3786
    %4417 = vmatprep.subr.bf16.mxu0 0
    %4418 = vmatpush1.bf16.msra.mxu0 %v3793
    %4419 = vmatprep.subr.bf16.mxu0 0
    %4420 = vmatpush1.bf16.msra.mxu0 %v3800
    %4421 = vmatprep.subr.bf16.mxu0 0
    %4422 = vmatpush1.bf16.msra.mxu0 %v3807
    %4423 = vmatprep.subr.bf16.mxu0 0
    %4424 = vmatpush1.bf16.msra.mxu0 %v3814
    %4425 = vmatprep.subr.bf16.mxu0 0
    %4426 = vmatpush1.bf16.msra.mxu0 %v3821
    %4427 = vmatprep.subr.bf16.mxu0 0
    %4428 = vmatpush1.bf16.msra.mxu0 %v3828
    %4429 = vmatprep.subr.bf16.mxu0 0
    %4430 = vmatpush1.bf16.msra.mxu0 %v3835
    %4431 = vmatprep.subr.bf16.mxu0 0
    %4432 = vmatpush1.bf16.msra.mxu0 %v3842
    %4433 = vmatprep.subr.bf16.mxu0 0
    %4434 = vmatpush1.bf16.msra.mxu0 %v3849
    %4435 = vmatprep.subr.bf16.mxu0 0
    %4436 = vmatpush1.bf16.msra.mxu0 %v3856
    %4437 = vmatprep.subr.bf16.mxu0 0
    %4438 = vmatpush1.bf16.msra.mxu0 %v3863
    %4439 = vmatprep.subr.bf16.mxu0 0
    %4440 = vmatpush1.bf16.msra.mxu0 %v3870
    %4441 = vmatprep.subr.bf16.mxu0 0
    %4442 = vmatpush1.bf16.msra.mxu0 %v3877
    %4443 = vmatprep.subr.bf16.mxu0 0
    %4444 = vmatpush1.bf16.msra.mxu0 %v3884
    %4445 = vmatprep.subr.bf16.mxu0 0
    %4446 = vmatpush1.bf16.msra.mxu0 %v3891
    %4447 = vmatprep.mubr.bf16.mxu0 %v2670
    %4448 = vmatmul.mubr.bf16.gmra.mrb[0].mxu0 %v2669
    %v4449 = vpop.f32.mrb[0].mxu0
    %v4450 = vadd.f32 %v4409, %v4449
    %v4451 = vpop.f32.mrb[0].mxu0
    %v4452 = vpop.f32.mrb[0].mxu0
    %v4453 = vadd.f32 %v4412, %v4452
    %v4454 = vpop.f32.mrb[0].mxu0
    %4455 = vdwg.mxu0
    %v4456 = vxor.u32 %v4194, 2147483648
    %v4457 = vxor.u32 %v4196, 2147483648
    %v4458 = vxor.u32 %v4280, 2147483648
    %v4459 = vxor.u32 %v4282, 2147483648
    %v4460 = vxor.u32 %v4366, 2147483648
    %v4461 = vxor.u32 %v4368, 2147483648
    %v4462 = vxor.u32 %v4450, 2147483648
    %v4463 = vxor.u32 %v4198, 2147483648
    %v4464 = vxor.u32 %v4200, 2147483648
    %v4465 = vxor.u32 %v4284, 2147483648
    %v4466 = vxor.u32 %v4286, 2147483648
    %v4467 = vxor.u32 %v4370, 2147483648
    %v4468 = vxor.u32 %v4372, 2147483648
    %v4469 = vxor.u32 %v4453, 2147483648
    %v4470 = vmul.f32 %v4456, 1.442695
    %v4471 = vpow.pop %v4470
    %v4472 = vmul.f32 %v4457, 1.442695
    %v4473 = vpow.pop %v4472
    %v4474 = vmul.f32 %v4458, 1.442695
    %v4475 = vpow.pop %v4474
    %v4476 = vmul.f32 %v4459, 1.442695
    %v4477 = vpow.pop %v4476
    %v4478 = vmul.f32 %v4460, 1.442695
    %v4479 = vpow.pop %v4478
    %v4480 = vmul.f32 %v4461, 1.442695
    %v4481 = vpow.pop %v4480
    %v4482 = vmul.f32 %v4462, 1.442695
    %v4483 = vpow.pop %v4482
    %v4484 = vmul.f32 %v4463, 1.442695
    %v4485 = vpow.pop %v4484
    %v4486 = vmul.f32 %v4464, 1.442695
    %v4487 = vpow.pop %v4486
    %v4488 = vmul.f32 %v4465, 1.442695
    %v4489 = vpow.pop %v4488
    %v4490 = vmul.f32 %v4466, 1.442695
    %v4491 = vpow.pop %v4490
    %v4492 = vmul.f32 %v4467, 1.442695
    %v4493 = vpow.pop %v4492
    %v4494 = vmul.f32 %v4468, 1.442695
    %v4495 = vpow.pop %v4494
    %v4496 = vmul.f32 %v4469, 1.442695
    %v4497 = vpow.pop %v4496
    %v4498 = vadd.f32 %v4471, 1.0
    %v4499 = vadd.f32 %v4473, 1.0
    %v4500 = vadd.f32 %v4475, 1.0
    %v4501 = vadd.f32 %v4477, 1.0
    %v4502 = vadd.f32 %v4479, 1.0
    %v4503 = vadd.f32 %v4481, 1.0
    %v4504 = vadd.f32 %v4483, 1.0
    %v4505 = vadd.f32 %v4485, 1.0
    %v4506 = vadd.f32 %v4487, 1.0
    %v4507 = vadd.f32 %v4489, 1.0
    %v4508 = vadd.f32 %v4491, 1.0
    %v4509 = vadd.f32 %v4493, 1.0
    %v4510 = vadd.f32 %v4495, 1.0
    %v4511 = vadd.f32 %v4497, 1.0
    %v4512 = vrcp.pop %v4498
    %v4513 = vmul.f32 1.0, %v4512
    %v4514 = vrcp.pop %v4499
    %v4515 = vmul.f32 1.0, %v4514
    %v4516 = vrcp.pop %v4500
    %v4517 = vmul.f32 1.0, %v4516
    %v4518 = vrcp.pop %v4501
    %v4519 = vmul.f32 1.0, %v4518
    %v4520 = vrcp.pop %v4502
    %v4521 = vmul.f32 1.0, %v4520
    %v4522 = vrcp.pop %v4503
    %v4523 = vmul.f32 1.0, %v4522
    %v4524 = vrcp.pop %v4504
    %v4525 = vmul.f32 1.0, %v4524
    %v4526 = vrcp.pop %v4505
    %v4527 = vmul.f32 1.0, %v4526
    %v4528 = vrcp.pop %v4506
    %v4529 = vmul.f32 1.0, %v4528
    %v4530 = vrcp.pop %v4507
    %v4531 = vmul.f32 1.0, %v4530
    %v4532 = vrcp.pop %v4508
    %v4533 = vmul.f32 1.0, %v4532
    %v4534 = vrcp.pop %v4509
    %v4535 = vmul.f32 1.0, %v4534
    %v4536 = vrcp.pop %v4510
    %v4537 = vmul.f32 1.0, %v4536
    %v4538 = vrcp.pop %v4511
    %v4539 = vmul.f32 1.0, %v4538
    %v4540 = vpack.c.bf16 %v4527, %v4513
    %v4541 = vpack.c.bf16 %v4529, %v4515
    %v4542 = vpack.c.bf16 %v4531, %v4517
    %v4543 = vpack.c.bf16 %v4533, %v4519
    %v4544 = vpack.c.bf16 %v4535, %v4521
    %v4545 = vpack.c.bf16 %v4537, %v4523
    %v4546 = vpack.c.bf16 %v4539, %v4525
    %v4554 = vcombine.low %v4540, %v4541
    %v4555 = vcombine.high %v4540, %v4541
    %v4556 = vcombine.low %v4542, %v4543
    %v4557 = vcombine.high %v4542, %v4543
    %v4558 = vcombine.low %v4544, %v4545
    %v4559 = vcombine.high %v4544, %v4545
    %v4560 = vcombine.high %v4546, %v4546
    %v4562 = vunpack.c.l.s4 1966171168
    %v4563 = vunpack.c.0.s8 %v4562
    %v4564 = vlaneseq
    %v4565 = vshrl.u32 %v4564, 7
    %v4566 = vsub.s32 %v4563, %v4565
    %v4567 = vrot.slane %v4554, %v4566
    %v4569 = vunpack.c.l.s4 1966171168
    %v4570 = vunpack.c.0.s8 %v4569
    %v4571 = vlaneseq
    %v4572 = vshrl.u32 %v4571, 7
    %v4573 = vsub.s32 %v4570, %v4572
    %v4574 = vrot.slane %v4555, %v4573
    %v4576 = vunpack.c.l.s4 1966171168
    %v4577 = vunpack.c.0.s8 %v4576
    %v4578 = vlaneseq
    %v4579 = vshrl.u32 %v4578, 7
    %v4580 = vsub.s32 %v4577, %v4579
    %v4581 = vrot.slane %v4556, %v4580
    %v4583 = vunpack.c.l.s4 1966171168
    %v4584 = vunpack.c.0.s8 %v4583
    %v4585 = vlaneseq
    %v4586 = vshrl.u32 %v4585, 7
    %v4587 = vsub.s32 %v4584, %v4586
    %v4588 = vrot.slane %v4557, %v4587
    %v4590 = vunpack.c.l.s4 1966171168
    %v4591 = vunpack.c.0.s8 %v4590
    %v4592 = vlaneseq
    %v4593 = vshrl.u32 %v4592, 7
    %v4594 = vsub.s32 %v4591, %v4593
    %v4595 = vrot.slane %v4558, %v4594
    %v4597 = vunpack.c.l.s4 1966171168
    %v4598 = vunpack.c.0.s8 %v4597
    %v4599 = vlaneseq
    %v4600 = vshrl.u32 %v4599, 7
    %v4601 = vsub.s32 %v4598, %v4600
    %v4602 = vrot.slane %v4559, %v4601
    %v4604 = vunpack.c.l.s4 1966171168
    %v4605 = vunpack.c.0.s8 %v4604
    %v4606 = vlaneseq
    %v4607 = vshrl.u32 %v4606, 7
    %v4608 = vsub.s32 %v4605, %v4607
    %v4609 = vrot.slane %v4546, %v4608
    %v4611 = vunpack.c.l.s4 1966171168
    %v4612 = vunpack.c.0.s8 %v4611
    %v4613 = vlaneseq
    %v4614 = vshrl.u32 %v4613, 7
    %v4615 = vsub.s32 %v4612, %v4614
    %v4616 = vrot.slane %v4560, %v4615
    %v4617 = vcombine.low %v4567, %v4581
    %v4618 = vcombine.high %v4567, %v4581
    %v4619 = vcombine.low %v4574, %v4588
    %v4620 = vcombine.high %v4574, %v4588
    %v4621 = vcombine.low %v4595, %v4609
    %v4622 = vcombine.high %v4595, %v4609
    %v4623 = vcombine.low %v4602, %v4616
    %v4624 = vcombine.high %v4602, %v4616
    %v4626 = vunpack.c.l.s4 1966171168
    %v4627 = vunpack.c.0.s8 %v4626
    %v4628 = vlaneseq
    %v4629 = vshrl.u32 %v4628, 7
    %v4630 = vsub.s32 %v4627, %v4629
    %v4631 = vrot.slane %v4617, %v4630
    %v4633 = vunpack.c.l.s4 1966171168
    %v4634 = vunpack.c.0.s8 %v4633
    %v4635 = vlaneseq
    %v4636 = vshrl.u32 %v4635, 7
    %v4637 = vsub.s32 %v4634, %v4636
    %v4638 = vrot.slane %v4619, %v4637
    %v4640 = vunpack.c.l.s4 1966171168
    %v4641 = vunpack.c.0.s8 %v4640
    %v4642 = vlaneseq
    %v4643 = vshrl.u32 %v4642, 7
    %v4644 = vsub.s32 %v4641, %v4643
    %v4645 = vrot.slane %v4618, %v4644
    %v4647 = vunpack.c.l.s4 1966171168
    %v4648 = vunpack.c.0.s8 %v4647
    %v4649 = vlaneseq
    %v4650 = vshrl.u32 %v4649, 7
    %v4651 = vsub.s32 %v4648, %v4650
    %v4652 = vrot.slane %v4620, %v4651
    %v4654 = vunpack.c.l.s4 1966171168
    %v4655 = vunpack.c.0.s8 %v4654
    %v4656 = vlaneseq
    %v4657 = vshrl.u32 %v4656, 7
    %v4658 = vsub.s32 %v4655, %v4657
    %v4659 = vrot.slane %v4621, %v4658
    %v4661 = vunpack.c.l.s4 1966171168
    %v4662 = vunpack.c.0.s8 %v4661
    %v4663 = vlaneseq
    %v4664 = vshrl.u32 %v4663, 7
    %v4665 = vsub.s32 %v4662, %v4664
    %v4666 = vrot.slane %v4623, %v4665
    %v4668 = vunpack.c.l.s4 1966171168
    %v4669 = vunpack.c.0.s8 %v4668
    %v4670 = vlaneseq
    %v4671 = vshrl.u32 %v4670, 7
    %v4672 = vsub.s32 %v4669, %v4671
    %v4673 = vrot.slane %v4622, %v4672
    %v4675 = vunpack.c.l.s4 1966171168
    %v4676 = vunpack.c.0.s8 %v4675
    %v4677 = vlaneseq
    %v4678 = vshrl.u32 %v4677, 7
    %v4679 = vsub.s32 %v4676, %v4678
    %v4680 = vrot.slane %v4624, %v4679
    %v4681 = vcombine.low %v4631, %v4659
    %v4682 = vcombine.high %v4631, %v4659
    %v4683 = vcombine.low %v4638, %v4666
    %v4684 = vcombine.high %v4638, %v4666
    %v4685 = vcombine.low %v4645, %v4673
    %v4686 = vcombine.high %v4645, %v4673
    %v4687 = vcombine.low %v4652, %v4680
    %v4688 = vcombine.high %v4652, %v4680
    %vm4697 = vcmask 1041409
    %vm4698 = vmor %vm4697, %vm2560
    %vm4699 = vcmask 1042434
    %vm4700 = vmor %vm4699, %vm4698
    %vm4701 = vcmask 1043459
    %vm4702 = vmor %vm4701, %vm4700
    %vm4703 = vcmask 1044484
    %vm4704 = vmor %vm4703, %vm4702
    %vm4705 = vcmask 1045509
    %vm4706 = vmor %vm4705, %vm4704
    %vm4707 = vcmask 129030
    %vm4708 = vmor %vm4707, %vm4706
    %4709 = vst.msk [vmem:[#allocation8] sm:$0x7f] %vm4708, %v4681
    %4710 = vst.msk [vmem:[#allocation8 + $0x7] sm:$0x7f] %vm4708, %v4685
    %4711 = vst.msk [vmem:[#allocation8 + $0xe] sm:$0x7f] %vm4708, %v4682
    %4712 = vst.msk [vmem:[#allocation8 + $0x15] sm:$0x7f] %vm4708, %v4686
    %4713 = vst.msk [vmem:[#allocation8 + $0x1c] sm:$0x7f] %vm4708, %v4683
    %4714 = vst.msk [vmem:[#allocation8 + $0x23] sm:$0x7f] %vm4708, %v4687
    %4715 = vst.msk [vmem:[#allocation8 + $0x2a] sm:$0x7f] %vm4708, %v4684
    %4716 = vst.msk [vmem:[#allocation8 + $0x31] sm:$0x7f] %vm4708, %v4688
    // Predicated region
    $region74: #{tpu_custom_call.1} parent=1 // pred_check
      _
    $region75: #{tpu_custom_call.1} parent=1 // pred_check_branch
      %4718 = sbr.rel (0) target = $region77
    $region76: #{tpu_custom_call.1} parent=1 // pred_region
      %s4720 = ssub.s32 896, 112
      %4721 = vsyncadd [#allocation3], %s4720
      %s4722 = sshll.u32 [#allocation8], 4
      %s4723 = int_to_ptr.vmem [resolvable:$true] %s4722
      %4728 = dma.vmem_to_hbm [thread:$0]  %s4723, 112, %s15, [#allocation3], 112, 112, 7
    $region77: #{tpu_custom_call.1} parent=1 // pred_fallthru
      _
    // Predicated region
    $region78: #{tpu_custom_call.1} parent=1 // pred_check
      _
    $region79: #{tpu_custom_call.1} parent=1 // pred_check_branch
      %4730 = sbr.rel (0) target = $region81
    $region80: #{tpu_custom_call.1} parent=1 // pred_region
      %s4732 = ssub.s32 256, 32
      %4733 = vsyncadd [#allocation10], %s4732
      %s4734 = sshll.u32 [#allocation9], 4
      %s4735 = int_to_ptr.vmem [resolvable:$true] %s4734
      %4740 = dma.vmem_to_hbm [thread:$0]  %s4735, 32, %s16, [#allocation10], 32, 32, 2
    $region81: #{tpu_custom_call.1} parent=1 // pred_fallthru
      _
    // Predicated region
    $region82: #{tpu_custom_call.1} parent=1 // pred_check
      _
    $region83: #{tpu_custom_call.1} parent=1 // pred_check_branch
      %4742 = sbr.rel (0) target = $region85
    $region84: #{tpu_custom_call.1} parent=1 // pred_region
      %s4744 = ssub.s32 256, 32
      %4745 = vsyncadd [#allocation10], %s4744
      %s4746 = sshll.u32 [#allocation11], 4
      %s4747 = int_to_ptr.vmem [resolvable:$true] %s4746
      %4752 = dma.vmem_to_hbm [thread:$0]  %s4747, 32, %s17, [#allocation10], 32, 32, 2
    $region85: #{tpu_custom_call.1} parent=1 // pred_fallthru
      _
    // Predicated region
    $region86: #{tpu_custom_call.1} parent=1 // pred_check
      _
    $region87: #{tpu_custom_call.1} parent=1 // pred_check_branch
      %4754 = sbr.rel (0) target = $region89
    $region88: #{tpu_custom_call.1} parent=1 // pred_region
      // Predicated region
      $region90: #{tpu_custom_call.1} parent=88 // pred_check
        _
      $region91: #{tpu_custom_call.1} parent=88 // pred_check_branch
        %4756 = sbr.rel (0) target = $region93
      $region92: #{tpu_custom_call.1} parent=88 // pred_region
        // Predicated region
        $region94: #{tpu_custom_call.1} parent=92 // pred_check
          _
        $region95: #{tpu_custom_call.1} parent=92 // pred_check_branch
          %4758 = sbr.rel target = $region97
        $region96: #{tpu_custom_call.1} parent=92 // pred_region
          // Predicated region
          $region109: #{tpu_custom_call.1} parent=96 // pred_check
            _
          $region110: #{tpu_custom_call.1} parent=96 // pred_check_branch
            %4773 = sbr.rel (0) target = $region112
          $region111: #{tpu_custom_call.1} parent=96 // pred_region
            loop: start=0, step=1, limit=1
            $region113: #{tpu_custom_call.1} parent=111 // loop_pre_header
              _
            $region114: #{tpu_custom_call.1} parent=111 // loop_header
              %s4776 = sphi 0, %s4780
              %p4777 = scmp.ge.s32.totalorder %s4776, 1
              %s4781 = sphi [#allocation12], [#allocation12]
              %s4782 = sphi %s18, %s18
            $region115: #{tpu_custom_call.1} parent=111 // loop_header_branch
              %4779 = sbr.rel (%p4777) target = $region119
            $region116: #{tpu_custom_call.1} parent=111 // loop_body
              %v4783 = vld [vmem:[%s4781] sm:$0x3]
              %4784 = vst [vmem:[%s4782] sm:$0x3] %v4783
            $region117: #{tpu_custom_call.1} parent=111 // loop_footer
              %s4780 = sadd.s32 1, %s4776
            $region118: #{tpu_custom_call.1} parent=111 // loop_footer_branch
              %4775 = sbr.rel target = $region114
            $region119: #{tpu_custom_call.1} parent=111 // loop_exit
              _
          $region112: #{tpu_custom_call.1} parent=96 // pred_fallthru
            _
        $region97: #{tpu_custom_call.1} parent=92 // pred_fallthru
          _
        // Predicated region
        $region98: #{tpu_custom_call.1} parent=92 // pred_check
          _
        $region99: #{tpu_custom_call.1} parent=92 // pred_check_branch
          %4760 = sbr.rel (0) target = $region101
        $region100: #{tpu_custom_call.1} parent=92 // pred_region
          loop: start=0, step=1, limit=1
          $region102: #{tpu_custom_call.1} parent=100 // loop_pre_header
            _
          $region103: #{tpu_custom_call.1} parent=100 // loop_header
            %s4763 = sphi 0, %s4767
            %p4764 = scmp.ge.s32.totalorder %s4763, 1
            %s4768 = sphi [#allocation12], [#allocation12]
            %s4769 = sphi %s18, %s18
          $region104: #{tpu_custom_call.1} parent=100 // loop_header_branch
            %4766 = sbr.rel (%p4764) target = $region108
          $region105: #{tpu_custom_call.1} parent=100 // loop_body
            %v4770 = vld [vmem:[%s4768] sm:$0x3]
            %4771 = vst [vmem:[%s4769] sm:$0x3] %v4770
          $region106: #{tpu_custom_call.1} parent=100 // loop_footer
            %s4767 = sadd.s32 1, %s4763
          $region107: #{tpu_custom_call.1} parent=100 // loop_footer_branch
            %4762 = sbr.rel target = $region103
          $region108: #{tpu_custom_call.1} parent=100 // loop_exit
            _
        $region101: #{tpu_custom_call.1} parent=92 // pred_fallthru
          _
      $region93: #{tpu_custom_call.1} parent=88 // pred_fallthru
        _
      %4785 = vnop
    $region89: #{tpu_custom_call.1} parent=1 // pred_fallthru
      _
    // Predicated region
    $region120: #{tpu_custom_call.1} parent=1 // pred_check
      _
    $region121: #{tpu_custom_call.1} parent=1 // pred_check_branch
      %4787 = sbr.rel (0) target = $region123
    $region122: #{tpu_custom_call.1} parent=1 // pred_region
      %4788 = dma.done [#allocation3], 896
    $region123: #{tpu_custom_call.1} parent=1 // pred_fallthru
      _
    // Predicated region
    $region124: #{tpu_custom_call.1} parent=1 // pred_check
      _
    $region125: #{tpu_custom_call.1} parent=1 // pred_check_branch
      %4790 = sbr.rel (0) target = $region127
    $region126: #{tpu_custom_call.1} parent=1 // pred_region
      %4791 = dma.done [#allocation10], 256
    $region127: #{tpu_custom_call.1} parent=1 // pred_fallthru
      _
    // Predicated region
    $region128: #{tpu_custom_call.1} parent=1 // pred_check
      _
    $region129: #{tpu_custom_call.1} parent=1 // pred_check_branch
      %4793 = sbr.rel (0) target = $region131
    $region130: #{tpu_custom_call.1} parent=1 // pred_region
      %4794 = dma.done [#allocation10], 256
    $region131: #{tpu_custom_call.1} parent=1 // pred_fallthru
      _
    // Predicated region
    $region132: #{tpu_custom_call.1} parent=1 // pred_check
      _
    $region133: #{tpu_custom_call.1} parent=1 // pred_check_branch
      %4796 = sbr.rel (0) target = $region135
    $region134: #{tpu_custom_call.1} parent=1 // pred_region
      _
    $region135: #{tpu_custom_call.1} parent=1 // pred_fallthru
      _
    %4797 = vsyncpa [#allocation3], 1
    %4798 = vsyncpa [#allocation10], 1
    %4799 = vsyncpa [#allocation4], 1
    %4800 = vsyncpa [#allocation6], 1

</llo_original>
